<compile_context>
chip_gen: v7x
topology: tpu7x:2x2x1
jax: 0.10.0
libtpu: 0.0.40
codegen_flags: <defaults>
</compile_context>

<pallas_src>
import jax
import jax.numpy as jnp
from jax.experimental import pallas as pl
from jax.experimental.pallas import tpu as pltpu


def _make_up_kernel(px_w, t_h):
    """px_w: image width W (lane width of one input row); t_h: rows per block."""
    two_w = 2 * px_w

    def kernel(a_ref, x_ref, w_ref, b_ref, o_ref):
        # a_ref: (1, 1) f32 SMEM        -- PReLU slope (single shared parameter)
        # x_ref: (Cin, T) f32 VMEM      -- T = t_h * px_w flat (h, w) positions
        # w_ref: (4, Co, Cin) f32 VMEM  -- w_ref[2a+b][co, :] = conv weight row 4co+2a+b
        # b_ref: (4, Co, 1)  f32 VMEM
        # o_ref: (Co, 4*T)   f32 VMEM   -- final pixel-shuffled flat layout
        alpha = a_ref[0, 0]
        x = x_ref[...]

        # 1x1 conv + bias + PReLU for the four pixel-shuffle channel groups.
        y = []
        for k in range(4):
            g = jnp.dot(w_ref[k], x, preferred_element_type=jnp.float32)
            g = g + b_ref[k]
            y.append(jnp.where(g > 0, g, alpha * g))

        # 0/1 dilation matrices: E0 scatters column w -> 2w, E1 -> 2w+1.
        rows = jax.lax.broadcasted_iota(jnp.int32, (px_w, two_w), 0)
        cols = jax.lax.broadcasted_iota(jnp.int32, (px_w, two_w), 1)
        e0 = (cols == 2 * rows).astype(jnp.float32)
        e1 = (cols == 2 * rows + 1).astype(jnp.float32)

        # Assemble the shuffled output rows: out lane (hh*4W + a*2W + 2w + b)
        # <- y[2a+b][co, hh*W + w].  Static unroll over the t_h input rows.
        for hh in range(t_h):
            sl = slice(hh * px_w, (hh + 1) * px_w)
            base = hh * 4 * px_w
            for a in range(2):  # output row parity (2h + a)
                half = (
                    jnp.dot(y[2 * a][:, sl], e0, preferred_element_type=jnp.float32)
                    + jnp.dot(y[2 * a + 1][:, sl], e1,
                              preferred_element_type=jnp.float32)
                )
                o_ref[:, base + a * two_w: base + (a + 1) * two_w] = half

    return kernel


def _choose_rows_per_block(H, W, cin, cout, n_batch):
    # Double-buffered in+out blocks: 2 * (cin + cout) * (t_h * W) * 4 bytes.
    budget = 24 * 1024 * 1024                       # fits v7x 32 MiB scoped VMEM
    t_cap = max(budget // (8 * (cin + cout) * W), 1)
    # Valid row counts: divide H exactly (no padding) and give a 128-multiple lane
    # dim (dense vreg tiles / unmasked stores).
    cands = [d for d in range(1, H + 1)
             if H % d == 0 and (d * W) % 128 == 0 and d <= t_cap]
    if not cands:
        return H                                    # full-dim blocks are always legal
    # Largest tile that still leaves >=4 parallel grid steps (two TCs on v7x).
    enough = [d for d in cands if n_batch * (H // d) >= 4]
    return (enough or cands)[-1]


@jax.jit
def up_forward(x, weight, bias, alpha):
    """x: (N, C, H, W) f32; weight: (C, C, 1, 1); bias: (C,); alpha: PReLU scalar."""
    N, C, H, W = x.shape
    assert C % 4 == 0, "PixelShuffle(2) needs channels divisible by 4"
    Co = C // 4
    t_h = _choose_rows_per_block(H, W, C, C, N)
    T = t_h * W
    TO = 4 * T

    x3 = x.reshape(N, C, H * W)                       # free view of NCHW
    w2 = weight.reshape(C, C).astype(jnp.float32)     # (Cout, Cin)
    # Group weight rows / bias by pixel-shuffle offset k = 2a + b.
    wq = w2.reshape(Co, 4, C).transpose(1, 0, 2)      # (4, Co, Cin)
    bq = bias.astype(jnp.float32).reshape(Co, 4).T.reshape(4, Co, 1)
    a2 = jnp.asarray(alpha, jnp.float32).reshape(1, 1)

    kernel = _make_up_kernel(W, t_h)
    flops = 2 * N * C * C * H * W + 16 * N * Co * H * W * W
    bytes_acc = 4 * (2 * N * C * H * W + C * C + C)

    out = pl.pallas_call(
        kernel,
        out_shape=jax.ShapeDtypeStruct((N, Co, 4 * H * W), jnp.float32),
        grid_spec=pltpu.PrefetchScalarGridSpec(
            num_scalar_prefetch=0,
            grid=(N, H // t_h),
            in_specs=[
                # PReLU slope as a cheap SMEM scalar.
                pl.BlockSpec(memory_space=pltpu.MemorySpace.SMEM),
                # x block: (Cin, T) flat rows, batch dim squeezed.
                pl.BlockSpec((None, C, T), lambda n, i: (n, 0, i)),
                # weights / bias: constant block index -> stay resident in VMEM.
                pl.BlockSpec((4, Co, C), lambda n, i: (0, 0, 0)),
                pl.BlockSpec((4, Co, 1), lambda n, i: (0, 0, 0)),
            ],
            # Output already in final pixel-shuffled layout (flat spatial view).
            out_specs=pl.BlockSpec((None, Co, TO), lambda n, i: (n, 0, i)),
        ),
        compiler_params=pltpu.CompilerParams(
            dimension_semantics=("parallel", "parallel"),
            vmem_limit_bytes=32 * 1024 * 1024,
        ),
        cost_estimate=pl.CostEstimate(
            flops=flops, transcendentals=0, bytes_accessed=bytes_acc),
    )(a2, x3, wq, bq)

    # Free contiguous view back to NCHW of the upscaled image.
    return out.reshape(N, Co, 2 * H, 2 * W)


# ----------------------------- pure-JAX reference -----------------------------
def _pixel_shuffle_ref(x, r=2):
    N, C, H, W = x.shape
    Co = C // (r * r)
    x = x.reshape(N, Co, r, r, H, W)
    x = jnp.transpose(x, (0, 1, 4, 2, 5, 3))
    return x.reshape(N, Co, H * r, W * r)


def reference_forward(x, weight, bias, alpha):
    N, C, H, W = x.shape
    w = weight.reshape(C, C)
    y = jnp.einsum("oc,nchw->nohw", w, x) + bias.reshape(1, C, 1, 1)
    y = jnp.where(y > 0, y, alpha * y)
    return _pixel_shuffle_ref(y, 2)


if __name__ == "__main__":
    key = jax.random.PRNGKey(0)
    k_x, k_w, k_b = jax.random.split(key, 3)

    N, C, H, W = 2, 8, 16, 16  # C must be divisible by 4 for PixelShuffle(2)
    x = jax.random.normal(k_x, (N, C, H, W), dtype=jnp.float32)

    # deterministic parameter init (Conv2d 1x1: weight (C, C, 1, 1), bias (C,))
    fan_in = C
    bound = 1.0 / (fan_in ** 0.5)
    weight = jax.random.uniform(k_w, (C, C, 1, 1), jnp.float32, -bound, bound)
    bias = jax.random.uniform(k_b, (C,), jnp.float32, -bound, bound)
    alpha = jnp.float32(0.25)  # nn.PReLU() default single-parameter init

    out = up_forward(x, weight, bias, alpha)
    out = jax.block_until_ready(out)

    ref = reference_forward(x, weight, bias, alpha)
    assert out.shape == (N, C // 4, 2 * H, 2 * W), out.shape
    # MXU f32 matmuls use bf16-pass decomposition at default precision, so use a
    # loose tolerance; any placement/indexing bug would show up as O(1) errors.
    err = float(jnp.max(jnp.abs(out - ref)))
    assert jnp.allclose(out, ref, atol=2e-2, rtol=2e-2), err
    print("KERNEL_OK")
</pallas_src>

<mosaic_0001>
module attributes {stable_mosaic.version = 11 : i64} {
  func.func @kernel(%arg0: i32, %arg1: i32, %arg2: memref<1x1xf32, #tpu.memory_space<smem>>, %arg3: memref<1x8x128xf32, #tpu.memory_space<vmem>>, %arg4: memref<4x2x8xf32, #tpu.memory_space<vmem>>, %arg5: memref<4x2x1xf32, #tpu.memory_space<vmem>>, %arg6: memref<1x2x512xf32, #tpu.memory_space<vmem>>) attributes {dimension_semantics = [#tpu.dimension_semantics<parallel>, #tpu.dimension_semantics<parallel>], iteration_bounds = array<i64: 2, 2>, scalar_prefetch = 0 : i64, scratch_operands = 0 : i64, tpu.core_type = #tpu.core_type<tc>, window_params = [{transform_indices = @transform_0, window_bounds = array<i64: 1, 1>}, {transform_indices = @transform_1, window_bounds = array<i64: 1, 8, 128>}, {pipeline_mode = #tpu.pipeline_mode<synchronous>, transform_indices = @transform_2, window_bounds = array<i64: 4, 2, 8>}, {pipeline_mode = #tpu.pipeline_mode<synchronous>, transform_indices = @transform_3, window_bounds = array<i64: 4, 2, 1>}, {transform_indices = @transform_4, window_bounds = array<i64: 1, 2, 512>}]} {
    %c0 = arith.constant 0 : index
    %c0_0 = arith.constant 0 : index
    %0 = memref.load %arg2[%c0, %c0_0] : memref<1x1xf32, #tpu.memory_space<smem>>
    %c0_1 = arith.constant 0 : index
    %c0_2 = arith.constant 0 : index
    %c0_3 = arith.constant 0 : index
    %1 = vector.load %arg3[%c0_1, %c0_2, %c0_3] : memref<1x8x128xf32, #tpu.memory_space<vmem>>, vector<1x8x128xf32>
    %2 = vector.shape_cast %1 : vector<1x8x128xf32> to vector<8x128xf32>
    %c0_4 = arith.constant 0 : index
    %c0_5 = arith.constant 0 : index
    %c0_6 = arith.constant 0 : index
    %3 = vector.load %arg4[%c0_4, %c0_5, %c0_6] : memref<4x2x8xf32, #tpu.memory_space<vmem>>, vector<1x2x8xf32>
    %4 = vector.shape_cast %3 : vector<1x2x8xf32> to vector<2x8xf32>
    %cst = arith.constant dense<0.000000e+00> : vector<2x128xf32>
    %5 = tpu.matmul %4, %2, %cst {dimension_numbers = #tpu.dot_dimension_numbers<[1], [0], [0], [1], [0, 0, 1, 1], [], []>} : vector<2x8xf32>, vector<8x128xf32>, vector<2x128xf32> -> vector<2x128xf32>
    %c0_7 = arith.constant 0 : index
    %c0_8 = arith.constant 0 : index
    %c0_9 = arith.constant 0 : index
    %6 = vector.load %arg5[%c0_7, %c0_8, %c0_9] : memref<4x2x1xf32, #tpu.memory_space<vmem>>, vector<1x2x1xf32>
    %7 = vector.shape_cast %6 : vector<1x2x1xf32> to vector<2x1xf32>
    %8 = vector.broadcast %7 : vector<2x1xf32> to vector<2x128xf32>
    %9 = arith.addf %5, %8 : vector<2x128xf32>
    %cst_10 = arith.constant 0.000000e+00 : f32
    %10 = vector.broadcast %cst_10 : f32 to vector<2x128xf32>
    %11 = arith.cmpf ogt, %9, %10 : vector<2x128xf32>
    %12 = vector.broadcast %0 : f32 to vector<2x128xf32>
    %13 = arith.mulf %12, %9 : vector<2x128xf32>
    %14 = arith.select %11, %9, %13 : vector<2x128xi1>, vector<2x128xf32>
    %c1 = arith.constant 1 : index
    %c0_11 = arith.constant 0 : index
    %c0_12 = arith.constant 0 : index
    %15 = vector.load %arg4[%c1, %c0_11, %c0_12] : memref<4x2x8xf32, #tpu.memory_space<vmem>>, vector<1x2x8xf32>
    %16 = vector.shape_cast %15 : vector<1x2x8xf32> to vector<2x8xf32>
    %cst_13 = arith.constant dense<0.000000e+00> : vector<2x128xf32>
    %17 = tpu.matmul %16, %2, %cst_13 {dimension_numbers = #tpu.dot_dimension_numbers<[1], [0], [0], [1], [0, 0, 1, 1], [], []>} : vector<2x8xf32>, vector<8x128xf32>, vector<2x128xf32> -> vector<2x128xf32>
    %c1_14 = arith.constant 1 : index
    %c0_15 = arith.constant 0 : index
    %c0_16 = arith.constant 0 : index
    %18 = vector.load %arg5[%c1_14, %c0_15, %c0_16] : memref<4x2x1xf32, #tpu.memory_space<vmem>>, vector<1x2x1xf32>
    %19 = vector.shape_cast %18 : vector<1x2x1xf32> to vector<2x1xf32>
    %20 = vector.broadcast %19 : vector<2x1xf32> to vector<2x128xf32>
    %21 = arith.addf %17, %20 : vector<2x128xf32>
    %cst_17 = arith.constant 0.000000e+00 : f32
    %22 = vector.broadcast %cst_17 : f32 to vector<2x128xf32>
    %23 = arith.cmpf ogt, %21, %22 : vector<2x128xf32>
    %24 = vector.broadcast %0 : f32 to vector<2x128xf32>
    %25 = arith.mulf %24, %21 : vector<2x128xf32>
    %26 = arith.select %23, %21, %25 : vector<2x128xi1>, vector<2x128xf32>
    %c2 = arith.constant 2 : index
    %c0_18 = arith.constant 0 : index
    %c0_19 = arith.constant 0 : index
    %27 = vector.load %arg4[%c2, %c0_18, %c0_19] : memref<4x2x8xf32, #tpu.memory_space<vmem>>, vector<1x2x8xf32>
    %28 = vector.shape_cast %27 : vector<1x2x8xf32> to vector<2x8xf32>
    %cst_20 = arith.constant dense<0.000000e+00> : vector<2x128xf32>
    %29 = tpu.matmul %28, %2, %cst_20 {dimension_numbers = #tpu.dot_dimension_numbers<[1], [0], [0], [1], [0, 0, 1, 1], [], []>} : vector<2x8xf32>, vector<8x128xf32>, vector<2x128xf32> -> vector<2x128xf32>
    %c2_21 = arith.constant 2 : index
    %c0_22 = arith.constant 0 : index
    %c0_23 = arith.constant 0 : index
    %30 = vector.load %arg5[%c2_21, %c0_22, %c0_23] : memref<4x2x1xf32, #tpu.memory_space<vmem>>, vector<1x2x1xf32>
    %31 = vector.shape_cast %30 : vector<1x2x1xf32> to vector<2x1xf32>
    %32 = vector.broadcast %31 : vector<2x1xf32> to vector<2x128xf32>
    %33 = arith.addf %29, %32 : vector<2x128xf32>
    %cst_24 = arith.constant 0.000000e+00 : f32
    %34 = vector.broadcast %cst_24 : f32 to vector<2x128xf32>
    %35 = arith.cmpf ogt, %33, %34 : vector<2x128xf32>
    %36 = vector.broadcast %0 : f32 to vector<2x128xf32>
    %37 = arith.mulf %36, %33 : vector<2x128xf32>
    %38 = arith.select %35, %33, %37 : vector<2x128xi1>, vector<2x128xf32>
    %c3 = arith.constant 3 : index
    %c0_25 = arith.constant 0 : index
    %c0_26 = arith.constant 0 : index
    %39 = vector.load %arg4[%c3, %c0_25, %c0_26] : memref<4x2x8xf32, #tpu.memory_space<vmem>>, vector<1x2x8xf32>
    %40 = vector.shape_cast %39 : vector<1x2x8xf32> to vector<2x8xf32>
    %cst_27 = arith.constant dense<0.000000e+00> : vector<2x128xf32>
    %41 = tpu.matmul %40, %2, %cst_27 {dimension_numbers = #tpu.dot_dimension_numbers<[1], [0], [0], [1], [0, 0, 1, 1], [], []>} : vector<2x8xf32>, vector<8x128xf32>, vector<2x128xf32> -> vector<2x128xf32>
    %c3_28 = arith.constant 3 : index
    %c0_29 = arith.constant 0 : index
    %c0_30 = arith.constant 0 : index
    %42 = vector.load %arg5[%c3_28, %c0_29, %c0_30] : memref<4x2x1xf32, #tpu.memory_space<vmem>>, vector<1x2x1xf32>
    %43 = vector.shape_cast %42 : vector<1x2x1xf32> to vector<2x1xf32>
    %44 = vector.broadcast %43 : vector<2x1xf32> to vector<2x128xf32>
    %45 = arith.addf %41, %44 : vector<2x128xf32>
    %cst_31 = arith.constant 0.000000e+00 : f32
    %46 = vector.broadcast %cst_31 : f32 to vector<2x128xf32>
    %47 = arith.cmpf ogt, %45, %46 : vector<2x128xf32>
    %48 = vector.broadcast %0 : f32 to vector<2x128xf32>
    %49 = arith.mulf %48, %45 : vector<2x128xf32>
    %50 = arith.select %47, %45, %49 : vector<2x128xi1>, vector<2x128xf32>
    %51 = tpu.iota {dimensions = array<i32: 0>} : vector<16x32xi32>
    %52 = tpu.iota {dimensions = array<i32: 1>} : vector<16x32xi32>
    %c2_i32 = arith.constant 2 : i32
    %53 = vector.broadcast %c2_i32 : i32 to vector<16x32xi32>
    %54 = arith.muli %53, %51 : vector<16x32xi32>
    %55 = arith.cmpi eq, %52, %54 : vector<16x32xi32>
    %56 = arith.extui %55 : vector<16x32xi1> to vector<16x32xi32>
    %57 = arith.sitofp %56 : vector<16x32xi32> to vector<16x32xf32>
    %c2_i32_32 = arith.constant 2 : i32
    %58 = vector.broadcast %c2_i32_32 : i32 to vector<16x32xi32>
    %59 = arith.muli %58, %51 : vector<16x32xi32>
    %c1_i32 = arith.constant 1 : i32
    %60 = vector.broadcast %c1_i32 : i32 to vector<16x32xi32>
    %61 = arith.addi %59, %60 : vector<16x32xi32>
    %62 = arith.cmpi eq, %52, %61 : vector<16x32xi32>
    %63 = arith.extui %62 : vector<16x32xi1> to vector<16x32xi32>
    %64 = arith.sitofp %63 : vector<16x32xi32> to vector<16x32xf32>
    %65 = vector.extract_strided_slice %14 {offsets = [0, 0], sizes = [2, 16], strides = [1, 1]} : vector<2x128xf32> to vector<2x16xf32>
    %cst_33 = arith.constant dense<0.000000e+00> : vector<2x32xf32>
    %66 = tpu.matmul %65, %57, %cst_33 {dimension_numbers = #tpu.dot_dimension_numbers<[1], [0], [0], [1], [0, 0, 1, 1], [], []>} : vector<2x16xf32>, vector<16x32xf32>, vector<2x32xf32> -> vector<2x32xf32>
    %67 = vector.extract_strided_slice %26 {offsets = [0, 0], sizes = [2, 16], strides = [1, 1]} : vector<2x128xf32> to vector<2x16xf32>
    %cst_34 = arith.constant dense<0.000000e+00> : vector<2x32xf32>
    %68 = tpu.matmul %67, %64, %cst_34 {dimension_numbers = #tpu.dot_dimension_numbers<[1], [0], [0], [1], [0, 0, 1, 1], [], []>} : vector<2x16xf32>, vector<16x32xf32>, vector<2x32xf32> -> vector<2x32xf32>
    %69 = arith.addf %66, %68 : vector<2x32xf32>
    %c0_35 = arith.constant 0 : index
    %c0_36 = arith.constant 0 : index
    %c0_37 = arith.constant 0 : index
    %70 = vector.load %arg6[%c0_35, %c0_36, %c0_37] : memref<1x2x512xf32, #tpu.memory_space<vmem>>, vector<1x2x32xf32>
    %71 = vector.shape_cast %70 : vector<1x2x32xf32> to vector<2x32xf32>
    %72 = vector.shape_cast %69 : vector<2x32xf32> to vector<1x2x32xf32>
    tpu.vector_store %arg6[%c0_35, %c0_36, %c0_37], %72 {strides = array<i32>} : memref<1x2x512xf32, #tpu.memory_space<vmem>>, vector<1x2x32xf32>,
    %73 = vector.extract_strided_slice %38 {offsets = [0, 0], sizes = [2, 16], strides = [1, 1]} : vector<2x128xf32> to vector<2x16xf32>
    %cst_38 = arith.constant dense<0.000000e+00> : vector<2x32xf32>
    %74 = tpu.matmul %73, %57, %cst_38 {dimension_numbers = #tpu.dot_dimension_numbers<[1], [0], [0], [1], [0, 0, 1, 1], [], []>} : vector<2x16xf32>, vector<16x32xf32>, vector<2x32xf32> -> vector<2x32xf32>
    %75 = vector.extract_strided_slice %50 {offsets = [0, 0], sizes = [2, 16], strides = [1, 1]} : vector<2x128xf32> to vector<2x16xf32>
    %cst_39 = arith.constant dense<0.000000e+00> : vector<2x32xf32>
    %76 = tpu.matmul %75, %64, %cst_39 {dimension_numbers = #tpu.dot_dimension_numbers<[1], [0], [0], [1], [0, 0, 1, 1], [], []>} : vector<2x16xf32>, vector<16x32xf32>, vector<2x32xf32> -> vector<2x32xf32>
    %77 = arith.addf %74, %76 : vector<2x32xf32>
    %c0_40 = arith.constant 0 : index
    %c0_41 = arith.constant 0 : index
    %c32 = arith.constant 32 : index
    %78 = vector.load %arg6[%c0_40, %c0_41, %c32] : memref<1x2x512xf32, #tpu.memory_space<vmem>>, vector<1x2x32xf32>
    %79 = vector.shape_cast %78 : vector<1x2x32xf32> to vector<2x32xf32>
    %80 = vector.shape_cast %77 : vector<2x32xf32> to vector<1x2x32xf32>
    tpu.vector_store %arg6[%c0_40, %c0_41, %c32], %80 {strides = array<i32>} : memref<1x2x512xf32, #tpu.memory_space<vmem>>, vector<1x2x32xf32>,
    %81 = vector.extract_strided_slice %14 {offsets = [0, 16], sizes = [2, 16], strides = [1, 1]} : vector<2x128xf32> to vector<2x16xf32>
    %cst_42 = arith.constant dense<0.000000e+00> : vector<2x32xf32>
    %82 = tpu.matmul %81, %57, %cst_42 {dimension_numbers = #tpu.dot_dimension_numbers<[1], [0], [0], [1], [0, 0, 1, 1], [], []>} : vector<2x16xf32>, vector<16x32xf32>, vector<2x32xf32> -> vector<2x32xf32>
    %83 = vector.extract_strided_slice %26 {offsets = [0, 16], sizes = [2, 16], strides = [1, 1]} : vector<2x128xf32> to vector<2x16xf32>
    %cst_43 = arith.constant dense<0.000000e+00> : vector<2x32xf32>
    %84 = tpu.matmul %83, %64, %cst_43 {dimension_numbers = #tpu.dot_dimension_numbers<[1], [0], [0], [1], [0, 0, 1, 1], [], []>} : vector<2x16xf32>, vector<16x32xf32>, vector<2x32xf32> -> vector<2x32xf32>
    %85 = arith.addf %82, %84 : vector<2x32xf32>
    %c0_44 = arith.constant 0 : index
    %c0_45 = arith.constant 0 : index
    %c64 = arith.constant 64 : index
    %86 = vector.load %arg6[%c0_44, %c0_45, %c64] : memref<1x2x512xf32, #tpu.memory_space<vmem>>, vector<1x2x32xf32>
    %87 = vector.shape_cast %86 : vector<1x2x32xf32> to vector<2x32xf32>
    %88 = vector.shape_cast %85 : vector<2x32xf32> to vector<1x2x32xf32>
    tpu.vector_store %arg6[%c0_44, %c0_45, %c64], %88 {strides = array<i32>} : memref<1x2x512xf32, #tpu.memory_space<vmem>>, vector<1x2x32xf32>,
    %89 = vector.extract_strided_slice %38 {offsets = [0, 16], sizes = [2, 16], strides = [1, 1]} : vector<2x128xf32> to vector<2x16xf32>
    %cst_46 = arith.constant dense<0.000000e+00> : vector<2x32xf32>
    %90 = tpu.matmul %89, %57, %cst_46 {dimension_numbers = #tpu.dot_dimension_numbers<[1], [0], [0], [1], [0, 0, 1, 1], [], []>} : vector<2x16xf32>, vector<16x32xf32>, vector<2x32xf32> -> vector<2x32xf32>
    %91 = vector.extract_strided_slice %50 {offsets = [0, 16], sizes = [2, 16], strides = [1, 1]} : vector<2x128xf32> to vector<2x16xf32>
    %cst_47 = arith.constant dense<0.000000e+00> : vector<2x32xf32>
    %92 = tpu.matmul %91, %64, %cst_47 {dimension_numbers = #tpu.dot_dimension_numbers<[1], [0], [0], [1], [0, 0, 1, 1], [], []>} : vector<2x16xf32>, vector<16x32xf32>, vector<2x32xf32> -> vector<2x32xf32>
    %93 = arith.addf %90, %92 : vector<2x32xf32>
    %c0_48 = arith.constant 0 : index
    %c0_49 = arith.constant 0 : index
    %c96 = arith.constant 96 : index
    %94 = vector.load %arg6[%c0_48, %c0_49, %c96] : memref<1x2x512xf32, #tpu.memory_space<vmem>>, vector<1x2x32xf32>
    %95 = vector.shape_cast %94 : vector<1x2x32xf32> to vector<2x32xf32>
    %96 = vector.shape_cast %93 : vector<2x32xf32> to vector<1x2x32xf32>
    tpu.vector_store %arg6[%c0_48, %c0_49, %c96], %96 {strides = array<i32>} : memref<1x2x512xf32, #tpu.memory_space<vmem>>, vector<1x2x32xf32>,
    %97 = vector.extract_strided_slice %14 {offsets = [0, 32], sizes = [2, 16], strides = [1, 1]} : vector<2x128xf32> to vector<2x16xf32>
    %cst_50 = arith.constant dense<0.000000e+00> : vector<2x32xf32>
    %98 = tpu.matmul %97, %57, %cst_50 {dimension_numbers = #tpu.dot_dimension_numbers<[1], [0], [0], [1], [0, 0, 1, 1], [], []>} : vector<2x16xf32>, vector<16x32xf32>, vector<2x32xf32> -> vector<2x32xf32>
    %99 = vector.extract_strided_slice %26 {offsets = [0, 32], sizes = [2, 16], strides = [1, 1]} : vector<2x128xf32> to vector<2x16xf32>
    %cst_51 = arith.constant dense<0.000000e+00> : vector<2x32xf32>
    %100 = tpu.matmul %99, %64, %cst_51 {dimension_numbers = #tpu.dot_dimension_numbers<[1], [0], [0], [1], [0, 0, 1, 1], [], []>} : vector<2x16xf32>, vector<16x32xf32>, vector<2x32xf32> -> vector<2x32xf32>
    %101 = arith.addf %98, %100 : vector<2x32xf32>
    %c0_52 = arith.constant 0 : index
    %c0_53 = arith.constant 0 : index
    %c128 = arith.constant 128 : index
    %102 = vector.load %arg6[%c0_52, %c0_53, %c128] : memref<1x2x512xf32, #tpu.memory_space<vmem>>, vector<1x2x32xf32>
    %103 = vector.shape_cast %102 : vector<1x2x32xf32> to vector<2x32xf32>
    %104 = vector.shape_cast %101 : vector<2x32xf32> to vector<1x2x32xf32>
    tpu.vector_store %arg6[%c0_52, %c0_53, %c128], %104 {strides = array<i32>} : memref<1x2x512xf32, #tpu.memory_space<vmem>>, vector<1x2x32xf32>,
    %105 = vector.extract_strided_slice %38 {offsets = [0, 32], sizes = [2, 16], strides = [1, 1]} : vector<2x128xf32> to vector<2x16xf32>
    %cst_54 = arith.constant dense<0.000000e+00> : vector<2x32xf32>
    %106 = tpu.matmul %105, %57, %cst_54 {dimension_numbers = #tpu.dot_dimension_numbers<[1], [0], [0], [1], [0, 0, 1, 1], [], []>} : vector<2x16xf32>, vector<16x32xf32>, vector<2x32xf32> -> vector<2x32xf32>
    %107 = vector.extract_strided_slice %50 {offsets = [0, 32], sizes = [2, 16], strides = [1, 1]} : vector<2x128xf32> to vector<2x16xf32>
    %cst_55 = arith.constant dense<0.000000e+00> : vector<2x32xf32>
    %108 = tpu.matmul %107, %64, %cst_55 {dimension_numbers = #tpu.dot_dimension_numbers<[1], [0], [0], [1], [0, 0, 1, 1], [], []>} : vector<2x16xf32>, vector<16x32xf32>, vector<2x32xf32> -> vector<2x32xf32>
    %109 = arith.addf %106, %108 : vector<2x32xf32>
    %c0_56 = arith.constant 0 : index
    %c0_57 = arith.constant 0 : index
    %c160 = arith.constant 160 : index
    %110 = vector.load %arg6[%c0_56, %c0_57, %c160] : memref<1x2x512xf32, #tpu.memory_space<vmem>>, vector<1x2x32xf32>
    %111 = vector.shape_cast %110 : vector<1x2x32xf32> to vector<2x32xf32>
    %112 = vector.shape_cast %109 : vector<2x32xf32> to vector<1x2x32xf32>
    tpu.vector_store %arg6[%c0_56, %c0_57, %c160], %112 {strides = array<i32>} : memref<1x2x512xf32, #tpu.memory_space<vmem>>, vector<1x2x32xf32>,
    %113 = vector.extract_strided_slice %14 {offsets = [0, 48], sizes = [2, 16], strides = [1, 1]} : vector<2x128xf32> to vector<2x16xf32>
    %cst_58 = arith.constant dense<0.000000e+00> : vector<2x32xf32>
    %114 = tpu.matmul %113, %57, %cst_58 {dimension_numbers = #tpu.dot_dimension_numbers<[1], [0], [0], [1], [0, 0, 1, 1], [], []>} : vector<2x16xf32>, vector<16x32xf32>, vector<2x32xf32> -> vector<2x32xf32>
    %115 = vector.extract_strided_slice %26 {offsets = [0, 48], sizes = [2, 16], strides = [1, 1]} : vector<2x128xf32> to vector<2x16xf32>
    %cst_59 = arith.constant dense<0.000000e+00> : vector<2x32xf32>
    %116 = tpu.matmul %115, %64, %cst_59 {dimension_numbers = #tpu.dot_dimension_numbers<[1], [0], [0], [1], [0, 0, 1, 1], [], []>} : vector<2x16xf32>, vector<16x32xf32>, vector<2x32xf32> -> vector<2x32xf32>
    %117 = arith.addf %114, %116 : vector<2x32xf32>
    %c0_60 = arith.constant 0 : index
    %c0_61 = arith.constant 0 : index
    %c192 = arith.constant 192 : index
    %118 = vector.load %arg6[%c0_60, %c0_61, %c192] : memref<1x2x512xf32, #tpu.memory_space<vmem>>, vector<1x2x32xf32>
    %119 = vector.shape_cast %118 : vector<1x2x32xf32> to vector<2x32xf32>
    %120 = vector.shape_cast %117 : vector<2x32xf32> to vector<1x2x32xf32>
    tpu.vector_store %arg6[%c0_60, %c0_61, %c192], %120 {strides = array<i32>} : memref<1x2x512xf32, #tpu.memory_space<vmem>>, vector<1x2x32xf32>,
    %121 = vector.extract_strided_slice %38 {offsets = [0, 48], sizes = [2, 16], strides = [1, 1]} : vector<2x128xf32> to vector<2x16xf32>
    %cst_62 = arith.constant dense<0.000000e+00> : vector<2x32xf32>
    %122 = tpu.matmul %121, %57, %cst_62 {dimension_numbers = #tpu.dot_dimension_numbers<[1], [0], [0], [1], [0, 0, 1, 1], [], []>} : vector<2x16xf32>, vector<16x32xf32>, vector<2x32xf32> -> vector<2x32xf32>
    %123 = vector.extract_strided_slice %50 {offsets = [0, 48], sizes = [2, 16], strides = [1, 1]} : vector<2x128xf32> to vector<2x16xf32>
    %cst_63 = arith.constant dense<0.000000e+00> : vector<2x32xf32>
    %124 = tpu.matmul %123, %64, %cst_63 {dimension_numbers = #tpu.dot_dimension_numbers<[1], [0], [0], [1], [0, 0, 1, 1], [], []>} : vector<2x16xf32>, vector<16x32xf32>, vector<2x32xf32> -> vector<2x32xf32>
    %125 = arith.addf %122, %124 : vector<2x32xf32>
    %c0_64 = arith.constant 0 : index
    %c0_65 = arith.constant 0 : index
    %c224 = arith.constant 224 : index
    %126 = vector.load %arg6[%c0_64, %c0_65, %c224] : memref<1x2x512xf32, #tpu.memory_space<vmem>>, vector<1x2x32xf32>
    %127 = vector.shape_cast %126 : vector<1x2x32xf32> to vector<2x32xf32>
    %128 = vector.shape_cast %125 : vector<2x32xf32> to vector<1x2x32xf32>
    tpu.vector_store %arg6[%c0_64, %c0_65, %c224], %128 {strides = array<i32>} : memref<1x2x512xf32, #tpu.memory_space<vmem>>, vector<1x2x32xf32>,
    %129 = vector.extract_strided_slice %14 {offsets = [0, 64], sizes = [2, 16], strides = [1, 1]} : vector<2x128xf32> to vector<2x16xf32>
    %cst_66 = arith.constant dense<0.000000e+00> : vector<2x32xf32>
    %130 = tpu.matmul %129, %57, %cst_66 {dimension_numbers = #tpu.dot_dimension_numbers<[1], [0], [0], [1], [0, 0, 1, 1], [], []>} : vector<2x16xf32>, vector<16x32xf32>, vector<2x32xf32> -> vector<2x32xf32>
    %131 = vector.extract_strided_slice %26 {offsets = [0, 64], sizes = [2, 16], strides = [1, 1]} : vector<2x128xf32> to vector<2x16xf32>
    %cst_67 = arith.constant dense<0.000000e+00> : vector<2x32xf32>
    %132 = tpu.matmul %131, %64, %cst_67 {dimension_numbers = #tpu.dot_dimension_numbers<[1], [0], [0], [1], [0, 0, 1, 1], [], []>} : vector<2x16xf32>, vector<16x32xf32>, vector<2x32xf32> -> vector<2x32xf32>
    %133 = arith.addf %130, %132 : vector<2x32xf32>
    %c0_68 = arith.constant 0 : index
    %c0_69 = arith.constant 0 : index
    %c256 = arith.constant 256 : index
    %134 = vector.load %arg6[%c0_68, %c0_69, %c256] : memref<1x2x512xf32, #tpu.memory_space<vmem>>, vector<1x2x32xf32>
    %135 = vector.shape_cast %134 : vector<1x2x32xf32> to vector<2x32xf32>
    %136 = vector.shape_cast %133 : vector<2x32xf32> to vector<1x2x32xf32>
    tpu.vector_store %arg6[%c0_68, %c0_69, %c256], %136 {strides = array<i32>} : memref<1x2x512xf32, #tpu.memory_space<vmem>>, vector<1x2x32xf32>,
    %137 = vector.extract_strided_slice %38 {offsets = [0, 64], sizes = [2, 16], strides = [1, 1]} : vector<2x128xf32> to vector<2x16xf32>
    %cst_70 = arith.constant dense<0.000000e+00> : vector<2x32xf32>
    %138 = tpu.matmul %137, %57, %cst_70 {dimension_numbers = #tpu.dot_dimension_numbers<[1], [0], [0], [1], [0, 0, 1, 1], [], []>} : vector<2x16xf32>, vector<16x32xf32>, vector<2x32xf32> -> vector<2x32xf32>
    %139 = vector.extract_strided_slice %50 {offsets = [0, 64], sizes = [2, 16], strides = [1, 1]} : vector<2x128xf32> to vector<2x16xf32>
    %cst_71 = arith.constant dense<0.000000e+00> : vector<2x32xf32>
    %140 = tpu.matmul %139, %64, %cst_71 {dimension_numbers = #tpu.dot_dimension_numbers<[1], [0], [0], [1], [0, 0, 1, 1], [], []>} : vector<2x16xf32>, vector<16x32xf32>, vector<2x32xf32> -> vector<2x32xf32>
    %141 = arith.addf %138, %140 : vector<2x32xf32>
    %c0_72 = arith.constant 0 : index
    %c0_73 = arith.constant 0 : index
    %c288 = arith.constant 288 : index
    %142 = vector.load %arg6[%c0_72, %c0_73, %c288] : memref<1x2x512xf32, #tpu.memory_space<vmem>>, vector<1x2x32xf32>
    %143 = vector.shape_cast %142 : vector<1x2x32xf32> to vector<2x32xf32>
    %144 = vector.shape_cast %141 : vector<2x32xf32> to vector<1x2x32xf32>
    tpu.vector_store %arg6[%c0_72, %c0_73, %c288], %144 {strides = array<i32>} : memref<1x2x512xf32, #tpu.memory_space<vmem>>, vector<1x2x32xf32>,
    %145 = vector.extract_strided_slice %14 {offsets = [0, 80], sizes = [2, 16], strides = [1, 1]} : vector<2x128xf32> to vector<2x16xf32>
    %cst_74 = arith.constant dense<0.000000e+00> : vector<2x32xf32>
    %146 = tpu.matmul %145, %57, %cst_74 {dimension_numbers = #tpu.dot_dimension_numbers<[1], [0], [0], [1], [0, 0, 1, 1], [], []>} : vector<2x16xf32>, vector<16x32xf32>, vector<2x32xf32> -> vector<2x32xf32>
    %147 = vector.extract_strided_slice %26 {offsets = [0, 80], sizes = [2, 16], strides = [1, 1]} : vector<2x128xf32> to vector<2x16xf32>
    %cst_75 = arith.constant dense<0.000000e+00> : vector<2x32xf32>
    %148 = tpu.matmul %147, %64, %cst_75 {dimension_numbers = #tpu.dot_dimension_numbers<[1], [0], [0], [1], [0, 0, 1, 1], [], []>} : vector<2x16xf32>, vector<16x32xf32>, vector<2x32xf32> -> vector<2x32xf32>
    %149 = arith.addf %146, %148 : vector<2x32xf32>
    %c0_76 = arith.constant 0 : index
    %c0_77 = arith.constant 0 : index
    %c320 = arith.constant 320 : index
    %150 = vector.load %arg6[%c0_76, %c0_77, %c320] : memref<1x2x512xf32, #tpu.memory_space<vmem>>, vector<1x2x32xf32>
    %151 = vector.shape_cast %150 : vector<1x2x32xf32> to vector<2x32xf32>
    %152 = vector.shape_cast %149 : vector<2x32xf32> to vector<1x2x32xf32>
    tpu.vector_store %arg6[%c0_76, %c0_77, %c320], %152 {strides = array<i32>} : memref<1x2x512xf32, #tpu.memory_space<vmem>>, vector<1x2x32xf32>,
    %153 = vector.extract_strided_slice %38 {offsets = [0, 80], sizes = [2, 16], strides = [1, 1]} : vector<2x128xf32> to vector<2x16xf32>
    %cst_78 = arith.constant dense<0.000000e+00> : vector<2x32xf32>
    %154 = tpu.matmul %153, %57, %cst_78 {dimension_numbers = #tpu.dot_dimension_numbers<[1], [0], [0], [1], [0, 0, 1, 1], [], []>} : vector<2x16xf32>, vector<16x32xf32>, vector<2x32xf32> -> vector<2x32xf32>
    %155 = vector.extract_strided_slice %50 {offsets = [0, 80], sizes = [2, 16], strides = [1, 1]} : vector<2x128xf32> to vector<2x16xf32>
    %cst_79 = arith.constant dense<0.000000e+00> : vector<2x32xf32>
    %156 = tpu.matmul %155, %64, %cst_79 {dimension_numbers = #tpu.dot_dimension_numbers<[1], [0], [0], [1], [0, 0, 1, 1], [], []>} : vector<2x16xf32>, vector<16x32xf32>, vector<2x32xf32> -> vector<2x32xf32>
    %157 = arith.addf %154, %156 : vector<2x32xf32>
    %c0_80 = arith.constant 0 : index
    %c0_81 = arith.constant 0 : index
    %c352 = arith.constant 352 : index
    %158 = vector.load %arg6[%c0_80, %c0_81, %c352] : memref<1x2x512xf32, #tpu.memory_space<vmem>>, vector<1x2x32xf32>
    %159 = vector.shape_cast %158 : vector<1x2x32xf32> to vector<2x32xf32>
    %160 = vector.shape_cast %157 : vector<2x32xf32> to vector<1x2x32xf32>
    tpu.vector_store %arg6[%c0_80, %c0_81, %c352], %160 {strides = array<i32>} : memref<1x2x512xf32, #tpu.memory_space<vmem>>, vector<1x2x32xf32>,
    %161 = vector.extract_strided_slice %14 {offsets = [0, 96], sizes = [2, 16], strides = [1, 1]} : vector<2x128xf32> to vector<2x16xf32>
    %cst_82 = arith.constant dense<0.000000e+00> : vector<2x32xf32>
    %162 = tpu.matmul %161, %57, %cst_82 {dimension_numbers = #tpu.dot_dimension_numbers<[1], [0], [0], [1], [0, 0, 1, 1], [], []>} : vector<2x16xf32>, vector<16x32xf32>, vector<2x32xf32> -> vector<2x32xf32>
    %163 = vector.extract_strided_slice %26 {offsets = [0, 96], sizes = [2, 16], strides = [1, 1]} : vector<2x128xf32> to vector<2x16xf32>
    %cst_83 = arith.constant dense<0.000000e+00> : vector<2x32xf32>
    %164 = tpu.matmul %163, %64, %cst_83 {dimension_numbers = #tpu.dot_dimension_numbers<[1], [0], [0], [1], [0, 0, 1, 1], [], []>} : vector<2x16xf32>, vector<16x32xf32>, vector<2x32xf32> -> vector<2x32xf32>
    %165 = arith.addf %162, %164 : vector<2x32xf32>
    %c0_84 = arith.constant 0 : index
    %c0_85 = arith.constant 0 : index
    %c384 = arith.constant 384 : index
    %166 = vector.load %arg6[%c0_84, %c0_85, %c384] : memref<1x2x512xf32, #tpu.memory_space<vmem>>, vector<1x2x32xf32>
    %167 = vector.shape_cast %166 : vector<1x2x32xf32> to vector<2x32xf32>
    %168 = vector.shape_cast %165 : vector<2x32xf32> to vector<1x2x32xf32>
    tpu.vector_store %arg6[%c0_84, %c0_85, %c384], %168 {strides = array<i32>} : memref<1x2x512xf32, #tpu.memory_space<vmem>>, vector<1x2x32xf32>,
    %169 = vector.extract_strided_slice %38 {offsets = [0, 96], sizes = [2, 16], strides = [1, 1]} : vector<2x128xf32> to vector<2x16xf32>
    %cst_86 = arith.constant dense<0.000000e+00> : vector<2x32xf32>
    %170 = tpu.matmul %169, %57, %cst_86 {dimension_numbers = #tpu.dot_dimension_numbers<[1], [0], [0], [1], [0, 0, 1, 1], [], []>} : vector<2x16xf32>, vector<16x32xf32>, vector<2x32xf32> -> vector<2x32xf32>
    %171 = vector.extract_strided_slice %50 {offsets = [0, 96], sizes = [2, 16], strides = [1, 1]} : vector<2x128xf32> to vector<2x16xf32>
    %cst_87 = arith.constant dense<0.000000e+00> : vector<2x32xf32>
    %172 = tpu.matmul %171, %64, %cst_87 {dimension_numbers = #tpu.dot_dimension_numbers<[1], [0], [0], [1], [0, 0, 1, 1], [], []>} : vector<2x16xf32>, vector<16x32xf32>, vector<2x32xf32> -> vector<2x32xf32>
    %173 = arith.addf %170, %172 : vector<2x32xf32>
    %c0_88 = arith.constant 0 : index
    %c0_89 = arith.constant 0 : index
    %c416 = arith.constant 416 : index
    %174 = vector.load %arg6[%c0_88, %c0_89, %c416] : memref<1x2x512xf32, #tpu.memory_space<vmem>>, vector<1x2x32xf32>
    %175 = vector.shape_cast %174 : vector<1x2x32xf32> to vector<2x32xf32>
    %176 = vector.shape_cast %173 : vector<2x32xf32> to vector<1x2x32xf32>
    tpu.vector_store %arg6[%c0_88, %c0_89, %c416], %176 {strides = array<i32>} : memref<1x2x512xf32, #tpu.memory_space<vmem>>, vector<1x2x32xf32>,
    %177 = vector.extract_strided_slice %14 {offsets = [0, 112], sizes = [2, 16], strides = [1, 1]} : vector<2x128xf32> to vector<2x16xf32>
    %cst_90 = arith.constant dense<0.000000e+00> : vector<2x32xf32>
    %178 = tpu.matmul %177, %57, %cst_90 {dimension_numbers = #tpu.dot_dimension_numbers<[1], [0], [0], [1], [0, 0, 1, 1], [], []>} : vector<2x16xf32>, vector<16x32xf32>, vector<2x32xf32> -> vector<2x32xf32>
    %179 = vector.extract_strided_slice %26 {offsets = [0, 112], sizes = [2, 16], strides = [1, 1]} : vector<2x128xf32> to vector<2x16xf32>
    %cst_91 = arith.constant dense<0.000000e+00> : vector<2x32xf32>
    %180 = tpu.matmul %179, %64, %cst_91 {dimension_numbers = #tpu.dot_dimension_numbers<[1], [0], [0], [1], [0, 0, 1, 1], [], []>} : vector<2x16xf32>, vector<16x32xf32>, vector<2x32xf32> -> vector<2x32xf32>
    %181 = arith.addf %178, %180 : vector<2x32xf32>
    %c0_92 = arith.constant 0 : index
    %c0_93 = arith.constant 0 : index
    %c448 = arith.constant 448 : index
    %182 = vector.load %arg6[%c0_92, %c0_93, %c448] : memref<1x2x512xf32, #tpu.memory_space<vmem>>, vector<1x2x32xf32>
    %183 = vector.shape_cast %182 : vector<1x2x32xf32> to vector<2x32xf32>
    %184 = vector.shape_cast %181 : vector<2x32xf32> to vector<1x2x32xf32>
    tpu.vector_store %arg6[%c0_92, %c0_93, %c448], %184 {strides = array<i32>} : memref<1x2x512xf32, #tpu.memory_space<vmem>>, vector<1x2x32xf32>,
    %185 = vector.extract_strided_slice %38 {offsets = [0, 112], sizes = [2, 16], strides = [1, 1]} : vector<2x128xf32> to vector<2x16xf32>
    %cst_94 = arith.constant dense<0.000000e+00> : vector<2x32xf32>
    %186 = tpu.matmul %185, %57, %cst_94 {dimension_numbers = #tpu.dot_dimension_numbers<[1], [0], [0], [1], [0, 0, 1, 1], [], []>} : vector<2x16xf32>, vector<16x32xf32>, vector<2x32xf32> -> vector<2x32xf32>
    %187 = vector.extract_strided_slice %50 {offsets = [0, 112], sizes = [2, 16], strides = [1, 1]} : vector<2x128xf32> to vector<2x16xf32>
    %cst_95 = arith.constant dense<0.000000e+00> : vector<2x32xf32>
    %188 = tpu.matmul %187, %64, %cst_95 {dimension_numbers = #tpu.dot_dimension_numbers<[1], [0], [0], [1], [0, 0, 1, 1], [], []>} : vector<2x16xf32>, vector<16x32xf32>, vector<2x32xf32> -> vector<2x32xf32>
    %189 = arith.addf %186, %188 : vector<2x32xf32>
    %c0_96 = arith.constant 0 : index
    %c0_97 = arith.constant 0 : index
    %c480 = arith.constant 480 : index
    %190 = vector.load %arg6[%c0_96, %c0_97, %c480] : memref<1x2x512xf32, #tpu.memory_space<vmem>>, vector<1x2x32xf32>
    %191 = vector.shape_cast %190 : vector<1x2x32xf32> to vector<2x32xf32>
    %192 = vector.shape_cast %189 : vector<2x32xf32> to vector<1x2x32xf32>
    tpu.vector_store %arg6[%c0_96, %c0_97, %c480], %192 {strides = array<i32>} : memref<1x2x512xf32, #tpu.memory_space<vmem>>, vector<1x2x32xf32>,
    return
  }
  func.func @transform_0(%arg0: i32, %arg1: i32) -> (i32, i32) {
    %c0_i32 = arith.constant 0 : i32
    %c0_i32_0 = arith.constant 0 : i32
    %c0_i32_1 = arith.constant 0 : i32
    return %c0_i32, %c0_i32_0 : i32, i32
  }
  func.func @transform_1(%arg0: i32, %arg1: i32) -> (i32, i32, i32) {
    %c0_i32 = arith.constant 0 : i32
    %c0_i32_0 = arith.constant 0 : i32
    return %arg0, %c0_i32, %arg1 : i32, i32, i32
  }
  func.func @transform_2(%arg0: i32, %arg1: i32) -> (i32, i32, i32) {
    %c0_i32 = arith.constant 0 : i32
    %c0_i32_0 = arith.constant 0 : i32
    %c0_i32_1 = arith.constant 0 : i32
    %c0_i32_2 = arith.constant 0 : i32
    return %c0_i32, %c0_i32_0, %c0_i32_1 : i32, i32, i32
  }
  func.func @transform_3(%arg0: i32, %arg1: i32) -> (i32, i32, i32) {
    %c0_i32 = arith.constant 0 : i32
    %c0_i32_0 = arith.constant 0 : i32
    %c0_i32_1 = arith.constant 0 : i32
    %c0_i32_2 = arith.constant 0 : i32
    return %c0_i32, %c0_i32_0, %c0_i32_1 : i32, i32, i32
  }
  func.func @transform_4(%arg0: i32, %arg1: i32) -> (i32, i32, i32) {
    %c0_i32 = arith.constant 0 : i32
    %c0_i32_0 = arith.constant 0 : i32
    return %arg0, %c0_i32, %arg1 : i32, i32, i32
  }
}

</mosaic_0001>

<llo_original>
// kernel: up_forward.1
$region0: #{up_forward.1}
  #allocation0 [shape = 'u32[]', space=smem, size = 0x4, offset = 0x4, fixed_abs, tag = 'smem constant byte address 0x4 - core index']
  #allocation1 [shape = 'u32[144,128]{1,0:T(1,128)}', space=vmem, size = 0x12000, scoped, tag = 'internal scratch']
  #allocation2 [shape = 'f32[1,1]{1,0:T(1,128)S(6)}', space=smem, size = 0x200, scoped, tag = 'scoped memory for up_forward.1']
  %s0 = inlined_call_operand.<no memory space> [shape: f32[1,1], index: 0, kind: input, shape index: {}]
  %s1 = inlined_call_operand.vmem [shape: f32[2,8,256], index: 1, kind: input, shape index: {}]
  %s2 = inlined_call_operand.vmem [shape: f32[4,2,8], index: 2, kind: input, shape index: {}]
  %s3 = inlined_call_operand.vmem [shape: f32[4,2,1], index: 3, kind: input, shape index: {}]
  %s4 = inlined_call_operand.vmem [shape: f32[2,2,1024], index: 4, kind: output, shape index: {}]
  %s5 = sld [smem:[#allocation0]]
  $region49: #{up_forward.1} parent=0
    _
  %s7 = ssub.s32 1, %s5
  %s8 = scalar_select 0, %s7, %s5
  %9 = sst [smem:[#allocation2]] %s0
  loop: start=0, step=1, limit=6
  $region2: #{up_forward.1} parent=0 // loop_pre_header
    _
  $region3: #{up_forward.1} parent=0 // loop_header
    %s11 = sphi 0, %s15
    %p12 = scmp.ge.s32.totalorder %s11, 6
    %s18 = sphi 0, %s30
    %s19 = sphi 0, %s26
    %s20 = sphi 0, %s18
    %s21 = sphi 0, %s19
    %s22 = sphi 0, %s20
    %s23 = sphi 0, %s21
    %s31 = sphi 0, %s31
    %s33 = sphi 0, %s31
    %s34 = sphi 0, %s33
    %s48 = sphi 0, %s34
    %s56 = sphi 0, %s58
    %s59 = sphi 0, %s56
    %s60 = sphi 0, %s59
    %s76 = sphi 0, %s60
    %s80 = sphi 0, %s80
    %s82 = sphi 0, %s80
    %s83 = sphi 0, %s82
    %s97 = sphi 0, %s83
    %s101 = sphi 0, %s101
    %s103 = sphi 0, %s101
    %s104 = sphi 0, %s103
    %s118 = sphi 0, %s104
    %s126 = sphi 0, %s128
    %s129 = sphi 0, %s126
    %s130 = sphi 0, %s129
    %s146 = sphi 0, %s130
  $region4: #{up_forward.1} parent=0 // loop_header_branch
    %14 = sbr.rel (%p12) target = $region8
  $region5: #{up_forward.1} parent=0 // loop_body
    %s16 = ssub.s32 %s11, 1
    %s17 = ssub.s32 %s11, 2
    %s24 = sadd.s32 1, %s19
    %p25 = scmp.ge.s32.totalorder %s24, 2
    %s26 = scalar_select %p25, 0, %s24
    %s27 = sadd.s32 1, %s18
    %s28 = scalar_select %p25, %s27, %s18
    %p29 = scmp.ge.s32.totalorder %s28, 2
    %s30 = scalar_select %p29, 0, %s28
    %s32 = sadd.s32 %s31, 1
    %p35 = scmp.eq.s32.totalorder %s11, 3
    %p36 = scmp.ne.s32.totalorder %s31, %s33
    %p37 = scmp.eq.s32.totalorder %s11, 0
    %p38 = por %p36, %p37
    %p39 = scmp.ne.s32.totalorder %s31, %s33
    %p40 = scmp.eq.s32.totalorder %s16, 3
    %p41 = por %p39, %p40
    %p42 = scmp.ne.s32.totalorder %s33, %s34
    %p43 = scmp.eq.s32.totalorder %s16, 0
    %p44 = por %p42, %p43
    %p45 = scmp.ne.s32.totalorder %s33, %s34
    %p46 = scmp.eq.s32.totalorder %s17, 3
    %p47 = por %p45, %p46
    %p49 = scmp.ne.s32.totalorder %s34, %s48
    %p50 = scmp.eq.s32.totalorder %s17, 0
    %p51 = por %p49, %p50
    %s52 = ssub.s32 %s18, %s30
    %s53 = ssub.s32 %s19, %s26
    %s54 = sor.u32 %s52, %s53
    %p55 = scmp.eq.s32.totalorder %s54, 0
    %s57 = sadd.s32 %s56, 1
    %s58 = scalar_select %p55, %s56, %s57
    %p61 = pneg %p55
    %p62 = scmp.eq.s32.totalorder %s11, 3
    %p63 = por %p61, %p62
    %p64 = scmp.ne.s32.totalorder %s56, %s59
    %p65 = scmp.eq.s32.totalorder %s11, 0
    %p66 = por %p64, %p65
    %p67 = scmp.ne.s32.totalorder %s56, %s59
    %p68 = scmp.eq.s32.totalorder %s16, 3
    %p69 = por %p67, %p68
    %p70 = scmp.ne.s32.totalorder %s59, %s60
    %p71 = scmp.eq.s32.totalorder %s16, 0
    %p72 = por %p70, %p71
    %p73 = scmp.ne.s32.totalorder %s59, %s60
    %p74 = scmp.eq.s32.totalorder %s17, 3
    %p75 = por %p73, %p74
    %p77 = scmp.ne.s32.totalorder %s60, %s76
    %p78 = scmp.eq.s32.totalorder %s17, 0
    %p79 = por %p77, %p78
    %s81 = sadd.s32 %s80, 1
    %p84 = scmp.eq.s32.totalorder %s11, 3
    %p85 = scmp.ne.s32.totalorder %s80, %s82
    %p86 = scmp.eq.s32.totalorder %s11, 0
    %p87 = por %p85, %p86
    %p88 = scmp.ne.s32.totalorder %s80, %s82
    %p89 = scmp.eq.s32.totalorder %s16, 3
    %p90 = por %p88, %p89
    %p91 = scmp.ne.s32.totalorder %s82, %s83
    %p92 = scmp.eq.s32.totalorder %s16, 0
    %p93 = por %p91, %p92
    %p94 = scmp.ne.s32.totalorder %s82, %s83
    %p95 = scmp.eq.s32.totalorder %s17, 3
    %p96 = por %p94, %p95
    %p98 = scmp.ne.s32.totalorder %s83, %s97
    %p99 = scmp.eq.s32.totalorder %s17, 0
    %p100 = por %p98, %p99
    %s102 = sadd.s32 %s101, 1
    %p105 = scmp.eq.s32.totalorder %s11, 3
    %p106 = scmp.ne.s32.totalorder %s101, %s103
    %p107 = scmp.eq.s32.totalorder %s11, 0
    %p108 = por %p106, %p107
    %p109 = scmp.ne.s32.totalorder %s101, %s103
    %p110 = scmp.eq.s32.totalorder %s16, 3
    %p111 = por %p109, %p110
    %p112 = scmp.ne.s32.totalorder %s103, %s104
    %p113 = scmp.eq.s32.totalorder %s16, 0
    %p114 = por %p112, %p113
    %p115 = scmp.ne.s32.totalorder %s103, %s104
    %p116 = scmp.eq.s32.totalorder %s17, 3
    %p117 = por %p115, %p116
    %p119 = scmp.ne.s32.totalorder %s104, %s118
    %p120 = scmp.eq.s32.totalorder %s17, 0
    %p121 = por %p119, %p120
    %s122 = ssub.s32 %s18, %s30
    %s123 = ssub.s32 %s19, %s26
    %s124 = sor.u32 %s122, %s123
    %p125 = scmp.eq.s32.totalorder %s124, 0
    %s127 = sadd.s32 %s126, 1
    %s128 = scalar_select %p125, %s126, %s127
    %p131 = pneg %p125
    %p132 = scmp.eq.s32.totalorder %s11, 3
    %p133 = por %p131, %p132
    %p134 = scmp.ne.s32.totalorder %s126, %s129
    %p135 = scmp.eq.s32.totalorder %s11, 0
    %p136 = por %p134, %p135
    %p137 = scmp.ne.s32.totalorder %s126, %s129
    %p138 = scmp.eq.s32.totalorder %s16, 3
    %p139 = por %p137, %p138
    %p140 = scmp.ne.s32.totalorder %s129, %s130
    %p141 = scmp.eq.s32.totalorder %s16, 0
    %p142 = por %p140, %p141
    %p143 = scmp.ne.s32.totalorder %s129, %s130
    %p144 = scmp.eq.s32.totalorder %s17, 3
    %p145 = por %p143, %p144
    %p147 = scmp.ne.s32.totalorder %s130, %s146
    %p148 = scmp.eq.s32.totalorder %s17, 0
    %p149 = por %p147, %p148
    %p150 = scmp.le.s32.totalorder 1, %s11
    %p151 = scmp.lt.s32.totalorder %s11, 5
    %p152 = pnand %p150, %p151
    %p153 = pneg %p152
    // Predicated region
    $region9: #{up_forward.1} parent=5 // pred_check
      _
    $region10: #{up_forward.1} parent=5 // pred_check_branch
      %155 = sbr.rel (%p152) target = $region12
    $region11: #{up_forward.1} parent=5 // pred_region
      %s156 = ssub.s32 %s11, 1
      // Predicated region
      $region13: #{up_forward.1} parent=11 // pred_check
        %p157 = pneg %p44
      $region14: #{up_forward.1} parent=11 // pred_check_branch
        %159 = sbr.rel (%p157) target = $region16
      $region15: #{up_forward.1} parent=11 // pred_region
        _
      $region16: #{up_forward.1} parent=11 // pred_fallthru
        _
      // Predicated region
      $region17: #{up_forward.1} parent=11 // pred_check
        %p160 = pneg %p93
      $region18: #{up_forward.1} parent=11 // pred_check_branch
        %162 = sbr.rel (%p160) target = $region20
      $region19: #{up_forward.1} parent=11 // pred_region
        _
      $region20: #{up_forward.1} parent=11 // pred_fallthru
        _
      // Predicated region
      $region21: #{up_forward.1} parent=11 // pred_check
        %p163 = pneg %p114
      $region22: #{up_forward.1} parent=11 // pred_check_branch
        %165 = sbr.rel (%p163) target = $region24
      $region23: #{up_forward.1} parent=11 // pred_region
        _
      $region24: #{up_forward.1} parent=11 // pred_fallthru
        _
    $region12: #{up_forward.1} parent=5 // pred_fallthru
      _
    %p166 = scmp.lt.s32.totalorder %s11, 4
    // Predicated region
    $region25: #{up_forward.1} parent=5 // pred_check
      %p167 = pneg %p166
    $region26: #{up_forward.1} parent=5 // pred_check_branch
      %169 = sbr.rel (%p167) target = $region28
    $region27: #{up_forward.1} parent=5 // pred_region
      // Predicated region
      $region29: #{up_forward.1} parent=27 // pred_check
        %p170 = pneg %p66
      $region30: #{up_forward.1} parent=27 // pred_check_branch
        %172 = sbr.rel (%p170) target = $region32
      $region31: #{up_forward.1} parent=27 // pred_region
        %p173 = scmp.lt.s32.totalorder %s18, 1
        %s174 = scalar_select %p173, %s18, 1
        %p175 = scmp.lt.s32.totalorder %s19, 1
        %s176 = scalar_select %p175, %s19, 1
        %s177 = smul.addr %s174, 2
        %s178 = sadd.s32 %s176, %s177
        %s179 = smul.addr %s178, 8
        %s180 = scalar_lea.vmem %s1, %s179
      $region32: #{up_forward.1} parent=27 // pred_fallthru
        _
    $region28: #{up_forward.1} parent=5 // pred_fallthru
      _
    %p181 = scmp.le.s32.totalorder 1, %s11
    %p182 = scmp.lt.s32.totalorder %s11, 5
    %p183 = pnand %p181, %p182
    %p184 = pneg %p183
    // Predicated region
    $region33: #{up_forward.1} parent=5 // pred_check
      _
    $region34: #{up_forward.1} parent=5 // pred_check_branch
      %186 = sbr.rel (%p183) target = $region36
    $region35: #{up_forward.1} parent=5 // pred_region
      %s187 = ssub.s32 %s11, 1
      %p188 = pneg %p44
      %p189 = pneg %p41
      %p190 = scmp.lt.s32.totalorder %s20, 1
      %s191 = scalar_select %p190, %s20, 1
      %p192 = scmp.lt.s32.totalorder %s21, 1
      %s193 = scalar_select %p192, %s21, 1
      %s194 = smul.addr %s191, 2
      %s195 = sadd.s32 %s193, %s194
      %s196 = smul.addr %s195, 8
      %s197 = scalar_lea.vmem %s1, %s196
      %p198 = pneg %p72
      %p199 = pneg %p69
      %p200 = pneg %p93
      %p201 = pneg %p90
      %p202 = pneg %p114
      %p203 = pneg %p111
      %p204 = pneg %p142
      %p205 = pneg %p139
      %s206 = smul.u32 4, %s21
      %p207 = scmp.lt.s32.totalorder %s20, 1
      %s208 = scalar_select %p207, %s20, 1
      %p209 = scmp.lt.s32.totalorder %s206, 7
      %s210 = scalar_select %p209, %s206, 7
      %s211 = smul.addr %s208, 8
      %s212 = sadd.s32 %s210, %s211
      %s213 = smul.addr %s212, 2
      %s214 = scalar_lea.vmem %s4, %s213
      %p215 = scmp.lt.s32.totalorder %s20, 1
      %s216 = scalar_select %p215, %s20, 1
      %p217 = scmp.lt.s32.totalorder %s21, 1
      %s218 = scalar_select %p217, %s21, 1
      %s219 = smul.addr %s216, 2
      %s220 = sadd.s32 %s218, %s219
      %s221 = smul.addr %s220, 8
      %s222 = scalar_lea.vmem %s1, %s221
      %s223 = smul.u32 4, %s21
      %p224 = scmp.lt.s32.totalorder %s20, 1
      %s225 = scalar_select %p224, %s20, 1
      %p226 = scmp.lt.s32.totalorder %s223, 7
      %s227 = scalar_select %p226, %s223, 7
      %s228 = smul.addr %s225, 8
      %s229 = sadd.s32 %s227, %s228
      %s230 = smul.addr %s229, 2
      %s231 = scalar_lea.vmem %s4, %s230
      %s232 = smul.u32 4, %s21
      %s233 = sld [smem:[#allocation2]]
      %v234 = vld [vmem:[%s222] sm:$0xff]
      %v235 = vld [vmem:[%s2] sm:$0x3]
      %v236 = vld [vmem:[%s3] sm:$0x3]
      %238 = vset.pattern.permute.xlu0 0
      %239 = vperm.xlu0 %238, %v236
      %v240 = vpop.permute.xlu0 %239
      %vm242 = vcmask 64512
      %v244 = vsel %vm242, %v235, 0
      %246 = vmatprep.subr.mxu0 0.0
      %247 = vmatpush1.msra.mxu0 %v234
      %248 = vmatprep.subr.mxu0 0.0
      %249 = vmatpush1.msra.mxu0 0.0
      %250 = vmatprep.subr.mxu0 0.0
      %251 = vmatpush1.msra.mxu0 0.0
      %252 = vmatprep.subr.mxu0 0.0
      %253 = vmatpush1.msra.mxu0 0.0
      %254 = vmatprep.subr.mxu0 0.0
      %255 = vmatpush1.msra.mxu0 0.0
      %256 = vmatprep.subr.mxu0 0.0
      %257 = vmatpush1.msra.mxu0 0.0
      %258 = vmatprep.subr.mxu0 0.0
      %259 = vmatpush1.msra.mxu0 0.0
      %260 = vmatprep.subr.mxu0 0.0
      %261 = vmatpush1.msra.mxu0 0.0
      %262 = vmatprep.subr.mxu0 0.0
      %263 = vmatpush1.msra.mxu0 0.0
      %264 = vmatprep.subr.mxu0 0.0
      %265 = vmatpush1.msra.mxu0 0.0
      %266 = vmatprep.subr.mxu0 0.0
      %267 = vmatpush1.msra.mxu0 0.0
      %268 = vmatprep.subr.mxu0 0.0
      %269 = vmatpush1.msra.mxu0 0.0
      %270 = vmatprep.subr.mxu0 0.0
      %271 = vmatpush1.msra.mxu0 0.0
      %272 = vmatprep.subr.mxu0 0.0
      %273 = vmatpush1.msra.mxu0 0.0
      %274 = vmatprep.subr.mxu0 0.0
      %275 = vmatpush1.msra.mxu0 0.0
      %276 = vmatprep.subr.mxu0 0.0
      %277 = vmatpush1.msra.mxu0 0.0
      %278 = vmatprep.subr.mxu0 0.0
      %279 = vmatpush1.msra.mxu0 0.0
      %280 = vmatprep.subr.mxu0 0.0
      %281 = vmatpush1.msra.mxu0 0.0
      %282 = vmatprep.subr.mxu0 0.0
      %283 = vmatpush1.msra.mxu0 0.0
      %284 = vmatprep.subr.mxu0 0.0
      %285 = vmatpush1.msra.mxu0 0.0
      %286 = vmatprep.subr.mxu0 0.0
      %287 = vmatpush1.msra.mxu0 0.0
      %288 = vmatprep.subr.mxu0 0.0
      %289 = vmatpush1.msra.mxu0 0.0
      %290 = vmatprep.subr.mxu0 0.0
      %291 = vmatpush1.msra.mxu0 0.0
      %292 = vmatprep.subr.mxu0 0.0
      %293 = vmatpush1.msra.mxu0 0.0
      %294 = vmatprep.subr.mxu0 0.0
      %295 = vmatpush1.msra.mxu0 0.0
      %296 = vmatprep.subr.mxu0 0.0
      %297 = vmatpush1.msra.mxu0 0.0
      %298 = vmatprep.subr.mxu0 0.0
      %299 = vmatpush1.msra.mxu0 0.0
      %300 = vmatprep.subr.mxu0 0.0
      %301 = vmatpush1.msra.mxu0 0.0
      %302 = vmatprep.subr.mxu0 0.0
      %303 = vmatpush1.msra.mxu0 0.0
      %304 = vmatprep.subr.mxu0 0.0
      %305 = vmatpush1.msra.mxu0 0.0
      %306 = vmatprep.subr.mxu0 0.0
      %307 = vmatpush1.msra.mxu0 0.0
      %308 = vmatprep.subr.mxu0 0.0
      %309 = vmatpush1.msra.mxu0 0.0
      %310 = vmatprep.mubr.f32.mxu0 0.0
      %311 = vmatmul.mubr.f32.gmra.mrb[0].mxu0 %v244
      %v312 = vpop.f32.mrb[0].mxu0
      %v313 = vadd.f32 %v240, %v312
      %v314 = vpop.f32.mrb[0].mxu0
      %315 = vdwg.mxu0
      %vm316 = vcmp.gt.f32.partialorder %v313, 0.0
      %v317 = vstv %s233
      %v318 = vmul.f32 %v317, %v313
      %v319 = vsel %vm316, %v313, %v318
      %s320 = scalar_lea.vmem %s2, 2
      %v321 = vld [vmem:[%s320] sm:$0x3]
      %s322 = scalar_lea.vmem %s3, 2
      %v323 = vld [vmem:[%s322] sm:$0x3]
      %325 = vset.pattern.permute.xlu0 0
      %326 = vperm.xlu0 %325, %v323
      %v327 = vpop.permute.xlu0 %326
      %v330 = vsel %vm242, %v321, 0
      %332 = vmatprep.subr.mxu0 0.0
      %333 = vmatpush1.msra.mxu0 %v234
      %334 = vmatprep.subr.mxu0 0.0
      %335 = vmatpush1.msra.mxu0 0.0
      %336 = vmatprep.subr.mxu0 0.0
      %337 = vmatpush1.msra.mxu0 0.0
      %338 = vmatprep.subr.mxu0 0.0
      %339 = vmatpush1.msra.mxu0 0.0
      %340 = vmatprep.subr.mxu0 0.0
      %341 = vmatpush1.msra.mxu0 0.0
      %342 = vmatprep.subr.mxu0 0.0
      %343 = vmatpush1.msra.mxu0 0.0
      %344 = vmatprep.subr.mxu0 0.0
      %345 = vmatpush1.msra.mxu0 0.0
      %346 = vmatprep.subr.mxu0 0.0
      %347 = vmatpush1.msra.mxu0 0.0
      %348 = vmatprep.subr.mxu0 0.0
      %349 = vmatpush1.msra.mxu0 0.0
      %350 = vmatprep.subr.mxu0 0.0
      %351 = vmatpush1.msra.mxu0 0.0
      %352 = vmatprep.subr.mxu0 0.0
      %353 = vmatpush1.msra.mxu0 0.0
      %354 = vmatprep.subr.mxu0 0.0
      %355 = vmatpush1.msra.mxu0 0.0
      %356 = vmatprep.subr.mxu0 0.0
      %357 = vmatpush1.msra.mxu0 0.0
      %358 = vmatprep.subr.mxu0 0.0
      %359 = vmatpush1.msra.mxu0 0.0
      %360 = vmatprep.subr.mxu0 0.0
      %361 = vmatpush1.msra.mxu0 0.0
      %362 = vmatprep.subr.mxu0 0.0
      %363 = vmatpush1.msra.mxu0 0.0
      %364 = vmatprep.subr.mxu0 0.0
      %365 = vmatpush1.msra.mxu0 0.0
      %366 = vmatprep.subr.mxu0 0.0
      %367 = vmatpush1.msra.mxu0 0.0
      %368 = vmatprep.subr.mxu0 0.0
      %369 = vmatpush1.msra.mxu0 0.0
      %370 = vmatprep.subr.mxu0 0.0
      %371 = vmatpush1.msra.mxu0 0.0
      %372 = vmatprep.subr.mxu0 0.0
      %373 = vmatpush1.msra.mxu0 0.0
      %374 = vmatprep.subr.mxu0 0.0
      %375 = vmatpush1.msra.mxu0 0.0
      %376 = vmatprep.subr.mxu0 0.0
      %377 = vmatpush1.msra.mxu0 0.0
      %378 = vmatprep.subr.mxu0 0.0
      %379 = vmatpush1.msra.mxu0 0.0
      %380 = vmatprep.subr.mxu0 0.0
      %381 = vmatpush1.msra.mxu0 0.0
      %382 = vmatprep.subr.mxu0 0.0
      %383 = vmatpush1.msra.mxu0 0.0
      %384 = vmatprep.subr.mxu0 0.0
      %385 = vmatpush1.msra.mxu0 0.0
      %386 = vmatprep.subr.mxu0 0.0
      %387 = vmatpush1.msra.mxu0 0.0
      %388 = vmatprep.subr.mxu0 0.0
      %389 = vmatpush1.msra.mxu0 0.0
      %390 = vmatprep.subr.mxu0 0.0
      %391 = vmatpush1.msra.mxu0 0.0
      %392 = vmatprep.subr.mxu0 0.0
      %393 = vmatpush1.msra.mxu0 0.0
      %394 = vmatprep.subr.mxu0 0.0
      %395 = vmatpush1.msra.mxu0 0.0
      %396 = vmatprep.mubr.f32.mxu0 0.0
      %397 = vmatmul.mubr.f32.gmra.mrb[0].mxu0 %v330
      %v398 = vpop.f32.mrb[0].mxu0
      %v399 = vadd.f32 %v327, %v398
      %v400 = vpop.f32.mrb[0].mxu0
      %401 = vdwg.mxu0
      %vm402 = vcmp.gt.f32.partialorder %v399, 0.0
      %v403 = vmul.f32 %v317, %v399
      %v404 = vsel %vm402, %v399, %v403
      %s405 = scalar_lea.vmem %s2, 4
      %v406 = vld [vmem:[%s405] sm:$0x3]
      %s407 = scalar_lea.vmem %s3, 4
      %v408 = vld [vmem:[%s407] sm:$0x3]
      %410 = vset.pattern.permute.xlu0 0
      %411 = vperm.xlu0 %410, %v408
      %v412 = vpop.permute.xlu0 %411
      %v415 = vsel %vm242, %v406, 0
      %417 = vmatprep.subr.mxu0 0.0
      %418 = vmatpush1.msra.mxu0 %v234
      %419 = vmatprep.subr.mxu0 0.0
      %420 = vmatpush1.msra.mxu0 0.0
      %421 = vmatprep.subr.mxu0 0.0
      %422 = vmatpush1.msra.mxu0 0.0
      %423 = vmatprep.subr.mxu0 0.0
      %424 = vmatpush1.msra.mxu0 0.0
      %425 = vmatprep.subr.mxu0 0.0
      %426 = vmatpush1.msra.mxu0 0.0
      %427 = vmatprep.subr.mxu0 0.0
      %428 = vmatpush1.msra.mxu0 0.0
      %429 = vmatprep.subr.mxu0 0.0
      %430 = vmatpush1.msra.mxu0 0.0
      %431 = vmatprep.subr.mxu0 0.0
      %432 = vmatpush1.msra.mxu0 0.0
      %433 = vmatprep.subr.mxu0 0.0
      %434 = vmatpush1.msra.mxu0 0.0
      %435 = vmatprep.subr.mxu0 0.0
      %436 = vmatpush1.msra.mxu0 0.0
      %437 = vmatprep.subr.mxu0 0.0
      %438 = vmatpush1.msra.mxu0 0.0
      %439 = vmatprep.subr.mxu0 0.0
      %440 = vmatpush1.msra.mxu0 0.0
      %441 = vmatprep.subr.mxu0 0.0
      %442 = vmatpush1.msra.mxu0 0.0
      %443 = vmatprep.subr.mxu0 0.0
      %444 = vmatpush1.msra.mxu0 0.0
      %445 = vmatprep.subr.mxu0 0.0
      %446 = vmatpush1.msra.mxu0 0.0
      %447 = vmatprep.subr.mxu0 0.0
      %448 = vmatpush1.msra.mxu0 0.0
      %449 = vmatprep.subr.mxu0 0.0
      %450 = vmatpush1.msra.mxu0 0.0
      %451 = vmatprep.subr.mxu0 0.0
      %452 = vmatpush1.msra.mxu0 0.0
      %453 = vmatprep.subr.mxu0 0.0
      %454 = vmatpush1.msra.mxu0 0.0
      %455 = vmatprep.subr.mxu0 0.0
      %456 = vmatpush1.msra.mxu0 0.0
      %457 = vmatprep.subr.mxu0 0.0
      %458 = vmatpush1.msra.mxu0 0.0
      %459 = vmatprep.subr.mxu0 0.0
      %460 = vmatpush1.msra.mxu0 0.0
      %461 = vmatprep.subr.mxu0 0.0
      %462 = vmatpush1.msra.mxu0 0.0
      %463 = vmatprep.subr.mxu0 0.0
      %464 = vmatpush1.msra.mxu0 0.0
      %465 = vmatprep.subr.mxu0 0.0
      %466 = vmatpush1.msra.mxu0 0.0
      %467 = vmatprep.subr.mxu0 0.0
      %468 = vmatpush1.msra.mxu0 0.0
      %469 = vmatprep.subr.mxu0 0.0
      %470 = vmatpush1.msra.mxu0 0.0
      %471 = vmatprep.subr.mxu0 0.0
      %472 = vmatpush1.msra.mxu0 0.0
      %473 = vmatprep.subr.mxu0 0.0
      %474 = vmatpush1.msra.mxu0 0.0
      %475 = vmatprep.subr.mxu0 0.0
      %476 = vmatpush1.msra.mxu0 0.0
      %477 = vmatprep.subr.mxu0 0.0
      %478 = vmatpush1.msra.mxu0 0.0
      %479 = vmatprep.subr.mxu0 0.0
      %480 = vmatpush1.msra.mxu0 0.0
      %481 = vmatprep.mubr.f32.mxu0 0.0
      %482 = vmatmul.mubr.f32.gmra.mrb[0].mxu0 %v415
      %v483 = vpop.f32.mrb[0].mxu0
      %v484 = vadd.f32 %v412, %v483
      %v485 = vpop.f32.mrb[0].mxu0
      %486 = vdwg.mxu0
      %vm487 = vcmp.gt.f32.partialorder %v484, 0.0
      %v488 = vmul.f32 %v317, %v484
      %v489 = vsel %vm487, %v484, %v488
      %s490 = scalar_lea.vmem %s2, 6
      %v491 = vld [vmem:[%s490] sm:$0x3]
      %s492 = scalar_lea.vmem %s3, 6
      %v493 = vld [vmem:[%s492] sm:$0x3]
      %495 = vset.pattern.permute.xlu0 0
      %496 = vperm.xlu0 %495, %v493
      %v497 = vpop.permute.xlu0 %496
      %v500 = vsel %vm242, %v491, 0
      %502 = vmatprep.subr.mxu0 0.0
      %503 = vmatpush1.msra.mxu0 %v234
      %504 = vmatprep.subr.mxu0 0.0
      %505 = vmatpush1.msra.mxu0 0.0
      %506 = vmatprep.subr.mxu0 0.0
      %507 = vmatpush1.msra.mxu0 0.0
      %508 = vmatprep.subr.mxu0 0.0
      %509 = vmatpush1.msra.mxu0 0.0
      %510 = vmatprep.subr.mxu0 0.0
      %511 = vmatpush1.msra.mxu0 0.0
      %512 = vmatprep.subr.mxu0 0.0
      %513 = vmatpush1.msra.mxu0 0.0
      %514 = vmatprep.subr.mxu0 0.0
      %515 = vmatpush1.msra.mxu0 0.0
      %516 = vmatprep.subr.mxu0 0.0
      %517 = vmatpush1.msra.mxu0 0.0
      %518 = vmatprep.subr.mxu0 0.0
      %519 = vmatpush1.msra.mxu0 0.0
      %520 = vmatprep.subr.mxu0 0.0
      %521 = vmatpush1.msra.mxu0 0.0
      %522 = vmatprep.subr.mxu0 0.0
      %523 = vmatpush1.msra.mxu0 0.0
      %524 = vmatprep.subr.mxu0 0.0
      %525 = vmatpush1.msra.mxu0 0.0
      %526 = vmatprep.subr.mxu0 0.0
      %527 = vmatpush1.msra.mxu0 0.0
      %528 = vmatprep.subr.mxu0 0.0
      %529 = vmatpush1.msra.mxu0 0.0
      %530 = vmatprep.subr.mxu0 0.0
      %531 = vmatpush1.msra.mxu0 0.0
      %532 = vmatprep.subr.mxu0 0.0
      %533 = vmatpush1.msra.mxu0 0.0
      %534 = vmatprep.subr.mxu0 0.0
      %535 = vmatpush1.msra.mxu0 0.0
      %536 = vmatprep.subr.mxu0 0.0
      %537 = vmatpush1.msra.mxu0 0.0
      %538 = vmatprep.subr.mxu0 0.0
      %539 = vmatpush1.msra.mxu0 0.0
      %540 = vmatprep.subr.mxu0 0.0
      %541 = vmatpush1.msra.mxu0 0.0
      %542 = vmatprep.subr.mxu0 0.0
      %543 = vmatpush1.msra.mxu0 0.0
      %544 = vmatprep.subr.mxu0 0.0
      %545 = vmatpush1.msra.mxu0 0.0
      %546 = vmatprep.subr.mxu0 0.0
      %547 = vmatpush1.msra.mxu0 0.0
      %548 = vmatprep.subr.mxu0 0.0
      %549 = vmatpush1.msra.mxu0 0.0
      %550 = vmatprep.subr.mxu0 0.0
      %551 = vmatpush1.msra.mxu0 0.0
      %552 = vmatprep.subr.mxu0 0.0
      %553 = vmatpush1.msra.mxu0 0.0
      %554 = vmatprep.subr.mxu0 0.0
      %555 = vmatpush1.msra.mxu0 0.0
      %556 = vmatprep.subr.mxu0 0.0
      %557 = vmatpush1.msra.mxu0 0.0
      %558 = vmatprep.subr.mxu0 0.0
      %559 = vmatpush1.msra.mxu0 0.0
      %560 = vmatprep.subr.mxu0 0.0
      %561 = vmatpush1.msra.mxu0 0.0
      %562 = vmatprep.subr.mxu0 0.0
      %563 = vmatpush1.msra.mxu0 0.0
      %564 = vmatprep.subr.mxu0 0.0
      %565 = vmatpush1.msra.mxu0 0.0
      %566 = vmatprep.mubr.f32.mxu0 0.0
      %567 = vmatmul.mubr.f32.gmra.mrb[0].mxu0 %v500
      %v568 = vpop.f32.mrb[0].mxu0
      %v569 = vadd.f32 %v497, %v568
      %v570 = vpop.f32.mrb[0].mxu0
      %571 = vdwg.mxu0
      %vm572 = vcmp.gt.f32.partialorder %v569, 0.0
      %v573 = vmul.f32 %v317, %v569
      %v574 = vsel %vm572, %v569, %v573
      %v575 = vlaneseq
      %v576 = vshrl.u32 %v575, 7
      %v577 = vadd.s32 %v576, 8
      %v578 = vlaneseq
      %v579 = vand.u32 %v578, 127
      %v580 = vmul.u32 %v576, 2
      %v581 = vmul.u32 %v577, 2
      %vm582 = vcmp.eq.s32.totalorder %v579, %v580
      %vm583 = vcmp.eq.s32.totalorder %v579, %v581
      %v584 = vsel %vm582, 1, 0
      %v585 = vsel %vm583, 1, 0
      %v586 = vcvt.s32.f32 %v584
      %v587 = vcvt.s32.f32 %v585
      %v588 = vadd.s32 %v580, 1
      %v589 = vadd.s32 %v581, 1
      %vm590 = vcmp.eq.s32.totalorder %v579, %v588
      %vm591 = vcmp.eq.s32.totalorder %v579, %v589
      %v592 = vsel %vm590, 1, 0
      %v593 = vsel %vm591, 1, 0
      %v594 = vcvt.s32.f32 %v592
      %v595 = vcvt.s32.f32 %v593
      %vm596 = vcmask 130048
      %v598 = vsel %vm596, %v404, 0
      %600 = vmatprep.subr.mxu0 0.0
      %601 = vmatpush1.msra.mxu0 %v594
      %602 = vmatprep.subr.mxu0 0.0
      %603 = vmatpush1.msra.mxu0 %v595
      %604 = vmatprep.subr.mxu0 0.0
      %605 = vmatpush1.msra.mxu0 0.0
      %606 = vmatprep.subr.mxu0 0.0
      %607 = vmatpush1.msra.mxu0 0.0
      %608 = vmatprep.subr.mxu0 0.0
      %609 = vmatpush1.msra.mxu0 0.0
      %610 = vmatprep.subr.mxu0 0.0
      %611 = vmatpush1.msra.mxu0 0.0
      %612 = vmatprep.subr.mxu0 0.0
      %613 = vmatpush1.msra.mxu0 0.0
      %614 = vmatprep.subr.mxu0 0.0
      %615 = vmatpush1.msra.mxu0 0.0
      %616 = vmatprep.subr.mxu0 0.0
      %617 = vmatpush1.msra.mxu0 0.0
      %618 = vmatprep.subr.mxu0 0.0
      %619 = vmatpush1.msra.mxu0 0.0
      %620 = vmatprep.subr.mxu0 0.0
      %621 = vmatpush1.msra.mxu0 0.0
      %622 = vmatprep.subr.mxu0 0.0
      %623 = vmatpush1.msra.mxu0 0.0
      %624 = vmatprep.subr.mxu0 0.0
      %625 = vmatpush1.msra.mxu0 0.0
      %626 = vmatprep.subr.mxu0 0.0
      %627 = vmatpush1.msra.mxu0 0.0
      %628 = vmatprep.subr.mxu0 0.0
      %629 = vmatpush1.msra.mxu0 0.0
      %630 = vmatprep.subr.mxu0 0.0
      %631 = vmatpush1.msra.mxu0 0.0
      %632 = vmatprep.subr.mxu0 0.0
      %633 = vmatpush1.msra.mxu0 0.0
      %634 = vmatprep.subr.mxu0 0.0
      %635 = vmatpush1.msra.mxu0 0.0
      %636 = vmatprep.subr.mxu0 0.0
      %637 = vmatpush1.msra.mxu0 0.0
      %638 = vmatprep.subr.mxu0 0.0
      %639 = vmatpush1.msra.mxu0 0.0
      %640 = vmatprep.subr.mxu0 0.0
      %641 = vmatpush1.msra.mxu0 0.0
      %642 = vmatprep.subr.mxu0 0.0
      %643 = vmatpush1.msra.mxu0 0.0
      %644 = vmatprep.subr.mxu0 0.0
      %645 = vmatpush1.msra.mxu0 0.0
      %646 = vmatprep.subr.mxu0 0.0
      %647 = vmatpush1.msra.mxu0 0.0
      %648 = vmatprep.subr.mxu0 0.0
      %649 = vmatpush1.msra.mxu0 0.0
      %650 = vmatprep.subr.mxu0 0.0
      %651 = vmatpush1.msra.mxu0 0.0
      %652 = vmatprep.subr.mxu0 0.0
      %653 = vmatpush1.msra.mxu0 0.0
      %654 = vmatprep.subr.mxu0 0.0
      %655 = vmatpush1.msra.mxu0 0.0
      %656 = vmatprep.subr.mxu0 0.0
      %657 = vmatpush1.msra.mxu0 0.0
      %658 = vmatprep.subr.mxu0 0.0
      %659 = vmatpush1.msra.mxu0 0.0
      %660 = vmatprep.subr.mxu0 0.0
      %661 = vmatpush1.msra.mxu0 0.0
      %662 = vmatprep.subr.mxu0 0.0
      %663 = vmatpush1.msra.mxu0 0.0
      %664 = vmatprep.mubr.f32.mxu0 0.0
      %665 = vmatmul.mubr.f32.gmra.mrb[0].mxu0 %v598
      %v666 = vpop.f32.mrb[0].mxu0
      %v667 = vadd.f32 0.0, %v666
      %v668 = vpop.f32.mrb[0].mxu0
      %669 = vdwg.mxu0
      %v671 = vsel %vm596, %v319, 0
      %673 = vmatprep.subr.mxu0 0.0
      %674 = vmatpush1.msra.mxu0 %v586
      %675 = vmatprep.subr.mxu0 0.0
      %676 = vmatpush1.msra.mxu0 %v587
      %677 = vmatprep.subr.mxu0 0.0
      %678 = vmatpush1.msra.mxu0 0.0
      %679 = vmatprep.subr.mxu0 0.0
      %680 = vmatpush1.msra.mxu0 0.0
      %681 = vmatprep.subr.mxu0 0.0
      %682 = vmatpush1.msra.mxu0 0.0
      %683 = vmatprep.subr.mxu0 0.0
      %684 = vmatpush1.msra.mxu0 0.0
      %685 = vmatprep.subr.mxu0 0.0
      %686 = vmatpush1.msra.mxu0 0.0
      %687 = vmatprep.subr.mxu0 0.0
      %688 = vmatpush1.msra.mxu0 0.0
      %689 = vmatprep.subr.mxu0 0.0
      %690 = vmatpush1.msra.mxu0 0.0
      %691 = vmatprep.subr.mxu0 0.0
      %692 = vmatpush1.msra.mxu0 0.0
      %693 = vmatprep.subr.mxu0 0.0
      %694 = vmatpush1.msra.mxu0 0.0
      %695 = vmatprep.subr.mxu0 0.0
      %696 = vmatpush1.msra.mxu0 0.0
      %697 = vmatprep.subr.mxu0 0.0
      %698 = vmatpush1.msra.mxu0 0.0
      %699 = vmatprep.subr.mxu0 0.0
      %700 = vmatpush1.msra.mxu0 0.0
      %701 = vmatprep.subr.mxu0 0.0
      %702 = vmatpush1.msra.mxu0 0.0
      %703 = vmatprep.subr.mxu0 0.0
      %704 = vmatpush1.msra.mxu0 0.0
      %705 = vmatprep.subr.mxu0 0.0
      %706 = vmatpush1.msra.mxu0 0.0
      %707 = vmatprep.subr.mxu0 0.0
      %708 = vmatpush1.msra.mxu0 0.0
      %709 = vmatprep.subr.mxu0 0.0
      %710 = vmatpush1.msra.mxu0 0.0
      %711 = vmatprep.subr.mxu0 0.0
      %712 = vmatpush1.msra.mxu0 0.0
      %713 = vmatprep.subr.mxu0 0.0
      %714 = vmatpush1.msra.mxu0 0.0
      %715 = vmatprep.subr.mxu0 0.0
      %716 = vmatpush1.msra.mxu0 0.0
      %717 = vmatprep.subr.mxu0 0.0
      %718 = vmatpush1.msra.mxu0 0.0
      %719 = vmatprep.subr.mxu0 0.0
      %720 = vmatpush1.msra.mxu0 0.0
      %721 = vmatprep.subr.mxu0 0.0
      %722 = vmatpush1.msra.mxu0 0.0
      %723 = vmatprep.subr.mxu0 0.0
      %724 = vmatpush1.msra.mxu0 0.0
      %725 = vmatprep.subr.mxu0 0.0
      %726 = vmatpush1.msra.mxu0 0.0
      %727 = vmatprep.subr.mxu0 0.0
      %728 = vmatpush1.msra.mxu0 0.0
      %729 = vmatprep.subr.mxu0 0.0
      %730 = vmatpush1.msra.mxu0 0.0
      %731 = vmatprep.subr.mxu0 0.0
      %732 = vmatpush1.msra.mxu0 0.0
      %733 = vmatprep.subr.mxu0 0.0
      %734 = vmatpush1.msra.mxu0 0.0
      %735 = vmatprep.subr.mxu0 0.0
      %736 = vmatpush1.msra.mxu0 0.0
      %737 = vmatprep.mubr.f32.mxu0 0.0
      %738 = vmatmul.mubr.f32.gmra.mrb[0].mxu0 %v671
      %v739 = vpop.f32.mrb[0].mxu0
      %v740 = vadd.f32 %v667, %v739
      %v741 = vpop.f32.mrb[0].mxu0
      %742 = vdwg.mxu0
      %vm743 = vcmask 254976
      %744 = vst.msk [vmem:[%s231] sm:$0x3] %vm743, %v740
      %v746 = vsel %vm596, %v574, 0
      %748 = vmatprep.subr.mxu0 0.0
      %749 = vmatpush1.msra.mxu0 %v594
      %750 = vmatprep.subr.mxu0 0.0
      %751 = vmatpush1.msra.mxu0 %v595
      %752 = vmatprep.subr.mxu0 0.0
      %753 = vmatpush1.msra.mxu0 0.0
      %754 = vmatprep.subr.mxu0 0.0
      %755 = vmatpush1.msra.mxu0 0.0
      %756 = vmatprep.subr.mxu0 0.0
      %757 = vmatpush1.msra.mxu0 0.0
      %758 = vmatprep.subr.mxu0 0.0
      %759 = vmatpush1.msra.mxu0 0.0
      %760 = vmatprep.subr.mxu0 0.0
      %761 = vmatpush1.msra.mxu0 0.0
      %762 = vmatprep.subr.mxu0 0.0
      %763 = vmatpush1.msra.mxu0 0.0
      %764 = vmatprep.subr.mxu0 0.0
      %765 = vmatpush1.msra.mxu0 0.0
      %766 = vmatprep.subr.mxu0 0.0
      %767 = vmatpush1.msra.mxu0 0.0
      %768 = vmatprep.subr.mxu0 0.0
      %769 = vmatpush1.msra.mxu0 0.0
      %770 = vmatprep.subr.mxu0 0.0
      %771 = vmatpush1.msra.mxu0 0.0
      %772 = vmatprep.subr.mxu0 0.0
      %773 = vmatpush1.msra.mxu0 0.0
      %774 = vmatprep.subr.mxu0 0.0
      %775 = vmatpush1.msra.mxu0 0.0
      %776 = vmatprep.subr.mxu0 0.0
      %777 = vmatpush1.msra.mxu0 0.0
      %778 = vmatprep.subr.mxu0 0.0
      %779 = vmatpush1.msra.mxu0 0.0
      %780 = vmatprep.subr.mxu0 0.0
      %781 = vmatpush1.msra.mxu0 0.0
      %782 = vmatprep.subr.mxu0 0.0
      %783 = vmatpush1.msra.mxu0 0.0
      %784 = vmatprep.subr.mxu0 0.0
      %785 = vmatpush1.msra.mxu0 0.0
      %786 = vmatprep.subr.mxu0 0.0
      %787 = vmatpush1.msra.mxu0 0.0
      %788 = vmatprep.subr.mxu0 0.0
      %789 = vmatpush1.msra.mxu0 0.0
      %790 = vmatprep.subr.mxu0 0.0
      %791 = vmatpush1.msra.mxu0 0.0
      %792 = vmatprep.subr.mxu0 0.0
      %793 = vmatpush1.msra.mxu0 0.0
      %794 = vmatprep.subr.mxu0 0.0
      %795 = vmatpush1.msra.mxu0 0.0
      %796 = vmatprep.subr.mxu0 0.0
      %797 = vmatpush1.msra.mxu0 0.0
      %798 = vmatprep.subr.mxu0 0.0
      %799 = vmatpush1.msra.mxu0 0.0
      %800 = vmatprep.subr.mxu0 0.0
      %801 = vmatpush1.msra.mxu0 0.0
      %802 = vmatprep.subr.mxu0 0.0
      %803 = vmatpush1.msra.mxu0 0.0
      %804 = vmatprep.subr.mxu0 0.0
      %805 = vmatpush1.msra.mxu0 0.0
      %806 = vmatprep.subr.mxu0 0.0
      %807 = vmatpush1.msra.mxu0 0.0
      %808 = vmatprep.subr.mxu0 0.0
      %809 = vmatpush1.msra.mxu0 0.0
      %810 = vmatprep.subr.mxu0 0.0
      %811 = vmatpush1.msra.mxu0 0.0
      %812 = vmatprep.mubr.f32.mxu0 0.0
      %813 = vmatmul.mubr.f32.gmra.mrb[0].mxu0 %v746
      %v814 = vpop.f32.mrb[0].mxu0
      %v815 = vadd.f32 0.0, %v814
      %v816 = vpop.f32.mrb[0].mxu0
      %817 = vdwg.mxu0
      %v819 = vsel %vm596, %v489, 0
      %821 = vmatprep.subr.mxu0 0.0
      %822 = vmatpush1.msra.mxu0 %v586
      %823 = vmatprep.subr.mxu0 0.0
      %824 = vmatpush1.msra.mxu0 %v587
      %825 = vmatprep.subr.mxu0 0.0
      %826 = vmatpush1.msra.mxu0 0.0
      %827 = vmatprep.subr.mxu0 0.0
      %828 = vmatpush1.msra.mxu0 0.0
      %829 = vmatprep.subr.mxu0 0.0
      %830 = vmatpush1.msra.mxu0 0.0
      %831 = vmatprep.subr.mxu0 0.0
      %832 = vmatpush1.msra.mxu0 0.0
      %833 = vmatprep.subr.mxu0 0.0
      %834 = vmatpush1.msra.mxu0 0.0
      %835 = vmatprep.subr.mxu0 0.0
      %836 = vmatpush1.msra.mxu0 0.0
      %837 = vmatprep.subr.mxu0 0.0
      %838 = vmatpush1.msra.mxu0 0.0
      %839 = vmatprep.subr.mxu0 0.0
      %840 = vmatpush1.msra.mxu0 0.0
      %841 = vmatprep.subr.mxu0 0.0
      %842 = vmatpush1.msra.mxu0 0.0
      %843 = vmatprep.subr.mxu0 0.0
      %844 = vmatpush1.msra.mxu0 0.0
      %845 = vmatprep.subr.mxu0 0.0
      %846 = vmatpush1.msra.mxu0 0.0
      %847 = vmatprep.subr.mxu0 0.0
      %848 = vmatpush1.msra.mxu0 0.0
      %849 = vmatprep.subr.mxu0 0.0
      %850 = vmatpush1.msra.mxu0 0.0
      %851 = vmatprep.subr.mxu0 0.0
      %852 = vmatpush1.msra.mxu0 0.0
      %853 = vmatprep.subr.mxu0 0.0
      %854 = vmatpush1.msra.mxu0 0.0
      %855 = vmatprep.subr.mxu0 0.0
      %856 = vmatpush1.msra.mxu0 0.0
      %857 = vmatprep.subr.mxu0 0.0
      %858 = vmatpush1.msra.mxu0 0.0
      %859 = vmatprep.subr.mxu0 0.0
      %860 = vmatpush1.msra.mxu0 0.0
      %861 = vmatprep.subr.mxu0 0.0
      %862 = vmatpush1.msra.mxu0 0.0
      %863 = vmatprep.subr.mxu0 0.0
      %864 = vmatpush1.msra.mxu0 0.0
      %865 = vmatprep.subr.mxu0 0.0
      %866 = vmatpush1.msra.mxu0 0.0
      %867 = vmatprep.subr.mxu0 0.0
      %868 = vmatpush1.msra.mxu0 0.0
      %869 = vmatprep.subr.mxu0 0.0
      %870 = vmatpush1.msra.mxu0 0.0
      %871 = vmatprep.subr.mxu0 0.0
      %872 = vmatpush1.msra.mxu0 0.0
      %873 = vmatprep.subr.mxu0 0.0
      %874 = vmatpush1.msra.mxu0 0.0
      %875 = vmatprep.subr.mxu0 0.0
      %876 = vmatpush1.msra.mxu0 0.0
      %877 = vmatprep.subr.mxu0 0.0
      %878 = vmatpush1.msra.mxu0 0.0
      %879 = vmatprep.subr.mxu0 0.0
      %880 = vmatpush1.msra.mxu0 0.0
      %881 = vmatprep.subr.mxu0 0.0
      %882 = vmatpush1.msra.mxu0 0.0
      %883 = vmatprep.subr.mxu0 0.0
      %884 = vmatpush1.msra.mxu0 0.0
      %885 = vmatprep.mubr.f32.mxu0 0.0
      %886 = vmatmul.mubr.f32.gmra.mrb[0].mxu0 %v819
      %v887 = vpop.f32.mrb[0].mxu0
      %v888 = vadd.f32 %v815, %v887
      %v889 = vpop.f32.mrb[0].mxu0
      %890 = vdwg.mxu0
      %v893 = vunpack.c.l.s4 1983009808
      %v894 = vunpack.c.0.s8 %v893
      %v895 = vlaneseq
      %v896 = vshrl.u32 %v895, 7
      %v897 = vsub.s32 %v894, %v896
      %v898 = vrot.slane %v888, %v897
      %899 = vrot.lane.b32.xlu0 %v898, 32
      %v900 = vpop.permute.xlu0 %899
      %vm902 = vcmask 517376
      %903 = vst.msk [vmem:[%s231] sm:$0x3] %vm902, %v900
      %904 = vrot.lane.b32.xlu0 %v404, 112
      %v905 = vpop.permute.xlu0 %904
      %v906 = vsel %vm596, %v905, 0
      %908 = vmatprep.subr.mxu0 0.0
      %909 = vmatpush1.msra.mxu0 %v594
      %910 = vmatprep.subr.mxu0 0.0
      %911 = vmatpush1.msra.mxu0 %v595
      %912 = vmatprep.subr.mxu0 0.0
      %913 = vmatpush1.msra.mxu0 0.0
      %914 = vmatprep.subr.mxu0 0.0
      %915 = vmatpush1.msra.mxu0 0.0
      %916 = vmatprep.subr.mxu0 0.0
      %917 = vmatpush1.msra.mxu0 0.0
      %918 = vmatprep.subr.mxu0 0.0
      %919 = vmatpush1.msra.mxu0 0.0
      %920 = vmatprep.subr.mxu0 0.0
      %921 = vmatpush1.msra.mxu0 0.0
      %922 = vmatprep.subr.mxu0 0.0
      %923 = vmatpush1.msra.mxu0 0.0
      %924 = vmatprep.subr.mxu0 0.0
      %925 = vmatpush1.msra.mxu0 0.0
      %926 = vmatprep.subr.mxu0 0.0
      %927 = vmatpush1.msra.mxu0 0.0
      %928 = vmatprep.subr.mxu0 0.0
      %929 = vmatpush1.msra.mxu0 0.0
      %930 = vmatprep.subr.mxu0 0.0
      %931 = vmatpush1.msra.mxu0 0.0
      %932 = vmatprep.subr.mxu0 0.0
      %933 = vmatpush1.msra.mxu0 0.0
      %934 = vmatprep.subr.mxu0 0.0
      %935 = vmatpush1.msra.mxu0 0.0
      %936 = vmatprep.subr.mxu0 0.0
      %937 = vmatpush1.msra.mxu0 0.0
      %938 = vmatprep.subr.mxu0 0.0
      %939 = vmatpush1.msra.mxu0 0.0
      %940 = vmatprep.subr.mxu0 0.0
      %941 = vmatpush1.msra.mxu0 0.0
      %942 = vmatprep.subr.mxu0 0.0
      %943 = vmatpush1.msra.mxu0 0.0
      %944 = vmatprep.subr.mxu0 0.0
      %945 = vmatpush1.msra.mxu0 0.0
      %946 = vmatprep.subr.mxu0 0.0
      %947 = vmatpush1.msra.mxu0 0.0
      %948 = vmatprep.subr.mxu0 0.0
      %949 = vmatpush1.msra.mxu0 0.0
      %950 = vmatprep.subr.mxu0 0.0
      %951 = vmatpush1.msra.mxu0 0.0
      %952 = vmatprep.subr.mxu0 0.0
      %953 = vmatpush1.msra.mxu0 0.0
      %954 = vmatprep.subr.mxu0 0.0
      %955 = vmatpush1.msra.mxu0 0.0
      %956 = vmatprep.subr.mxu0 0.0
      %957 = vmatpush1.msra.mxu0 0.0
      %958 = vmatprep.subr.mxu0 0.0
      %959 = vmatpush1.msra.mxu0 0.0
      %960 = vmatprep.subr.mxu0 0.0
      %961 = vmatpush1.msra.mxu0 0.0
      %962 = vmatprep.subr.mxu0 0.0
      %963 = vmatpush1.msra.mxu0 0.0
      %964 = vmatprep.subr.mxu0 0.0
      %965 = vmatpush1.msra.mxu0 0.0
      %966 = vmatprep.subr.mxu0 0.0
      %967 = vmatpush1.msra.mxu0 0.0
      %968 = vmatprep.subr.mxu0 0.0
      %969 = vmatpush1.msra.mxu0 0.0
      %970 = vmatprep.subr.mxu0 0.0
      %971 = vmatpush1.msra.mxu0 0.0
      %972 = vmatprep.mubr.f32.mxu0 0.0
      %973 = vmatmul.mubr.f32.gmra.mrb[0].mxu0 %v906
      %v974 = vpop.f32.mrb[0].mxu0
      %v975 = vadd.f32 0.0, %v974
      %v976 = vpop.f32.mrb[0].mxu0
      %977 = vdwg.mxu0
      %978 = vrot.lane.b32.xlu0 %v319, 112
      %v979 = vpop.permute.xlu0 %978
      %v980 = vsel %vm596, %v979, 0
      %982 = vmatprep.subr.mxu0 0.0
      %983 = vmatpush1.msra.mxu0 %v586
      %984 = vmatprep.subr.mxu0 0.0
      %985 = vmatpush1.msra.mxu0 %v587
      %986 = vmatprep.subr.mxu0 0.0
      %987 = vmatpush1.msra.mxu0 0.0
      %988 = vmatprep.subr.mxu0 0.0
      %989 = vmatpush1.msra.mxu0 0.0
      %990 = vmatprep.subr.mxu0 0.0
      %991 = vmatpush1.msra.mxu0 0.0
      %992 = vmatprep.subr.mxu0 0.0
      %993 = vmatpush1.msra.mxu0 0.0
      %994 = vmatprep.subr.mxu0 0.0
      %995 = vmatpush1.msra.mxu0 0.0
      %996 = vmatprep.subr.mxu0 0.0
      %997 = vmatpush1.msra.mxu0 0.0
      %998 = vmatprep.subr.mxu0 0.0
      %999 = vmatpush1.msra.mxu0 0.0
      %1000 = vmatprep.subr.mxu0 0.0
      %1001 = vmatpush1.msra.mxu0 0.0
      %1002 = vmatprep.subr.mxu0 0.0
      %1003 = vmatpush1.msra.mxu0 0.0
      %1004 = vmatprep.subr.mxu0 0.0
      %1005 = vmatpush1.msra.mxu0 0.0
      %1006 = vmatprep.subr.mxu0 0.0
      %1007 = vmatpush1.msra.mxu0 0.0
      %1008 = vmatprep.subr.mxu0 0.0
      %1009 = vmatpush1.msra.mxu0 0.0
      %1010 = vmatprep.subr.mxu0 0.0
      %1011 = vmatpush1.msra.mxu0 0.0
      %1012 = vmatprep.subr.mxu0 0.0
      %1013 = vmatpush1.msra.mxu0 0.0
      %1014 = vmatprep.subr.mxu0 0.0
      %1015 = vmatpush1.msra.mxu0 0.0
      %1016 = vmatprep.subr.mxu0 0.0
      %1017 = vmatpush1.msra.mxu0 0.0
      %1018 = vmatprep.subr.mxu0 0.0
      %1019 = vmatpush1.msra.mxu0 0.0
      %1020 = vmatprep.subr.mxu0 0.0
      %1021 = vmatpush1.msra.mxu0 0.0
      %1022 = vmatprep.subr.mxu0 0.0
      %1023 = vmatpush1.msra.mxu0 0.0
      %1024 = vmatprep.subr.mxu0 0.0
      %1025 = vmatpush1.msra.mxu0 0.0
      %1026 = vmatprep.subr.mxu0 0.0
      %1027 = vmatpush1.msra.mxu0 0.0
      %1028 = vmatprep.subr.mxu0 0.0
      %1029 = vmatpush1.msra.mxu0 0.0
      %1030 = vmatprep.subr.mxu0 0.0
      %1031 = vmatpush1.msra.mxu0 0.0
      %1032 = vmatprep.subr.mxu0 0.0
      %1033 = vmatpush1.msra.mxu0 0.0
      %1034 = vmatprep.subr.mxu0 0.0
      %1035 = vmatpush1.msra.mxu0 0.0
      %1036 = vmatprep.subr.mxu0 0.0
      %1037 = vmatpush1.msra.mxu0 0.0
      %1038 = vmatprep.subr.mxu0 0.0
      %1039 = vmatpush1.msra.mxu0 0.0
      %1040 = vmatprep.subr.mxu0 0.0
      %1041 = vmatpush1.msra.mxu0 0.0
      %1042 = vmatprep.subr.mxu0 0.0
      %1043 = vmatpush1.msra.mxu0 0.0
      %1044 = vmatprep.subr.mxu0 0.0
      %1045 = vmatpush1.msra.mxu0 0.0
      %1046 = vmatprep.mubr.f32.mxu0 0.0
      %1047 = vmatmul.mubr.f32.gmra.mrb[0].mxu0 %v980
      %v1048 = vpop.f32.mrb[0].mxu0
      %v1049 = vadd.f32 %v975, %v1048
      %v1050 = vpop.f32.mrb[0].mxu0
      %1051 = vdwg.mxu0
      %v1054 = vunpack.c.l.s4 1983009808
      %v1055 = vunpack.c.0.s8 %v1054
      %v1056 = vlaneseq
      %v1057 = vshrl.u32 %v1056, 7
      %v1058 = vsub.s32 %v1055, %v1057
      %v1059 = vrot.slane %v1049, %v1058
      %1060 = vrot.lane.b32.xlu0 %v1059, 64
      %v1061 = vpop.permute.xlu0 %1060
      %vm1063 = vcmask 779776
      %1064 = vst.msk [vmem:[%s231] sm:$0x3] %vm1063, %v1061
      %1065 = vrot.lane.b32.xlu0 %v574, 112
      %v1066 = vpop.permute.xlu0 %1065
      %v1067 = vsel %vm596, %v1066, 0
      %1069 = vmatprep.subr.mxu0 0.0
      %1070 = vmatpush1.msra.mxu0 %v594
      %1071 = vmatprep.subr.mxu0 0.0
      %1072 = vmatpush1.msra.mxu0 %v595
      %1073 = vmatprep.subr.mxu0 0.0
      %1074 = vmatpush1.msra.mxu0 0.0
      %1075 = vmatprep.subr.mxu0 0.0
      %1076 = vmatpush1.msra.mxu0 0.0
      %1077 = vmatprep.subr.mxu0 0.0
      %1078 = vmatpush1.msra.mxu0 0.0
      %1079 = vmatprep.subr.mxu0 0.0
      %1080 = vmatpush1.msra.mxu0 0.0
      %1081 = vmatprep.subr.mxu0 0.0
      %1082 = vmatpush1.msra.mxu0 0.0
      %1083 = vmatprep.subr.mxu0 0.0
      %1084 = vmatpush1.msra.mxu0 0.0
      %1085 = vmatprep.subr.mxu0 0.0
      %1086 = vmatpush1.msra.mxu0 0.0
      %1087 = vmatprep.subr.mxu0 0.0
      %1088 = vmatpush1.msra.mxu0 0.0
      %1089 = vmatprep.subr.mxu0 0.0
      %1090 = vmatpush1.msra.mxu0 0.0
      %1091 = vmatprep.subr.mxu0 0.0
      %1092 = vmatpush1.msra.mxu0 0.0
      %1093 = vmatprep.subr.mxu0 0.0
      %1094 = vmatpush1.msra.mxu0 0.0
      %1095 = vmatprep.subr.mxu0 0.0
      %1096 = vmatpush1.msra.mxu0 0.0
      %1097 = vmatprep.subr.mxu0 0.0
      %1098 = vmatpush1.msra.mxu0 0.0
      %1099 = vmatprep.subr.mxu0 0.0
      %1100 = vmatpush1.msra.mxu0 0.0
      %1101 = vmatprep.subr.mxu0 0.0
      %1102 = vmatpush1.msra.mxu0 0.0
      %1103 = vmatprep.subr.mxu0 0.0
      %1104 = vmatpush1.msra.mxu0 0.0
      %1105 = vmatprep.subr.mxu0 0.0
      %1106 = vmatpush1.msra.mxu0 0.0
      %1107 = vmatprep.subr.mxu0 0.0
      %1108 = vmatpush1.msra.mxu0 0.0
      %1109 = vmatprep.subr.mxu0 0.0
      %1110 = vmatpush1.msra.mxu0 0.0
      %1111 = vmatprep.subr.mxu0 0.0
      %1112 = vmatpush1.msra.mxu0 0.0
      %1113 = vmatprep.subr.mxu0 0.0
      %1114 = vmatpush1.msra.mxu0 0.0
      %1115 = vmatprep.subr.mxu0 0.0
      %1116 = vmatpush1.msra.mxu0 0.0
      %1117 = vmatprep.subr.mxu0 0.0
      %1118 = vmatpush1.msra.mxu0 0.0
      %1119 = vmatprep.subr.mxu0 0.0
      %1120 = vmatpush1.msra.mxu0 0.0
      %1121 = vmatprep.subr.mxu0 0.0
      %1122 = vmatpush1.msra.mxu0 0.0
      %1123 = vmatprep.subr.mxu0 0.0
      %1124 = vmatpush1.msra.mxu0 0.0
      %1125 = vmatprep.subr.mxu0 0.0
      %1126 = vmatpush1.msra.mxu0 0.0
      %1127 = vmatprep.subr.mxu0 0.0
      %1128 = vmatpush1.msra.mxu0 0.0
      %1129 = vmatprep.subr.mxu0 0.0
      %1130 = vmatpush1.msra.mxu0 0.0
      %1131 = vmatprep.subr.mxu0 0.0
      %1132 = vmatpush1.msra.mxu0 0.0
      %1133 = vmatprep.mubr.f32.mxu0 0.0
      %1134 = vmatmul.mubr.f32.gmra.mrb[0].mxu0 %v1067
      %v1135 = vpop.f32.mrb[0].mxu0
      %v1136 = vadd.f32 0.0, %v1135
      %v1137 = vpop.f32.mrb[0].mxu0
      %1138 = vdwg.mxu0
      %1139 = vrot.lane.b32.xlu0 %v489, 112
      %v1140 = vpop.permute.xlu0 %1139
      %v1141 = vsel %vm596, %v1140, 0
      %1143 = vmatprep.subr.mxu0 0.0
      %1144 = vmatpush1.msra.mxu0 %v586
      %1145 = vmatprep.subr.mxu0 0.0
      %1146 = vmatpush1.msra.mxu0 %v587
      %1147 = vmatprep.subr.mxu0 0.0
      %1148 = vmatpush1.msra.mxu0 0.0
      %1149 = vmatprep.subr.mxu0 0.0
      %1150 = vmatpush1.msra.mxu0 0.0
      %1151 = vmatprep.subr.mxu0 0.0
      %1152 = vmatpush1.msra.mxu0 0.0
      %1153 = vmatprep.subr.mxu0 0.0
      %1154 = vmatpush1.msra.mxu0 0.0
      %1155 = vmatprep.subr.mxu0 0.0
      %1156 = vmatpush1.msra.mxu0 0.0
      %1157 = vmatprep.subr.mxu0 0.0
      %1158 = vmatpush1.msra.mxu0 0.0
      %1159 = vmatprep.subr.mxu0 0.0
      %1160 = vmatpush1.msra.mxu0 0.0
      %1161 = vmatprep.subr.mxu0 0.0
      %1162 = vmatpush1.msra.mxu0 0.0
      %1163 = vmatprep.subr.mxu0 0.0
      %1164 = vmatpush1.msra.mxu0 0.0
      %1165 = vmatprep.subr.mxu0 0.0
      %1166 = vmatpush1.msra.mxu0 0.0
      %1167 = vmatprep.subr.mxu0 0.0
      %1168 = vmatpush1.msra.mxu0 0.0
      %1169 = vmatprep.subr.mxu0 0.0
      %1170 = vmatpush1.msra.mxu0 0.0
      %1171 = vmatprep.subr.mxu0 0.0
      %1172 = vmatpush1.msra.mxu0 0.0
      %1173 = vmatprep.subr.mxu0 0.0
      %1174 = vmatpush1.msra.mxu0 0.0
      %1175 = vmatprep.subr.mxu0 0.0
      %1176 = vmatpush1.msra.mxu0 0.0
      %1177 = vmatprep.subr.mxu0 0.0
      %1178 = vmatpush1.msra.mxu0 0.0
      %1179 = vmatprep.subr.mxu0 0.0
      %1180 = vmatpush1.msra.mxu0 0.0
      %1181 = vmatprep.subr.mxu0 0.0
      %1182 = vmatpush1.msra.mxu0 0.0
      %1183 = vmatprep.subr.mxu0 0.0
      %1184 = vmatpush1.msra.mxu0 0.0
      %1185 = vmatprep.subr.mxu0 0.0
      %1186 = vmatpush1.msra.mxu0 0.0
      %1187 = vmatprep.subr.mxu0 0.0
      %1188 = vmatpush1.msra.mxu0 0.0
      %1189 = vmatprep.subr.mxu0 0.0
      %1190 = vmatpush1.msra.mxu0 0.0
      %1191 = vmatprep.subr.mxu0 0.0
      %1192 = vmatpush1.msra.mxu0 0.0
      %1193 = vmatprep.subr.mxu0 0.0
      %1194 = vmatpush1.msra.mxu0 0.0
      %1195 = vmatprep.subr.mxu0 0.0
      %1196 = vmatpush1.msra.mxu0 0.0
      %1197 = vmatprep.subr.mxu0 0.0
      %1198 = vmatpush1.msra.mxu0 0.0
      %1199 = vmatprep.subr.mxu0 0.0
      %1200 = vmatpush1.msra.mxu0 0.0
      %1201 = vmatprep.subr.mxu0 0.0
      %1202 = vmatpush1.msra.mxu0 0.0
      %1203 = vmatprep.subr.mxu0 0.0
      %1204 = vmatpush1.msra.mxu0 0.0
      %1205 = vmatprep.subr.mxu0 0.0
      %1206 = vmatpush1.msra.mxu0 0.0
      %1207 = vmatprep.mubr.f32.mxu0 0.0
      %1208 = vmatmul.mubr.f32.gmra.mrb[0].mxu0 %v1141
      %v1209 = vpop.f32.mrb[0].mxu0
      %v1210 = vadd.f32 %v1136, %v1209
      %v1211 = vpop.f32.mrb[0].mxu0
      %1212 = vdwg.mxu0
      %v1215 = vunpack.c.l.s4 1983009808
      %v1216 = vunpack.c.0.s8 %v1215
      %v1217 = vlaneseq
      %v1218 = vshrl.u32 %v1217, 7
      %v1219 = vsub.s32 %v1216, %v1218
      %v1220 = vrot.slane %v1210, %v1219
      %1221 = vrot.lane.b32.xlu0 %v1220, 96
      %v1222 = vpop.permute.xlu0 %1221
      %vm1224 = vcmask 1042176
      %1225 = vst.msk [vmem:[%s231] sm:$0x3] %vm1224, %v1222
      %1226 = vrot.lane.b32.xlu0 %v404, 96
      %v1227 = vpop.permute.xlu0 %1226
      %v1228 = vsel %vm596, %v1227, 0
      %1230 = vmatprep.subr.mxu0 0.0
      %1231 = vmatpush1.msra.mxu0 %v594
      %1232 = vmatprep.subr.mxu0 0.0
      %1233 = vmatpush1.msra.mxu0 %v595
      %1234 = vmatprep.subr.mxu0 0.0
      %1235 = vmatpush1.msra.mxu0 0.0
      %1236 = vmatprep.subr.mxu0 0.0
      %1237 = vmatpush1.msra.mxu0 0.0
      %1238 = vmatprep.subr.mxu0 0.0
      %1239 = vmatpush1.msra.mxu0 0.0
      %1240 = vmatprep.subr.mxu0 0.0
      %1241 = vmatpush1.msra.mxu0 0.0
      %1242 = vmatprep.subr.mxu0 0.0
      %1243 = vmatpush1.msra.mxu0 0.0
      %1244 = vmatprep.subr.mxu0 0.0
      %1245 = vmatpush1.msra.mxu0 0.0
      %1246 = vmatprep.subr.mxu0 0.0
      %1247 = vmatpush1.msra.mxu0 0.0
      %1248 = vmatprep.subr.mxu0 0.0
      %1249 = vmatpush1.msra.mxu0 0.0
      %1250 = vmatprep.subr.mxu0 0.0
      %1251 = vmatpush1.msra.mxu0 0.0
      %1252 = vmatprep.subr.mxu0 0.0
      %1253 = vmatpush1.msra.mxu0 0.0
      %1254 = vmatprep.subr.mxu0 0.0
      %1255 = vmatpush1.msra.mxu0 0.0
      %1256 = vmatprep.subr.mxu0 0.0
      %1257 = vmatpush1.msra.mxu0 0.0
      %1258 = vmatprep.subr.mxu0 0.0
      %1259 = vmatpush1.msra.mxu0 0.0
      %1260 = vmatprep.subr.mxu0 0.0
      %1261 = vmatpush1.msra.mxu0 0.0
      %1262 = vmatprep.subr.mxu0 0.0
      %1263 = vmatpush1.msra.mxu0 0.0
      %1264 = vmatprep.subr.mxu0 0.0
      %1265 = vmatpush1.msra.mxu0 0.0
      %1266 = vmatprep.subr.mxu0 0.0
      %1267 = vmatpush1.msra.mxu0 0.0
      %1268 = vmatprep.subr.mxu0 0.0
      %1269 = vmatpush1.msra.mxu0 0.0
      %1270 = vmatprep.subr.mxu0 0.0
      %1271 = vmatpush1.msra.mxu0 0.0
      %1272 = vmatprep.subr.mxu0 0.0
      %1273 = vmatpush1.msra.mxu0 0.0
      %1274 = vmatprep.subr.mxu0 0.0
      %1275 = vmatpush1.msra.mxu0 0.0
      %1276 = vmatprep.subr.mxu0 0.0
      %1277 = vmatpush1.msra.mxu0 0.0
      %1278 = vmatprep.subr.mxu0 0.0
      %1279 = vmatpush1.msra.mxu0 0.0
      %1280 = vmatprep.subr.mxu0 0.0
      %1281 = vmatpush1.msra.mxu0 0.0
      %1282 = vmatprep.subr.mxu0 0.0
      %1283 = vmatpush1.msra.mxu0 0.0
      %1284 = vmatprep.subr.mxu0 0.0
      %1285 = vmatpush1.msra.mxu0 0.0
      %1286 = vmatprep.subr.mxu0 0.0
      %1287 = vmatpush1.msra.mxu0 0.0
      %1288 = vmatprep.subr.mxu0 0.0
      %1289 = vmatpush1.msra.mxu0 0.0
      %1290 = vmatprep.subr.mxu0 0.0
      %1291 = vmatpush1.msra.mxu0 0.0
      %1292 = vmatprep.subr.mxu0 0.0
      %1293 = vmatpush1.msra.mxu0 0.0
      %1294 = vmatprep.mubr.f32.mxu0 0.0
      %1295 = vmatmul.mubr.f32.gmra.mrb[0].mxu0 %v1228
      %v1296 = vpop.f32.mrb[0].mxu0
      %v1297 = vadd.f32 0.0, %v1296
      %v1298 = vpop.f32.mrb[0].mxu0
      %1299 = vdwg.mxu0
      %1300 = vrot.lane.b32.xlu0 %v319, 96
      %v1301 = vpop.permute.xlu0 %1300
      %v1302 = vsel %vm596, %v1301, 0
      %1304 = vmatprep.subr.mxu0 0.0
      %1305 = vmatpush1.msra.mxu0 %v586
      %1306 = vmatprep.subr.mxu0 0.0
      %1307 = vmatpush1.msra.mxu0 %v587
      %1308 = vmatprep.subr.mxu0 0.0
      %1309 = vmatpush1.msra.mxu0 0.0
      %1310 = vmatprep.subr.mxu0 0.0
      %1311 = vmatpush1.msra.mxu0 0.0
      %1312 = vmatprep.subr.mxu0 0.0
      %1313 = vmatpush1.msra.mxu0 0.0
      %1314 = vmatprep.subr.mxu0 0.0
      %1315 = vmatpush1.msra.mxu0 0.0
      %1316 = vmatprep.subr.mxu0 0.0
      %1317 = vmatpush1.msra.mxu0 0.0
      %1318 = vmatprep.subr.mxu0 0.0
      %1319 = vmatpush1.msra.mxu0 0.0
      %1320 = vmatprep.subr.mxu0 0.0
      %1321 = vmatpush1.msra.mxu0 0.0
      %1322 = vmatprep.subr.mxu0 0.0
      %1323 = vmatpush1.msra.mxu0 0.0
      %1324 = vmatprep.subr.mxu0 0.0
      %1325 = vmatpush1.msra.mxu0 0.0
      %1326 = vmatprep.subr.mxu0 0.0
      %1327 = vmatpush1.msra.mxu0 0.0
      %1328 = vmatprep.subr.mxu0 0.0
      %1329 = vmatpush1.msra.mxu0 0.0
      %1330 = vmatprep.subr.mxu0 0.0
      %1331 = vmatpush1.msra.mxu0 0.0
      %1332 = vmatprep.subr.mxu0 0.0
      %1333 = vmatpush1.msra.mxu0 0.0
      %1334 = vmatprep.subr.mxu0 0.0
      %1335 = vmatpush1.msra.mxu0 0.0
      %1336 = vmatprep.subr.mxu0 0.0
      %1337 = vmatpush1.msra.mxu0 0.0
      %1338 = vmatprep.subr.mxu0 0.0
      %1339 = vmatpush1.msra.mxu0 0.0
      %1340 = vmatprep.subr.mxu0 0.0
      %1341 = vmatpush1.msra.mxu0 0.0
      %1342 = vmatprep.subr.mxu0 0.0
      %1343 = vmatpush1.msra.mxu0 0.0
      %1344 = vmatprep.subr.mxu0 0.0
      %1345 = vmatpush1.msra.mxu0 0.0
      %1346 = vmatprep.subr.mxu0 0.0
      %1347 = vmatpush1.msra.mxu0 0.0
      %1348 = vmatprep.subr.mxu0 0.0
      %1349 = vmatpush1.msra.mxu0 0.0
      %1350 = vmatprep.subr.mxu0 0.0
      %1351 = vmatpush1.msra.mxu0 0.0
      %1352 = vmatprep.subr.mxu0 0.0
      %1353 = vmatpush1.msra.mxu0 0.0
      %1354 = vmatprep.subr.mxu0 0.0
      %1355 = vmatpush1.msra.mxu0 0.0
      %1356 = vmatprep.subr.mxu0 0.0
      %1357 = vmatpush1.msra.mxu0 0.0
      %1358 = vmatprep.subr.mxu0 0.0
      %1359 = vmatpush1.msra.mxu0 0.0
      %1360 = vmatprep.subr.mxu0 0.0
      %1361 = vmatpush1.msra.mxu0 0.0
      %1362 = vmatprep.subr.mxu0 0.0
      %1363 = vmatpush1.msra.mxu0 0.0
      %1364 = vmatprep.subr.mxu0 0.0
      %1365 = vmatpush1.msra.mxu0 0.0
      %1366 = vmatprep.subr.mxu0 0.0
      %1367 = vmatpush1.msra.mxu0 0.0
      %1368 = vmatprep.mubr.f32.mxu0 0.0
      %1369 = vmatmul.mubr.f32.gmra.mrb[0].mxu0 %v1302
      %v1370 = vpop.f32.mrb[0].mxu0
      %v1371 = vadd.f32 %v1297, %v1370
      %v1372 = vpop.f32.mrb[0].mxu0
      %1373 = vdwg.mxu0
      %1374 = vst.msk [vmem:[%s231 + $0x2] sm:$0x3] %vm743, %v1371
      %1375 = vrot.lane.b32.xlu0 %v574, 96
      %v1376 = vpop.permute.xlu0 %1375
      %v1377 = vsel %vm596, %v1376, 0
      %1379 = vmatprep.subr.mxu0 0.0
      %1380 = vmatpush1.msra.mxu0 %v594
      %1381 = vmatprep.subr.mxu0 0.0
      %1382 = vmatpush1.msra.mxu0 %v595
      %1383 = vmatprep.subr.mxu0 0.0
      %1384 = vmatpush1.msra.mxu0 0.0
      %1385 = vmatprep.subr.mxu0 0.0
      %1386 = vmatpush1.msra.mxu0 0.0
      %1387 = vmatprep.subr.mxu0 0.0
      %1388 = vmatpush1.msra.mxu0 0.0
      %1389 = vmatprep.subr.mxu0 0.0
      %1390 = vmatpush1.msra.mxu0 0.0
      %1391 = vmatprep.subr.mxu0 0.0
      %1392 = vmatpush1.msra.mxu0 0.0
      %1393 = vmatprep.subr.mxu0 0.0
      %1394 = vmatpush1.msra.mxu0 0.0
      %1395 = vmatprep.subr.mxu0 0.0
      %1396 = vmatpush1.msra.mxu0 0.0
      %1397 = vmatprep.subr.mxu0 0.0
      %1398 = vmatpush1.msra.mxu0 0.0
      %1399 = vmatprep.subr.mxu0 0.0
      %1400 = vmatpush1.msra.mxu0 0.0
      %1401 = vmatprep.subr.mxu0 0.0
      %1402 = vmatpush1.msra.mxu0 0.0
      %1403 = vmatprep.subr.mxu0 0.0
      %1404 = vmatpush1.msra.mxu0 0.0
      %1405 = vmatprep.subr.mxu0 0.0
      %1406 = vmatpush1.msra.mxu0 0.0
      %1407 = vmatprep.subr.mxu0 0.0
      %1408 = vmatpush1.msra.mxu0 0.0
      %1409 = vmatprep.subr.mxu0 0.0
      %1410 = vmatpush1.msra.mxu0 0.0
      %1411 = vmatprep.subr.mxu0 0.0
      %1412 = vmatpush1.msra.mxu0 0.0
      %1413 = vmatprep.subr.mxu0 0.0
      %1414 = vmatpush1.msra.mxu0 0.0
      %1415 = vmatprep.subr.mxu0 0.0
      %1416 = vmatpush1.msra.mxu0 0.0
      %1417 = vmatprep.subr.mxu0 0.0
      %1418 = vmatpush1.msra.mxu0 0.0
      %1419 = vmatprep.subr.mxu0 0.0
      %1420 = vmatpush1.msra.mxu0 0.0
      %1421 = vmatprep.subr.mxu0 0.0
      %1422 = vmatpush1.msra.mxu0 0.0
      %1423 = vmatprep.subr.mxu0 0.0
      %1424 = vmatpush1.msra.mxu0 0.0
      %1425 = vmatprep.subr.mxu0 0.0
      %1426 = vmatpush1.msra.mxu0 0.0
      %1427 = vmatprep.subr.mxu0 0.0
      %1428 = vmatpush1.msra.mxu0 0.0
      %1429 = vmatprep.subr.mxu0 0.0
      %1430 = vmatpush1.msra.mxu0 0.0
      %1431 = vmatprep.subr.mxu0 0.0
      %1432 = vmatpush1.msra.mxu0 0.0
      %1433 = vmatprep.subr.mxu0 0.0
      %1434 = vmatpush1.msra.mxu0 0.0
      %1435 = vmatprep.subr.mxu0 0.0
      %1436 = vmatpush1.msra.mxu0 0.0
      %1437 = vmatprep.subr.mxu0 0.0
      %1438 = vmatpush1.msra.mxu0 0.0
      %1439 = vmatprep.subr.mxu0 0.0
      %1440 = vmatpush1.msra.mxu0 0.0
      %1441 = vmatprep.subr.mxu0 0.0
      %1442 = vmatpush1.msra.mxu0 0.0
      %1443 = vmatprep.mubr.f32.mxu0 0.0
      %1444 = vmatmul.mubr.f32.gmra.mrb[0].mxu0 %v1377
      %v1445 = vpop.f32.mrb[0].mxu0
      %v1446 = vadd.f32 0.0, %v1445
      %v1447 = vpop.f32.mrb[0].mxu0
      %1448 = vdwg.mxu0
      %1449 = vrot.lane.b32.xlu0 %v489, 96
      %v1450 = vpop.permute.xlu0 %1449
      %v1451 = vsel %vm596, %v1450, 0
      %1453 = vmatprep.subr.mxu0 0.0
      %1454 = vmatpush1.msra.mxu0 %v586
      %1455 = vmatprep.subr.mxu0 0.0
      %1456 = vmatpush1.msra.mxu0 %v587
      %1457 = vmatprep.subr.mxu0 0.0
      %1458 = vmatpush1.msra.mxu0 0.0
      %1459 = vmatprep.subr.mxu0 0.0
      %1460 = vmatpush1.msra.mxu0 0.0
      %1461 = vmatprep.subr.mxu0 0.0
      %1462 = vmatpush1.msra.mxu0 0.0
      %1463 = vmatprep.subr.mxu0 0.0
      %1464 = vmatpush1.msra.mxu0 0.0
      %1465 = vmatprep.subr.mxu0 0.0
      %1466 = vmatpush1.msra.mxu0 0.0
      %1467 = vmatprep.subr.mxu0 0.0
      %1468 = vmatpush1.msra.mxu0 0.0
      %1469 = vmatprep.subr.mxu0 0.0
      %1470 = vmatpush1.msra.mxu0 0.0
      %1471 = vmatprep.subr.mxu0 0.0
      %1472 = vmatpush1.msra.mxu0 0.0
      %1473 = vmatprep.subr.mxu0 0.0
      %1474 = vmatpush1.msra.mxu0 0.0
      %1475 = vmatprep.subr.mxu0 0.0
      %1476 = vmatpush1.msra.mxu0 0.0
      %1477 = vmatprep.subr.mxu0 0.0
      %1478 = vmatpush1.msra.mxu0 0.0
      %1479 = vmatprep.subr.mxu0 0.0
      %1480 = vmatpush1.msra.mxu0 0.0
      %1481 = vmatprep.subr.mxu0 0.0
      %1482 = vmatpush1.msra.mxu0 0.0
      %1483 = vmatprep.subr.mxu0 0.0
      %1484 = vmatpush1.msra.mxu0 0.0
      %1485 = vmatprep.subr.mxu0 0.0
      %1486 = vmatpush1.msra.mxu0 0.0
      %1487 = vmatprep.subr.mxu0 0.0
      %1488 = vmatpush1.msra.mxu0 0.0
      %1489 = vmatprep.subr.mxu0 0.0
      %1490 = vmatpush1.msra.mxu0 0.0
      %1491 = vmatprep.subr.mxu0 0.0
      %1492 = vmatpush1.msra.mxu0 0.0
      %1493 = vmatprep.subr.mxu0 0.0
      %1494 = vmatpush1.msra.mxu0 0.0
      %1495 = vmatprep.subr.mxu0 0.0
      %1496 = vmatpush1.msra.mxu0 0.0
      %1497 = vmatprep.subr.mxu0 0.0
      %1498 = vmatpush1.msra.mxu0 0.0
      %1499 = vmatprep.subr.mxu0 0.0
      %1500 = vmatpush1.msra.mxu0 0.0
      %1501 = vmatprep.subr.mxu0 0.0
      %1502 = vmatpush1.msra.mxu0 0.0
      %1503 = vmatprep.subr.mxu0 0.0
      %1504 = vmatpush1.msra.mxu0 0.0
      %1505 = vmatprep.subr.mxu0 0.0
      %1506 = vmatpush1.msra.mxu0 0.0
      %1507 = vmatprep.subr.mxu0 0.0
      %1508 = vmatpush1.msra.mxu0 0.0
      %1509 = vmatprep.subr.mxu0 0.0
      %1510 = vmatpush1.msra.mxu0 0.0
      %1511 = vmatprep.subr.mxu0 0.0
      %1512 = vmatpush1.msra.mxu0 0.0
      %1513 = vmatprep.subr.mxu0 0.0
      %1514 = vmatpush1.msra.mxu0 0.0
      %1515 = vmatprep.subr.mxu0 0.0
      %1516 = vmatpush1.msra.mxu0 0.0
      %1517 = vmatprep.mubr.f32.mxu0 0.0
      %1518 = vmatmul.mubr.f32.gmra.mrb[0].mxu0 %v1451
      %v1519 = vpop.f32.mrb[0].mxu0
      %v1520 = vadd.f32 %v1446, %v1519
      %v1521 = vpop.f32.mrb[0].mxu0
      %1522 = vdwg.mxu0
      %v1525 = vunpack.c.l.s4 1983009808
      %v1526 = vunpack.c.0.s8 %v1525
      %v1527 = vlaneseq
      %v1528 = vshrl.u32 %v1527, 7
      %v1529 = vsub.s32 %v1526, %v1528
      %v1530 = vrot.slane %v1520, %v1529
      %1531 = vrot.lane.b32.xlu0 %v1530, 32
      %v1532 = vpop.permute.xlu0 %1531
      %1534 = vst.msk [vmem:[%s231 + $0x2] sm:$0x3] %vm902, %v1532
      %1535 = vrot.lane.b32.xlu0 %v404, 80
      %v1536 = vpop.permute.xlu0 %1535
      %v1537 = vsel %vm596, %v1536, 0
      %1539 = vmatprep.subr.mxu0 0.0
      %1540 = vmatpush1.msra.mxu0 %v594
      %1541 = vmatprep.subr.mxu0 0.0
      %1542 = vmatpush1.msra.mxu0 %v595
      %1543 = vmatprep.subr.mxu0 0.0
      %1544 = vmatpush1.msra.mxu0 0.0
      %1545 = vmatprep.subr.mxu0 0.0
      %1546 = vmatpush1.msra.mxu0 0.0
      %1547 = vmatprep.subr.mxu0 0.0
      %1548 = vmatpush1.msra.mxu0 0.0
      %1549 = vmatprep.subr.mxu0 0.0
      %1550 = vmatpush1.msra.mxu0 0.0
      %1551 = vmatprep.subr.mxu0 0.0
      %1552 = vmatpush1.msra.mxu0 0.0
      %1553 = vmatprep.subr.mxu0 0.0
      %1554 = vmatpush1.msra.mxu0 0.0
      %1555 = vmatprep.subr.mxu0 0.0
      %1556 = vmatpush1.msra.mxu0 0.0
      %1557 = vmatprep.subr.mxu0 0.0
      %1558 = vmatpush1.msra.mxu0 0.0
      %1559 = vmatprep.subr.mxu0 0.0
      %1560 = vmatpush1.msra.mxu0 0.0
      %1561 = vmatprep.subr.mxu0 0.0
      %1562 = vmatpush1.msra.mxu0 0.0
      %1563 = vmatprep.subr.mxu0 0.0
      %1564 = vmatpush1.msra.mxu0 0.0
      %1565 = vmatprep.subr.mxu0 0.0
      %1566 = vmatpush1.msra.mxu0 0.0
      %1567 = vmatprep.subr.mxu0 0.0
      %1568 = vmatpush1.msra.mxu0 0.0
      %1569 = vmatprep.subr.mxu0 0.0
      %1570 = vmatpush1.msra.mxu0 0.0
      %1571 = vmatprep.subr.mxu0 0.0
      %1572 = vmatpush1.msra.mxu0 0.0
      %1573 = vmatprep.subr.mxu0 0.0
      %1574 = vmatpush1.msra.mxu0 0.0
      %1575 = vmatprep.subr.mxu0 0.0
      %1576 = vmatpush1.msra.mxu0 0.0
      %1577 = vmatprep.subr.mxu0 0.0
      %1578 = vmatpush1.msra.mxu0 0.0
      %1579 = vmatprep.subr.mxu0 0.0
      %1580 = vmatpush1.msra.mxu0 0.0
      %1581 = vmatprep.subr.mxu0 0.0
      %1582 = vmatpush1.msra.mxu0 0.0
      %1583 = vmatprep.subr.mxu0 0.0
      %1584 = vmatpush1.msra.mxu0 0.0
      %1585 = vmatprep.subr.mxu0 0.0
      %1586 = vmatpush1.msra.mxu0 0.0
      %1587 = vmatprep.subr.mxu0 0.0
      %1588 = vmatpush1.msra.mxu0 0.0
      %1589 = vmatprep.subr.mxu0 0.0
      %1590 = vmatpush1.msra.mxu0 0.0
      %1591 = vmatprep.subr.mxu0 0.0
      %1592 = vmatpush1.msra.mxu0 0.0
      %1593 = vmatprep.subr.mxu0 0.0
      %1594 = vmatpush1.msra.mxu0 0.0
      %1595 = vmatprep.subr.mxu0 0.0
      %1596 = vmatpush1.msra.mxu0 0.0
      %1597 = vmatprep.subr.mxu0 0.0
      %1598 = vmatpush1.msra.mxu0 0.0
      %1599 = vmatprep.subr.mxu0 0.0
      %1600 = vmatpush1.msra.mxu0 0.0
      %1601 = vmatprep.subr.mxu0 0.0
      %1602 = vmatpush1.msra.mxu0 0.0
      %1603 = vmatprep.mubr.f32.mxu0 0.0
      %1604 = vmatmul.mubr.f32.gmra.mrb[0].mxu0 %v1537
      %v1605 = vpop.f32.mrb[0].mxu0
      %v1606 = vadd.f32 0.0, %v1605
      %v1607 = vpop.f32.mrb[0].mxu0
      %1608 = vdwg.mxu0
      %1609 = vrot.lane.b32.xlu0 %v319, 80
      %v1610 = vpop.permute.xlu0 %1609
      %v1611 = vsel %vm596, %v1610, 0
      %1613 = vmatprep.subr.mxu0 0.0
      %1614 = vmatpush1.msra.mxu0 %v586
      %1615 = vmatprep.subr.mxu0 0.0
      %1616 = vmatpush1.msra.mxu0 %v587
      %1617 = vmatprep.subr.mxu0 0.0
      %1618 = vmatpush1.msra.mxu0 0.0
      %1619 = vmatprep.subr.mxu0 0.0
      %1620 = vmatpush1.msra.mxu0 0.0
      %1621 = vmatprep.subr.mxu0 0.0
      %1622 = vmatpush1.msra.mxu0 0.0
      %1623 = vmatprep.subr.mxu0 0.0
      %1624 = vmatpush1.msra.mxu0 0.0
      %1625 = vmatprep.subr.mxu0 0.0
      %1626 = vmatpush1.msra.mxu0 0.0
      %1627 = vmatprep.subr.mxu0 0.0
      %1628 = vmatpush1.msra.mxu0 0.0
      %1629 = vmatprep.subr.mxu0 0.0
      %1630 = vmatpush1.msra.mxu0 0.0
      %1631 = vmatprep.subr.mxu0 0.0
      %1632 = vmatpush1.msra.mxu0 0.0
      %1633 = vmatprep.subr.mxu0 0.0
      %1634 = vmatpush1.msra.mxu0 0.0
      %1635 = vmatprep.subr.mxu0 0.0
      %1636 = vmatpush1.msra.mxu0 0.0
      %1637 = vmatprep.subr.mxu0 0.0
      %1638 = vmatpush1.msra.mxu0 0.0
      %1639 = vmatprep.subr.mxu0 0.0
      %1640 = vmatpush1.msra.mxu0 0.0
      %1641 = vmatprep.subr.mxu0 0.0
      %1642 = vmatpush1.msra.mxu0 0.0
      %1643 = vmatprep.subr.mxu0 0.0
      %1644 = vmatpush1.msra.mxu0 0.0
      %1645 = vmatprep.subr.mxu0 0.0
      %1646 = vmatpush1.msra.mxu0 0.0
      %1647 = vmatprep.subr.mxu0 0.0
      %1648 = vmatpush1.msra.mxu0 0.0
      %1649 = vmatprep.subr.mxu0 0.0
      %1650 = vmatpush1.msra.mxu0 0.0
      %1651 = vmatprep.subr.mxu0 0.0
      %1652 = vmatpush1.msra.mxu0 0.0
      %1653 = vmatprep.subr.mxu0 0.0
      %1654 = vmatpush1.msra.mxu0 0.0
      %1655 = vmatprep.subr.mxu0 0.0
      %1656 = vmatpush1.msra.mxu0 0.0
      %1657 = vmatprep.subr.mxu0 0.0
      %1658 = vmatpush1.msra.mxu0 0.0
      %1659 = vmatprep.subr.mxu0 0.0
      %1660 = vmatpush1.msra.mxu0 0.0
      %1661 = vmatprep.subr.mxu0 0.0
      %1662 = vmatpush1.msra.mxu0 0.0
      %1663 = vmatprep.subr.mxu0 0.0
      %1664 = vmatpush1.msra.mxu0 0.0
      %1665 = vmatprep.subr.mxu0 0.0
      %1666 = vmatpush1.msra.mxu0 0.0
      %1667 = vmatprep.subr.mxu0 0.0
      %1668 = vmatpush1.msra.mxu0 0.0
      %1669 = vmatprep.subr.mxu0 0.0
      %1670 = vmatpush1.msra.mxu0 0.0
      %1671 = vmatprep.subr.mxu0 0.0
      %1672 = vmatpush1.msra.mxu0 0.0
      %1673 = vmatprep.subr.mxu0 0.0
      %1674 = vmatpush1.msra.mxu0 0.0
      %1675 = vmatprep.subr.mxu0 0.0
      %1676 = vmatpush1.msra.mxu0 0.0
      %1677 = vmatprep.mubr.f32.mxu0 0.0
      %1678 = vmatmul.mubr.f32.gmra.mrb[0].mxu0 %v1611
      %v1679 = vpop.f32.mrb[0].mxu0
      %v1680 = vadd.f32 %v1606, %v1679
      %v1681 = vpop.f32.mrb[0].mxu0
      %1682 = vdwg.mxu0
      %v1685 = vunpack.c.l.s4 1983009808
      %v1686 = vunpack.c.0.s8 %v1685
      %v1687 = vlaneseq
      %v1688 = vshrl.u32 %v1687, 7
      %v1689 = vsub.s32 %v1686, %v1688
      %v1690 = vrot.slane %v1680, %v1689
      %1691 = vrot.lane.b32.xlu0 %v1690, 64
      %v1692 = vpop.permute.xlu0 %1691
      %1694 = vst.msk [vmem:[%s231 + $0x2] sm:$0x3] %vm1063, %v1692
      %1695 = vrot.lane.b32.xlu0 %v574, 80
      %v1696 = vpop.permute.xlu0 %1695
      %v1697 = vsel %vm596, %v1696, 0
      %1699 = vmatprep.subr.mxu0 0.0
      %1700 = vmatpush1.msra.mxu0 %v594
      %1701 = vmatprep.subr.mxu0 0.0
      %1702 = vmatpush1.msra.mxu0 %v595
      %1703 = vmatprep.subr.mxu0 0.0
      %1704 = vmatpush1.msra.mxu0 0.0
      %1705 = vmatprep.subr.mxu0 0.0
      %1706 = vmatpush1.msra.mxu0 0.0
      %1707 = vmatprep.subr.mxu0 0.0
      %1708 = vmatpush1.msra.mxu0 0.0
      %1709 = vmatprep.subr.mxu0 0.0
      %1710 = vmatpush1.msra.mxu0 0.0
      %1711 = vmatprep.subr.mxu0 0.0
      %1712 = vmatpush1.msra.mxu0 0.0
      %1713 = vmatprep.subr.mxu0 0.0
      %1714 = vmatpush1.msra.mxu0 0.0
      %1715 = vmatprep.subr.mxu0 0.0
      %1716 = vmatpush1.msra.mxu0 0.0
      %1717 = vmatprep.subr.mxu0 0.0
      %1718 = vmatpush1.msra.mxu0 0.0
      %1719 = vmatprep.subr.mxu0 0.0
      %1720 = vmatpush1.msra.mxu0 0.0
      %1721 = vmatprep.subr.mxu0 0.0
      %1722 = vmatpush1.msra.mxu0 0.0
      %1723 = vmatprep.subr.mxu0 0.0
      %1724 = vmatpush1.msra.mxu0 0.0
      %1725 = vmatprep.subr.mxu0 0.0
      %1726 = vmatpush1.msra.mxu0 0.0
      %1727 = vmatprep.subr.mxu0 0.0
      %1728 = vmatpush1.msra.mxu0 0.0
      %1729 = vmatprep.subr.mxu0 0.0
      %1730 = vmatpush1.msra.mxu0 0.0
      %1731 = vmatprep.subr.mxu0 0.0
      %1732 = vmatpush1.msra.mxu0 0.0
      %1733 = vmatprep.subr.mxu0 0.0
      %1734 = vmatpush1.msra.mxu0 0.0
      %1735 = vmatprep.subr.mxu0 0.0
      %1736 = vmatpush1.msra.mxu0 0.0
      %1737 = vmatprep.subr.mxu0 0.0
      %1738 = vmatpush1.msra.mxu0 0.0
      %1739 = vmatprep.subr.mxu0 0.0
      %1740 = vmatpush1.msra.mxu0 0.0
      %1741 = vmatprep.subr.mxu0 0.0
      %1742 = vmatpush1.msra.mxu0 0.0
      %1743 = vmatprep.subr.mxu0 0.0
      %1744 = vmatpush1.msra.mxu0 0.0
      %1745 = vmatprep.subr.mxu0 0.0
      %1746 = vmatpush1.msra.mxu0 0.0
      %1747 = vmatprep.subr.mxu0 0.0
      %1748 = vmatpush1.msra.mxu0 0.0
      %1749 = vmatprep.subr.mxu0 0.0
      %1750 = vmatpush1.msra.mxu0 0.0
      %1751 = vmatprep.subr.mxu0 0.0
      %1752 = vmatpush1.msra.mxu0 0.0
      %1753 = vmatprep.subr.mxu0 0.0
      %1754 = vmatpush1.msra.mxu0 0.0
      %1755 = vmatprep.subr.mxu0 0.0
      %1756 = vmatpush1.msra.mxu0 0.0
      %1757 = vmatprep.subr.mxu0 0.0
      %1758 = vmatpush1.msra.mxu0 0.0
      %1759 = vmatprep.subr.mxu0 0.0
      %1760 = vmatpush1.msra.mxu0 0.0
      %1761 = vmatprep.subr.mxu0 0.0
      %1762 = vmatpush1.msra.mxu0 0.0
      %1763 = vmatprep.mubr.f32.mxu0 0.0
      %1764 = vmatmul.mubr.f32.gmra.mrb[0].mxu0 %v1697
      %v1765 = vpop.f32.mrb[0].mxu0
      %v1766 = vadd.f32 0.0, %v1765
      %v1767 = vpop.f32.mrb[0].mxu0
      %1768 = vdwg.mxu0
      %1769 = vrot.lane.b32.xlu0 %v489, 80
      %v1770 = vpop.permute.xlu0 %1769
      %v1771 = vsel %vm596, %v1770, 0
      %1773 = vmatprep.subr.mxu0 0.0
      %1774 = vmatpush1.msra.mxu0 %v586
      %1775 = vmatprep.subr.mxu0 0.0
      %1776 = vmatpush1.msra.mxu0 %v587
      %1777 = vmatprep.subr.mxu0 0.0
      %1778 = vmatpush1.msra.mxu0 0.0
      %1779 = vmatprep.subr.mxu0 0.0
      %1780 = vmatpush1.msra.mxu0 0.0
      %1781 = vmatprep.subr.mxu0 0.0
      %1782 = vmatpush1.msra.mxu0 0.0
      %1783 = vmatprep.subr.mxu0 0.0
      %1784 = vmatpush1.msra.mxu0 0.0
      %1785 = vmatprep.subr.mxu0 0.0
      %1786 = vmatpush1.msra.mxu0 0.0
      %1787 = vmatprep.subr.mxu0 0.0
      %1788 = vmatpush1.msra.mxu0 0.0
      %1789 = vmatprep.subr.mxu0 0.0
      %1790 = vmatpush1.msra.mxu0 0.0
      %1791 = vmatprep.subr.mxu0 0.0
      %1792 = vmatpush1.msra.mxu0 0.0
      %1793 = vmatprep.subr.mxu0 0.0
      %1794 = vmatpush1.msra.mxu0 0.0
      %1795 = vmatprep.subr.mxu0 0.0
      %1796 = vmatpush1.msra.mxu0 0.0
      %1797 = vmatprep.subr.mxu0 0.0
      %1798 = vmatpush1.msra.mxu0 0.0
      %1799 = vmatprep.subr.mxu0 0.0
      %1800 = vmatpush1.msra.mxu0 0.0
      %1801 = vmatprep.subr.mxu0 0.0
      %1802 = vmatpush1.msra.mxu0 0.0
      %1803 = vmatprep.subr.mxu0 0.0
      %1804 = vmatpush1.msra.mxu0 0.0
      %1805 = vmatprep.subr.mxu0 0.0
      %1806 = vmatpush1.msra.mxu0 0.0
      %1807 = vmatprep.subr.mxu0 0.0
      %1808 = vmatpush1.msra.mxu0 0.0
      %1809 = vmatprep.subr.mxu0 0.0
      %1810 = vmatpush1.msra.mxu0 0.0
      %1811 = vmatprep.subr.mxu0 0.0
      %1812 = vmatpush1.msra.mxu0 0.0
      %1813 = vmatprep.subr.mxu0 0.0
      %1814 = vmatpush1.msra.mxu0 0.0
      %1815 = vmatprep.subr.mxu0 0.0
      %1816 = vmatpush1.msra.mxu0 0.0
      %1817 = vmatprep.subr.mxu0 0.0
      %1818 = vmatpush1.msra.mxu0 0.0
      %1819 = vmatprep.subr.mxu0 0.0
      %1820 = vmatpush1.msra.mxu0 0.0
      %1821 = vmatprep.subr.mxu0 0.0
      %1822 = vmatpush1.msra.mxu0 0.0
      %1823 = vmatprep.subr.mxu0 0.0
      %1824 = vmatpush1.msra.mxu0 0.0
      %1825 = vmatprep.subr.mxu0 0.0
      %1826 = vmatpush1.msra.mxu0 0.0
      %1827 = vmatprep.subr.mxu0 0.0
      %1828 = vmatpush1.msra.mxu0 0.0
      %1829 = vmatprep.subr.mxu0 0.0
      %1830 = vmatpush1.msra.mxu0 0.0
      %1831 = vmatprep.subr.mxu0 0.0
      %1832 = vmatpush1.msra.mxu0 0.0
      %1833 = vmatprep.subr.mxu0 0.0
      %1834 = vmatpush1.msra.mxu0 0.0
      %1835 = vmatprep.subr.mxu0 0.0
      %1836 = vmatpush1.msra.mxu0 0.0
      %1837 = vmatprep.mubr.f32.mxu0 0.0
      %1838 = vmatmul.mubr.f32.gmra.mrb[0].mxu0 %v1771
      %v1839 = vpop.f32.mrb[0].mxu0
      %v1840 = vadd.f32 %v1766, %v1839
      %v1841 = vpop.f32.mrb[0].mxu0
      %1842 = vdwg.mxu0
      %v1845 = vunpack.c.l.s4 1983009808
      %v1846 = vunpack.c.0.s8 %v1845
      %v1847 = vlaneseq
      %v1848 = vshrl.u32 %v1847, 7
      %v1849 = vsub.s32 %v1846, %v1848
      %v1850 = vrot.slane %v1840, %v1849
      %1851 = vrot.lane.b32.xlu0 %v1850, 96
      %v1852 = vpop.permute.xlu0 %1851
      %1854 = vst.msk [vmem:[%s231 + $0x2] sm:$0x3] %vm1224, %v1852
      %1855 = vrot.lane.b32.xlu0 %v404, 64
      %v1856 = vpop.permute.xlu0 %1855
      %v1857 = vsel %vm596, %v1856, 0
      %1859 = vmatprep.subr.mxu0 0.0
      %1860 = vmatpush1.msra.mxu0 %v594
      %1861 = vmatprep.subr.mxu0 0.0
      %1862 = vmatpush1.msra.mxu0 %v595
      %1863 = vmatprep.subr.mxu0 0.0
      %1864 = vmatpush1.msra.mxu0 0.0
      %1865 = vmatprep.subr.mxu0 0.0
      %1866 = vmatpush1.msra.mxu0 0.0
      %1867 = vmatprep.subr.mxu0 0.0
      %1868 = vmatpush1.msra.mxu0 0.0
      %1869 = vmatprep.subr.mxu0 0.0
      %1870 = vmatpush1.msra.mxu0 0.0
      %1871 = vmatprep.subr.mxu0 0.0
      %1872 = vmatpush1.msra.mxu0 0.0
      %1873 = vmatprep.subr.mxu0 0.0
      %1874 = vmatpush1.msra.mxu0 0.0
      %1875 = vmatprep.subr.mxu0 0.0
      %1876 = vmatpush1.msra.mxu0 0.0
      %1877 = vmatprep.subr.mxu0 0.0
      %1878 = vmatpush1.msra.mxu0 0.0
      %1879 = vmatprep.subr.mxu0 0.0
      %1880 = vmatpush1.msra.mxu0 0.0
      %1881 = vmatprep.subr.mxu0 0.0
      %1882 = vmatpush1.msra.mxu0 0.0
      %1883 = vmatprep.subr.mxu0 0.0
      %1884 = vmatpush1.msra.mxu0 0.0
      %1885 = vmatprep.subr.mxu0 0.0
      %1886 = vmatpush1.msra.mxu0 0.0
      %1887 = vmatprep.subr.mxu0 0.0
      %1888 = vmatpush1.msra.mxu0 0.0
      %1889 = vmatprep.subr.mxu0 0.0
      %1890 = vmatpush1.msra.mxu0 0.0
      %1891 = vmatprep.subr.mxu0 0.0
      %1892 = vmatpush1.msra.mxu0 0.0
      %1893 = vmatprep.subr.mxu0 0.0
      %1894 = vmatpush1.msra.mxu0 0.0
      %1895 = vmatprep.subr.mxu0 0.0
      %1896 = vmatpush1.msra.mxu0 0.0
      %1897 = vmatprep.subr.mxu0 0.0
      %1898 = vmatpush1.msra.mxu0 0.0
      %1899 = vmatprep.subr.mxu0 0.0
      %1900 = vmatpush1.msra.mxu0 0.0
      %1901 = vmatprep.subr.mxu0 0.0
      %1902 = vmatpush1.msra.mxu0 0.0
      %1903 = vmatprep.subr.mxu0 0.0
      %1904 = vmatpush1.msra.mxu0 0.0
      %1905 = vmatprep.subr.mxu0 0.0
      %1906 = vmatpush1.msra.mxu0 0.0
      %1907 = vmatprep.subr.mxu0 0.0
      %1908 = vmatpush1.msra.mxu0 0.0
      %1909 = vmatprep.subr.mxu0 0.0
      %1910 = vmatpush1.msra.mxu0 0.0
      %1911 = vmatprep.subr.mxu0 0.0
      %1912 = vmatpush1.msra.mxu0 0.0
      %1913 = vmatprep.subr.mxu0 0.0
      %1914 = vmatpush1.msra.mxu0 0.0
      %1915 = vmatprep.subr.mxu0 0.0
      %1916 = vmatpush1.msra.mxu0 0.0
      %1917 = vmatprep.subr.mxu0 0.0
      %1918 = vmatpush1.msra.mxu0 0.0
      %1919 = vmatprep.subr.mxu0 0.0
      %1920 = vmatpush1.msra.mxu0 0.0
      %1921 = vmatprep.subr.mxu0 0.0
      %1922 = vmatpush1.msra.mxu0 0.0
      %1923 = vmatprep.mubr.f32.mxu0 0.0
      %1924 = vmatmul.mubr.f32.gmra.mrb[0].mxu0 %v1857
      %v1925 = vpop.f32.mrb[0].mxu0
      %v1926 = vadd.f32 0.0, %v1925
      %v1927 = vpop.f32.mrb[0].mxu0
      %1928 = vdwg.mxu0
      %1929 = vrot.lane.b32.xlu0 %v319, 64
      %v1930 = vpop.permute.xlu0 %1929
      %v1931 = vsel %vm596, %v1930, 0
      %1933 = vmatprep.subr.mxu0 0.0
      %1934 = vmatpush1.msra.mxu0 %v586
      %1935 = vmatprep.subr.mxu0 0.0
      %1936 = vmatpush1.msra.mxu0 %v587
      %1937 = vmatprep.subr.mxu0 0.0
      %1938 = vmatpush1.msra.mxu0 0.0
      %1939 = vmatprep.subr.mxu0 0.0
      %1940 = vmatpush1.msra.mxu0 0.0
      %1941 = vmatprep.subr.mxu0 0.0
      %1942 = vmatpush1.msra.mxu0 0.0
      %1943 = vmatprep.subr.mxu0 0.0
      %1944 = vmatpush1.msra.mxu0 0.0
      %1945 = vmatprep.subr.mxu0 0.0
      %1946 = vmatpush1.msra.mxu0 0.0
      %1947 = vmatprep.subr.mxu0 0.0
      %1948 = vmatpush1.msra.mxu0 0.0
      %1949 = vmatprep.subr.mxu0 0.0
      %1950 = vmatpush1.msra.mxu0 0.0
      %1951 = vmatprep.subr.mxu0 0.0
      %1952 = vmatpush1.msra.mxu0 0.0
      %1953 = vmatprep.subr.mxu0 0.0
      %1954 = vmatpush1.msra.mxu0 0.0
      %1955 = vmatprep.subr.mxu0 0.0
      %1956 = vmatpush1.msra.mxu0 0.0
      %1957 = vmatprep.subr.mxu0 0.0
      %1958 = vmatpush1.msra.mxu0 0.0
      %1959 = vmatprep.subr.mxu0 0.0
      %1960 = vmatpush1.msra.mxu0 0.0
      %1961 = vmatprep.subr.mxu0 0.0
      %1962 = vmatpush1.msra.mxu0 0.0
      %1963 = vmatprep.subr.mxu0 0.0
      %1964 = vmatpush1.msra.mxu0 0.0
      %1965 = vmatprep.subr.mxu0 0.0
      %1966 = vmatpush1.msra.mxu0 0.0
      %1967 = vmatprep.subr.mxu0 0.0
      %1968 = vmatpush1.msra.mxu0 0.0
      %1969 = vmatprep.subr.mxu0 0.0
      %1970 = vmatpush1.msra.mxu0 0.0
      %1971 = vmatprep.subr.mxu0 0.0
      %1972 = vmatpush1.msra.mxu0 0.0
      %1973 = vmatprep.subr.mxu0 0.0
      %1974 = vmatpush1.msra.mxu0 0.0
      %1975 = vmatprep.subr.mxu0 0.0
      %1976 = vmatpush1.msra.mxu0 0.0
      %1977 = vmatprep.subr.mxu0 0.0
      %1978 = vmatpush1.msra.mxu0 0.0
      %1979 = vmatprep.subr.mxu0 0.0
      %1980 = vmatpush1.msra.mxu0 0.0
      %1981 = vmatprep.subr.mxu0 0.0
      %1982 = vmatpush1.msra.mxu0 0.0
      %1983 = vmatprep.subr.mxu0 0.0
      %1984 = vmatpush1.msra.mxu0 0.0
      %1985 = vmatprep.subr.mxu0 0.0
      %1986 = vmatpush1.msra.mxu0 0.0
      %1987 = vmatprep.subr.mxu0 0.0
      %1988 = vmatpush1.msra.mxu0 0.0
      %1989 = vmatprep.subr.mxu0 0.0
      %1990 = vmatpush1.msra.mxu0 0.0
      %1991 = vmatprep.subr.mxu0 0.0
      %1992 = vmatpush1.msra.mxu0 0.0
      %1993 = vmatprep.subr.mxu0 0.0
      %1994 = vmatpush1.msra.mxu0 0.0
      %1995 = vmatprep.subr.mxu0 0.0
      %1996 = vmatpush1.msra.mxu0 0.0
      %1997 = vmatprep.mubr.f32.mxu0 0.0
      %1998 = vmatmul.mubr.f32.gmra.mrb[0].mxu0 %v1931
      %v1999 = vpop.f32.mrb[0].mxu0
      %v2000 = vadd.f32 %v1926, %v1999
      %v2001 = vpop.f32.mrb[0].mxu0
      %2002 = vdwg.mxu0
      %2003 = vst.msk [vmem:[%s231 + $0x4] sm:$0x3] %vm743, %v2000
      %2004 = vrot.lane.b32.xlu0 %v574, 64
      %v2005 = vpop.permute.xlu0 %2004
      %v2006 = vsel %vm596, %v2005, 0
      %2008 = vmatprep.subr.mxu0 0.0
      %2009 = vmatpush1.msra.mxu0 %v594
      %2010 = vmatprep.subr.mxu0 0.0
      %2011 = vmatpush1.msra.mxu0 %v595
      %2012 = vmatprep.subr.mxu0 0.0
      %2013 = vmatpush1.msra.mxu0 0.0
      %2014 = vmatprep.subr.mxu0 0.0
      %2015 = vmatpush1.msra.mxu0 0.0
      %2016 = vmatprep.subr.mxu0 0.0
      %2017 = vmatpush1.msra.mxu0 0.0
      %2018 = vmatprep.subr.mxu0 0.0
      %2019 = vmatpush1.msra.mxu0 0.0
      %2020 = vmatprep.subr.mxu0 0.0
      %2021 = vmatpush1.msra.mxu0 0.0
      %2022 = vmatprep.subr.mxu0 0.0
      %2023 = vmatpush1.msra.mxu0 0.0
      %2024 = vmatprep.subr.mxu0 0.0
      %2025 = vmatpush1.msra.mxu0 0.0
      %2026 = vmatprep.subr.mxu0 0.0
      %2027 = vmatpush1.msra.mxu0 0.0
      %2028 = vmatprep.subr.mxu0 0.0
      %2029 = vmatpush1.msra.mxu0 0.0
      %2030 = vmatprep.subr.mxu0 0.0
      %2031 = vmatpush1.msra.mxu0 0.0
      %2032 = vmatprep.subr.mxu0 0.0
      %2033 = vmatpush1.msra.mxu0 0.0
      %2034 = vmatprep.subr.mxu0 0.0
      %2035 = vmatpush1.msra.mxu0 0.0
      %2036 = vmatprep.subr.mxu0 0.0
      %2037 = vmatpush1.msra.mxu0 0.0
      %2038 = vmatprep.subr.mxu0 0.0
      %2039 = vmatpush1.msra.mxu0 0.0
      %2040 = vmatprep.subr.mxu0 0.0
      %2041 = vmatpush1.msra.mxu0 0.0
      %2042 = vmatprep.subr.mxu0 0.0
      %2043 = vmatpush1.msra.mxu0 0.0
      %2044 = vmatprep.subr.mxu0 0.0
      %2045 = vmatpush1.msra.mxu0 0.0
      %2046 = vmatprep.subr.mxu0 0.0
      %2047 = vmatpush1.msra.mxu0 0.0
      %2048 = vmatprep.subr.mxu0 0.0
      %2049 = vmatpush1.msra.mxu0 0.0
      %2050 = vmatprep.subr.mxu0 0.0
      %2051 = vmatpush1.msra.mxu0 0.0
      %2052 = vmatprep.subr.mxu0 0.0
      %2053 = vmatpush1.msra.mxu0 0.0
      %2054 = vmatprep.subr.mxu0 0.0
      %2055 = vmatpush1.msra.mxu0 0.0
      %2056 = vmatprep.subr.mxu0 0.0
      %2057 = vmatpush1.msra.mxu0 0.0
      %2058 = vmatprep.subr.mxu0 0.0
      %2059 = vmatpush1.msra.mxu0 0.0
      %2060 = vmatprep.subr.mxu0 0.0
      %2061 = vmatpush1.msra.mxu0 0.0
      %2062 = vmatprep.subr.mxu0 0.0
      %2063 = vmatpush1.msra.mxu0 0.0
      %2064 = vmatprep.subr.mxu0 0.0
      %2065 = vmatpush1.msra.mxu0 0.0
      %2066 = vmatprep.subr.mxu0 0.0
      %2067 = vmatpush1.msra.mxu0 0.0
      %2068 = vmatprep.subr.mxu0 0.0
      %2069 = vmatpush1.msra.mxu0 0.0
      %2070 = vmatprep.subr.mxu0 0.0
      %2071 = vmatpush1.msra.mxu0 0.0
      %2072 = vmatprep.mubr.f32.mxu0 0.0
      %2073 = vmatmul.mubr.f32.gmra.mrb[0].mxu0 %v2006
      %v2074 = vpop.f32.mrb[0].mxu0
      %v2075 = vadd.f32 0.0, %v2074
      %v2076 = vpop.f32.mrb[0].mxu0
      %2077 = vdwg.mxu0
      %2078 = vrot.lane.b32.xlu0 %v489, 64
      %v2079 = vpop.permute.xlu0 %2078
      %v2080 = vsel %vm596, %v2079, 0
      %2082 = vmatprep.subr.mxu0 0.0
      %2083 = vmatpush1.msra.mxu0 %v586
      %2084 = vmatprep.subr.mxu0 0.0
      %2085 = vmatpush1.msra.mxu0 %v587
      %2086 = vmatprep.subr.mxu0 0.0
      %2087 = vmatpush1.msra.mxu0 0.0
      %2088 = vmatprep.subr.mxu0 0.0
      %2089 = vmatpush1.msra.mxu0 0.0
      %2090 = vmatprep.subr.mxu0 0.0
      %2091 = vmatpush1.msra.mxu0 0.0
      %2092 = vmatprep.subr.mxu0 0.0
      %2093 = vmatpush1.msra.mxu0 0.0
      %2094 = vmatprep.subr.mxu0 0.0
      %2095 = vmatpush1.msra.mxu0 0.0
      %2096 = vmatprep.subr.mxu0 0.0
      %2097 = vmatpush1.msra.mxu0 0.0
      %2098 = vmatprep.subr.mxu0 0.0
      %2099 = vmatpush1.msra.mxu0 0.0
      %2100 = vmatprep.subr.mxu0 0.0
      %2101 = vmatpush1.msra.mxu0 0.0
      %2102 = vmatprep.subr.mxu0 0.0
      %2103 = vmatpush1.msra.mxu0 0.0
      %2104 = vmatprep.subr.mxu0 0.0
      %2105 = vmatpush1.msra.mxu0 0.0
      %2106 = vmatprep.subr.mxu0 0.0
      %2107 = vmatpush1.msra.mxu0 0.0
      %2108 = vmatprep.subr.mxu0 0.0
      %2109 = vmatpush1.msra.mxu0 0.0
      %2110 = vmatprep.subr.mxu0 0.0
      %2111 = vmatpush1.msra.mxu0 0.0
      %2112 = vmatprep.subr.mxu0 0.0
      %2113 = vmatpush1.msra.mxu0 0.0
      %2114 = vmatprep.subr.mxu0 0.0
      %2115 = vmatpush1.msra.mxu0 0.0
      %2116 = vmatprep.subr.mxu0 0.0
      %2117 = vmatpush1.msra.mxu0 0.0
      %2118 = vmatprep.subr.mxu0 0.0
      %2119 = vmatpush1.msra.mxu0 0.0
      %2120 = vmatprep.subr.mxu0 0.0
      %2121 = vmatpush1.msra.mxu0 0.0
      %2122 = vmatprep.subr.mxu0 0.0
      %2123 = vmatpush1.msra.mxu0 0.0
      %2124 = vmatprep.subr.mxu0 0.0
      %2125 = vmatpush1.msra.mxu0 0.0
      %2126 = vmatprep.subr.mxu0 0.0
      %2127 = vmatpush1.msra.mxu0 0.0
      %2128 = vmatprep.subr.mxu0 0.0
      %2129 = vmatpush1.msra.mxu0 0.0
      %2130 = vmatprep.subr.mxu0 0.0
      %2131 = vmatpush1.msra.mxu0 0.0
      %2132 = vmatprep.subr.mxu0 0.0
      %2133 = vmatpush1.msra.mxu0 0.0
      %2134 = vmatprep.subr.mxu0 0.0
      %2135 = vmatpush1.msra.mxu0 0.0
      %2136 = vmatprep.subr.mxu0 0.0
      %2137 = vmatpush1.msra.mxu0 0.0
      %2138 = vmatprep.subr.mxu0 0.0
      %2139 = vmatpush1.msra.mxu0 0.0
      %2140 = vmatprep.subr.mxu0 0.0
      %2141 = vmatpush1.msra.mxu0 0.0
      %2142 = vmatprep.subr.mxu0 0.0
      %2143 = vmatpush1.msra.mxu0 0.0
      %2144 = vmatprep.subr.mxu0 0.0
      %2145 = vmatpush1.msra.mxu0 0.0
      %2146 = vmatprep.mubr.f32.mxu0 0.0
      %2147 = vmatmul.mubr.f32.gmra.mrb[0].mxu0 %v2080
      %v2148 = vpop.f32.mrb[0].mxu0
      %v2149 = vadd.f32 %v2075, %v2148
      %v2150 = vpop.f32.mrb[0].mxu0
      %2151 = vdwg.mxu0
      %v2154 = vunpack.c.l.s4 1983009808
      %v2155 = vunpack.c.0.s8 %v2154
      %v2156 = vlaneseq
      %v2157 = vshrl.u32 %v2156, 7
      %v2158 = vsub.s32 %v2155, %v2157
      %v2159 = vrot.slane %v2149, %v2158
      %2160 = vrot.lane.b32.xlu0 %v2159, 32
      %v2161 = vpop.permute.xlu0 %2160
      %2163 = vst.msk [vmem:[%s231 + $0x4] sm:$0x3] %vm902, %v2161
      %2164 = vrot.lane.b32.xlu0 %v404, 48
      %v2165 = vpop.permute.xlu0 %2164
      %v2166 = vsel %vm596, %v2165, 0
      %2168 = vmatprep.subr.mxu0 0.0
      %2169 = vmatpush1.msra.mxu0 %v594
      %2170 = vmatprep.subr.mxu0 0.0
      %2171 = vmatpush1.msra.mxu0 %v595
      %2172 = vmatprep.subr.mxu0 0.0
      %2173 = vmatpush1.msra.mxu0 0.0
      %2174 = vmatprep.subr.mxu0 0.0
      %2175 = vmatpush1.msra.mxu0 0.0
      %2176 = vmatprep.subr.mxu0 0.0
      %2177 = vmatpush1.msra.mxu0 0.0
      %2178 = vmatprep.subr.mxu0 0.0
      %2179 = vmatpush1.msra.mxu0 0.0
      %2180 = vmatprep.subr.mxu0 0.0
      %2181 = vmatpush1.msra.mxu0 0.0
      %2182 = vmatprep.subr.mxu0 0.0
      %2183 = vmatpush1.msra.mxu0 0.0
      %2184 = vmatprep.subr.mxu0 0.0
      %2185 = vmatpush1.msra.mxu0 0.0
      %2186 = vmatprep.subr.mxu0 0.0
      %2187 = vmatpush1.msra.mxu0 0.0
      %2188 = vmatprep.subr.mxu0 0.0
      %2189 = vmatpush1.msra.mxu0 0.0
      %2190 = vmatprep.subr.mxu0 0.0
      %2191 = vmatpush1.msra.mxu0 0.0
      %2192 = vmatprep.subr.mxu0 0.0
      %2193 = vmatpush1.msra.mxu0 0.0
      %2194 = vmatprep.subr.mxu0 0.0
      %2195 = vmatpush1.msra.mxu0 0.0
      %2196 = vmatprep.subr.mxu0 0.0
      %2197 = vmatpush1.msra.mxu0 0.0
      %2198 = vmatprep.subr.mxu0 0.0
      %2199 = vmatpush1.msra.mxu0 0.0
      %2200 = vmatprep.subr.mxu0 0.0
      %2201 = vmatpush1.msra.mxu0 0.0
      %2202 = vmatprep.subr.mxu0 0.0
      %2203 = vmatpush1.msra.mxu0 0.0
      %2204 = vmatprep.subr.mxu0 0.0
      %2205 = vmatpush1.msra.mxu0 0.0
      %2206 = vmatprep.subr.mxu0 0.0
      %2207 = vmatpush1.msra.mxu0 0.0
      %2208 = vmatprep.subr.mxu0 0.0
      %2209 = vmatpush1.msra.mxu0 0.0
      %2210 = vmatprep.subr.mxu0 0.0
      %2211 = vmatpush1.msra.mxu0 0.0
      %2212 = vmatprep.subr.mxu0 0.0
      %2213 = vmatpush1.msra.mxu0 0.0
      %2214 = vmatprep.subr.mxu0 0.0
      %2215 = vmatpush1.msra.mxu0 0.0
      %2216 = vmatprep.subr.mxu0 0.0
      %2217 = vmatpush1.msra.mxu0 0.0
      %2218 = vmatprep.subr.mxu0 0.0
      %2219 = vmatpush1.msra.mxu0 0.0
      %2220 = vmatprep.subr.mxu0 0.0
      %2221 = vmatpush1.msra.mxu0 0.0
      %2222 = vmatprep.subr.mxu0 0.0
      %2223 = vmatpush1.msra.mxu0 0.0
      %2224 = vmatprep.subr.mxu0 0.0
      %2225 = vmatpush1.msra.mxu0 0.0
      %2226 = vmatprep.subr.mxu0 0.0
      %2227 = vmatpush1.msra.mxu0 0.0
      %2228 = vmatprep.subr.mxu0 0.0
      %2229 = vmatpush1.msra.mxu0 0.0
      %2230 = vmatprep.subr.mxu0 0.0
      %2231 = vmatpush1.msra.mxu0 0.0
      %2232 = vmatprep.mubr.f32.mxu0 0.0
      %2233 = vmatmul.mubr.f32.gmra.mrb[0].mxu0 %v2166
      %v2234 = vpop.f32.mrb[0].mxu0
      %v2235 = vadd.f32 0.0, %v2234
      %v2236 = vpop.f32.mrb[0].mxu0
      %2237 = vdwg.mxu0
      %2238 = vrot.lane.b32.xlu0 %v319, 48
      %v2239 = vpop.permute.xlu0 %2238
      %v2240 = vsel %vm596, %v2239, 0
      %2242 = vmatprep.subr.mxu0 0.0
      %2243 = vmatpush1.msra.mxu0 %v586
      %2244 = vmatprep.subr.mxu0 0.0
      %2245 = vmatpush1.msra.mxu0 %v587
      %2246 = vmatprep.subr.mxu0 0.0
      %2247 = vmatpush1.msra.mxu0 0.0
      %2248 = vmatprep.subr.mxu0 0.0
      %2249 = vmatpush1.msra.mxu0 0.0
      %2250 = vmatprep.subr.mxu0 0.0
      %2251 = vmatpush1.msra.mxu0 0.0
      %2252 = vmatprep.subr.mxu0 0.0
      %2253 = vmatpush1.msra.mxu0 0.0
      %2254 = vmatprep.subr.mxu0 0.0
      %2255 = vmatpush1.msra.mxu0 0.0
      %2256 = vmatprep.subr.mxu0 0.0
      %2257 = vmatpush1.msra.mxu0 0.0
      %2258 = vmatprep.subr.mxu0 0.0
      %2259 = vmatpush1.msra.mxu0 0.0
      %2260 = vmatprep.subr.mxu0 0.0
      %2261 = vmatpush1.msra.mxu0 0.0
      %2262 = vmatprep.subr.mxu0 0.0
      %2263 = vmatpush1.msra.mxu0 0.0
      %2264 = vmatprep.subr.mxu0 0.0
      %2265 = vmatpush1.msra.mxu0 0.0
      %2266 = vmatprep.subr.mxu0 0.0
      %2267 = vmatpush1.msra.mxu0 0.0
      %2268 = vmatprep.subr.mxu0 0.0
      %2269 = vmatpush1.msra.mxu0 0.0
      %2270 = vmatprep.subr.mxu0 0.0
      %2271 = vmatpush1.msra.mxu0 0.0
      %2272 = vmatprep.subr.mxu0 0.0
      %2273 = vmatpush1.msra.mxu0 0.0
      %2274 = vmatprep.subr.mxu0 0.0
      %2275 = vmatpush1.msra.mxu0 0.0
      %2276 = vmatprep.subr.mxu0 0.0
      %2277 = vmatpush1.msra.mxu0 0.0
      %2278 = vmatprep.subr.mxu0 0.0
      %2279 = vmatpush1.msra.mxu0 0.0
      %2280 = vmatprep.subr.mxu0 0.0
      %2281 = vmatpush1.msra.mxu0 0.0
      %2282 = vmatprep.subr.mxu0 0.0
      %2283 = vmatpush1.msra.mxu0 0.0
      %2284 = vmatprep.subr.mxu0 0.0
      %2285 = vmatpush1.msra.mxu0 0.0
      %2286 = vmatprep.subr.mxu0 0.0
      %2287 = vmatpush1.msra.mxu0 0.0
      %2288 = vmatprep.subr.mxu0 0.0
      %2289 = vmatpush1.msra.mxu0 0.0
      %2290 = vmatprep.subr.mxu0 0.0
      %2291 = vmatpush1.msra.mxu0 0.0
      %2292 = vmatprep.subr.mxu0 0.0
      %2293 = vmatpush1.msra.mxu0 0.0
      %2294 = vmatprep.subr.mxu0 0.0
      %2295 = vmatpush1.msra.mxu0 0.0
      %2296 = vmatprep.subr.mxu0 0.0
      %2297 = vmatpush1.msra.mxu0 0.0
      %2298 = vmatprep.subr.mxu0 0.0
      %2299 = vmatpush1.msra.mxu0 0.0
      %2300 = vmatprep.subr.mxu0 0.0
      %2301 = vmatpush1.msra.mxu0 0.0
      %2302 = vmatprep.subr.mxu0 0.0
      %2303 = vmatpush1.msra.mxu0 0.0
      %2304 = vmatprep.subr.mxu0 0.0
      %2305 = vmatpush1.msra.mxu0 0.0
      %2306 = vmatprep.mubr.f32.mxu0 0.0
      %2307 = vmatmul.mubr.f32.gmra.mrb[0].mxu0 %v2240
      %v2308 = vpop.f32.mrb[0].mxu0
      %v2309 = vadd.f32 %v2235, %v2308
      %v2310 = vpop.f32.mrb[0].mxu0
      %2311 = vdwg.mxu0
      %v2314 = vunpack.c.l.s4 1983009808
      %v2315 = vunpack.c.0.s8 %v2314
      %v2316 = vlaneseq
      %v2317 = vshrl.u32 %v2316, 7
      %v2318 = vsub.s32 %v2315, %v2317
      %v2319 = vrot.slane %v2309, %v2318
      %2320 = vrot.lane.b32.xlu0 %v2319, 64
      %v2321 = vpop.permute.xlu0 %2320
      %2323 = vst.msk [vmem:[%s231 + $0x4] sm:$0x3] %vm1063, %v2321
      %2324 = vrot.lane.b32.xlu0 %v574, 48
      %v2325 = vpop.permute.xlu0 %2324
      %v2326 = vsel %vm596, %v2325, 0
      %2328 = vmatprep.subr.mxu0 0.0
      %2329 = vmatpush1.msra.mxu0 %v594
      %2330 = vmatprep.subr.mxu0 0.0
      %2331 = vmatpush1.msra.mxu0 %v595
      %2332 = vmatprep.subr.mxu0 0.0
      %2333 = vmatpush1.msra.mxu0 0.0
      %2334 = vmatprep.subr.mxu0 0.0
      %2335 = vmatpush1.msra.mxu0 0.0
      %2336 = vmatprep.subr.mxu0 0.0
      %2337 = vmatpush1.msra.mxu0 0.0
      %2338 = vmatprep.subr.mxu0 0.0
      %2339 = vmatpush1.msra.mxu0 0.0
      %2340 = vmatprep.subr.mxu0 0.0
      %2341 = vmatpush1.msra.mxu0 0.0
      %2342 = vmatprep.subr.mxu0 0.0
      %2343 = vmatpush1.msra.mxu0 0.0
      %2344 = vmatprep.subr.mxu0 0.0
      %2345 = vmatpush1.msra.mxu0 0.0
      %2346 = vmatprep.subr.mxu0 0.0
      %2347 = vmatpush1.msra.mxu0 0.0
      %2348 = vmatprep.subr.mxu0 0.0
      %2349 = vmatpush1.msra.mxu0 0.0
      %2350 = vmatprep.subr.mxu0 0.0
      %2351 = vmatpush1.msra.mxu0 0.0
      %2352 = vmatprep.subr.mxu0 0.0
      %2353 = vmatpush1.msra.mxu0 0.0
      %2354 = vmatprep.subr.mxu0 0.0
      %2355 = vmatpush1.msra.mxu0 0.0
      %2356 = vmatprep.subr.mxu0 0.0
      %2357 = vmatpush1.msra.mxu0 0.0
      %2358 = vmatprep.subr.mxu0 0.0
      %2359 = vmatpush1.msra.mxu0 0.0
      %2360 = vmatprep.subr.mxu0 0.0
      %2361 = vmatpush1.msra.mxu0 0.0
      %2362 = vmatprep.subr.mxu0 0.0
      %2363 = vmatpush1.msra.mxu0 0.0
      %2364 = vmatprep.subr.mxu0 0.0
      %2365 = vmatpush1.msra.mxu0 0.0
      %2366 = vmatprep.subr.mxu0 0.0
      %2367 = vmatpush1.msra.mxu0 0.0
      %2368 = vmatprep.subr.mxu0 0.0
      %2369 = vmatpush1.msra.mxu0 0.0
      %2370 = vmatprep.subr.mxu0 0.0
      %2371 = vmatpush1.msra.mxu0 0.0
      %2372 = vmatprep.subr.mxu0 0.0
      %2373 = vmatpush1.msra.mxu0 0.0
      %2374 = vmatprep.subr.mxu0 0.0
      %2375 = vmatpush1.msra.mxu0 0.0
      %2376 = vmatprep.subr.mxu0 0.0
      %2377 = vmatpush1.msra.mxu0 0.0
      %2378 = vmatprep.subr.mxu0 0.0
      %2379 = vmatpush1.msra.mxu0 0.0
      %2380 = vmatprep.subr.mxu0 0.0
      %2381 = vmatpush1.msra.mxu0 0.0
      %2382 = vmatprep.subr.mxu0 0.0
      %2383 = vmatpush1.msra.mxu0 0.0
      %2384 = vmatprep.subr.mxu0 0.0
      %2385 = vmatpush1.msra.mxu0 0.0
      %2386 = vmatprep.subr.mxu0 0.0
      %2387 = vmatpush1.msra.mxu0 0.0
      %2388 = vmatprep.subr.mxu0 0.0
      %2389 = vmatpush1.msra.mxu0 0.0
      %2390 = vmatprep.subr.mxu0 0.0
      %2391 = vmatpush1.msra.mxu0 0.0
      %2392 = vmatprep.mubr.f32.mxu0 0.0
      %2393 = vmatmul.mubr.f32.gmra.mrb[0].mxu0 %v2326
      %v2394 = vpop.f32.mrb[0].mxu0
      %v2395 = vadd.f32 0.0, %v2394
      %v2396 = vpop.f32.mrb[0].mxu0
      %2397 = vdwg.mxu0
      %2398 = vrot.lane.b32.xlu0 %v489, 48
      %v2399 = vpop.permute.xlu0 %2398
      %v2400 = vsel %vm596, %v2399, 0
      %2402 = vmatprep.subr.mxu0 0.0
      %2403 = vmatpush1.msra.mxu0 %v586
      %2404 = vmatprep.subr.mxu0 0.0
      %2405 = vmatpush1.msra.mxu0 %v587
      %2406 = vmatprep.subr.mxu0 0.0
      %2407 = vmatpush1.msra.mxu0 0.0
      %2408 = vmatprep.subr.mxu0 0.0
      %2409 = vmatpush1.msra.mxu0 0.0
      %2410 = vmatprep.subr.mxu0 0.0
      %2411 = vmatpush1.msra.mxu0 0.0
      %2412 = vmatprep.subr.mxu0 0.0
      %2413 = vmatpush1.msra.mxu0 0.0
      %2414 = vmatprep.subr.mxu0 0.0
      %2415 = vmatpush1.msra.mxu0 0.0
      %2416 = vmatprep.subr.mxu0 0.0
      %2417 = vmatpush1.msra.mxu0 0.0
      %2418 = vmatprep.subr.mxu0 0.0
      %2419 = vmatpush1.msra.mxu0 0.0
      %2420 = vmatprep.subr.mxu0 0.0
      %2421 = vmatpush1.msra.mxu0 0.0
      %2422 = vmatprep.subr.mxu0 0.0
      %2423 = vmatpush1.msra.mxu0 0.0
      %2424 = vmatprep.subr.mxu0 0.0
      %2425 = vmatpush1.msra.mxu0 0.0
      %2426 = vmatprep.subr.mxu0 0.0
      %2427 = vmatpush1.msra.mxu0 0.0
      %2428 = vmatprep.subr.mxu0 0.0
      %2429 = vmatpush1.msra.mxu0 0.0
      %2430 = vmatprep.subr.mxu0 0.0
      %2431 = vmatpush1.msra.mxu0 0.0
      %2432 = vmatprep.subr.mxu0 0.0
      %2433 = vmatpush1.msra.mxu0 0.0
      %2434 = vmatprep.subr.mxu0 0.0
      %2435 = vmatpush1.msra.mxu0 0.0
      %2436 = vmatprep.subr.mxu0 0.0
      %2437 = vmatpush1.msra.mxu0 0.0
      %2438 = vmatprep.subr.mxu0 0.0
      %2439 = vmatpush1.msra.mxu0 0.0
      %2440 = vmatprep.subr.mxu0 0.0
      %2441 = vmatpush1.msra.mxu0 0.0
      %2442 = vmatprep.subr.mxu0 0.0
      %2443 = vmatpush1.msra.mxu0 0.0
      %2444 = vmatprep.subr.mxu0 0.0
      %2445 = vmatpush1.msra.mxu0 0.0
      %2446 = vmatprep.subr.mxu0 0.0
      %2447 = vmatpush1.msra.mxu0 0.0
      %2448 = vmatprep.subr.mxu0 0.0
      %2449 = vmatpush1.msra.mxu0 0.0
      %2450 = vmatprep.subr.mxu0 0.0
      %2451 = vmatpush1.msra.mxu0 0.0
      %2452 = vmatprep.subr.mxu0 0.0
      %2453 = vmatpush1.msra.mxu0 0.0
      %2454 = vmatprep.subr.mxu0 0.0
      %2455 = vmatpush1.msra.mxu0 0.0
      %2456 = vmatprep.subr.mxu0 0.0
      %2457 = vmatpush1.msra.mxu0 0.0
      %2458 = vmatprep.subr.mxu0 0.0
      %2459 = vmatpush1.msra.mxu0 0.0
      %2460 = vmatprep.subr.mxu0 0.0
      %2461 = vmatpush1.msra.mxu0 0.0
      %2462 = vmatprep.subr.mxu0 0.0
      %2463 = vmatpush1.msra.mxu0 0.0
      %2464 = vmatprep.subr.mxu0 0.0
      %2465 = vmatpush1.msra.mxu0 0.0
      %2466 = vmatprep.mubr.f32.mxu0 0.0
      %2467 = vmatmul.mubr.f32.gmra.mrb[0].mxu0 %v2400
      %v2468 = vpop.f32.mrb[0].mxu0
      %v2469 = vadd.f32 %v2395, %v2468
      %v2470 = vpop.f32.mrb[0].mxu0
      %2471 = vdwg.mxu0
      %v2474 = vunpack.c.l.s4 1983009808
      %v2475 = vunpack.c.0.s8 %v2474
      %v2476 = vlaneseq
      %v2477 = vshrl.u32 %v2476, 7
      %v2478 = vsub.s32 %v2475, %v2477
      %v2479 = vrot.slane %v2469, %v2478
      %2480 = vrot.lane.b32.xlu0 %v2479, 96
      %v2481 = vpop.permute.xlu0 %2480
      %2483 = vst.msk [vmem:[%s231 + $0x4] sm:$0x3] %vm1224, %v2481
      %2484 = vrot.lane.b32.xlu0 %v404, 32
      %v2485 = vpop.permute.xlu0 %2484
      %v2486 = vsel %vm596, %v2485, 0
      %2488 = vmatprep.subr.mxu0 0.0
      %2489 = vmatpush1.msra.mxu0 %v594
      %2490 = vmatprep.subr.mxu0 0.0
      %2491 = vmatpush1.msra.mxu0 %v595
      %2492 = vmatprep.subr.mxu0 0.0
      %2493 = vmatpush1.msra.mxu0 0.0
      %2494 = vmatprep.subr.mxu0 0.0
      %2495 = vmatpush1.msra.mxu0 0.0
      %2496 = vmatprep.subr.mxu0 0.0
      %2497 = vmatpush1.msra.mxu0 0.0
      %2498 = vmatprep.subr.mxu0 0.0
      %2499 = vmatpush1.msra.mxu0 0.0
      %2500 = vmatprep.subr.mxu0 0.0
      %2501 = vmatpush1.msra.mxu0 0.0
      %2502 = vmatprep.subr.mxu0 0.0
      %2503 = vmatpush1.msra.mxu0 0.0
      %2504 = vmatprep.subr.mxu0 0.0
      %2505 = vmatpush1.msra.mxu0 0.0
      %2506 = vmatprep.subr.mxu0 0.0
      %2507 = vmatpush1.msra.mxu0 0.0
      %2508 = vmatprep.subr.mxu0 0.0
      %2509 = vmatpush1.msra.mxu0 0.0
      %2510 = vmatprep.subr.mxu0 0.0
      %2511 = vmatpush1.msra.mxu0 0.0
      %2512 = vmatprep.subr.mxu0 0.0
      %2513 = vmatpush1.msra.mxu0 0.0
      %2514 = vmatprep.subr.mxu0 0.0
      %2515 = vmatpush1.msra.mxu0 0.0
      %2516 = vmatprep.subr.mxu0 0.0
      %2517 = vmatpush1.msra.mxu0 0.0
      %2518 = vmatprep.subr.mxu0 0.0
      %2519 = vmatpush1.msra.mxu0 0.0
      %2520 = vmatprep.subr.mxu0 0.0
      %2521 = vmatpush1.msra.mxu0 0.0
      %2522 = vmatprep.subr.mxu0 0.0
      %2523 = vmatpush1.msra.mxu0 0.0
      %2524 = vmatprep.subr.mxu0 0.0
      %2525 = vmatpush1.msra.mxu0 0.0
      %2526 = vmatprep.subr.mxu0 0.0
      %2527 = vmatpush1.msra.mxu0 0.0
      %2528 = vmatprep.subr.mxu0 0.0
      %2529 = vmatpush1.msra.mxu0 0.0
      %2530 = vmatprep.subr.mxu0 0.0
      %2531 = vmatpush1.msra.mxu0 0.0
      %2532 = vmatprep.subr.mxu0 0.0
      %2533 = vmatpush1.msra.mxu0 0.0
      %2534 = vmatprep.subr.mxu0 0.0
      %2535 = vmatpush1.msra.mxu0 0.0
      %2536 = vmatprep.subr.mxu0 0.0
      %2537 = vmatpush1.msra.mxu0 0.0
      %2538 = vmatprep.subr.mxu0 0.0
      %2539 = vmatpush1.msra.mxu0 0.0
      %2540 = vmatprep.subr.mxu0 0.0
      %2541 = vmatpush1.msra.mxu0 0.0
      %2542 = vmatprep.subr.mxu0 0.0
      %2543 = vmatpush1.msra.mxu0 0.0
      %2544 = vmatprep.subr.mxu0 0.0
      %2545 = vmatpush1.msra.mxu0 0.0
      %2546 = vmatprep.subr.mxu0 0.0
      %2547 = vmatpush1.msra.mxu0 0.0
      %2548 = vmatprep.subr.mxu0 0.0
      %2549 = vmatpush1.msra.mxu0 0.0
      %2550 = vmatprep.subr.mxu0 0.0
      %2551 = vmatpush1.msra.mxu0 0.0
      %2552 = vmatprep.mubr.f32.mxu0 0.0
      %2553 = vmatmul.mubr.f32.gmra.mrb[0].mxu0 %v2486
      %v2554 = vpop.f32.mrb[0].mxu0
      %v2555 = vadd.f32 0.0, %v2554
      %v2556 = vpop.f32.mrb[0].mxu0
      %2557 = vdwg.mxu0
      %2558 = vrot.lane.b32.xlu0 %v319, 32
      %v2559 = vpop.permute.xlu0 %2558
      %v2560 = vsel %vm596, %v2559, 0
      %2562 = vmatprep.subr.mxu0 0.0
      %2563 = vmatpush1.msra.mxu0 %v586
      %2564 = vmatprep.subr.mxu0 0.0
      %2565 = vmatpush1.msra.mxu0 %v587
      %2566 = vmatprep.subr.mxu0 0.0
      %2567 = vmatpush1.msra.mxu0 0.0
      %2568 = vmatprep.subr.mxu0 0.0
      %2569 = vmatpush1.msra.mxu0 0.0
      %2570 = vmatprep.subr.mxu0 0.0
      %2571 = vmatpush1.msra.mxu0 0.0
      %2572 = vmatprep.subr.mxu0 0.0
      %2573 = vmatpush1.msra.mxu0 0.0
      %2574 = vmatprep.subr.mxu0 0.0
      %2575 = vmatpush1.msra.mxu0 0.0
      %2576 = vmatprep.subr.mxu0 0.0
      %2577 = vmatpush1.msra.mxu0 0.0
      %2578 = vmatprep.subr.mxu0 0.0
      %2579 = vmatpush1.msra.mxu0 0.0
      %2580 = vmatprep.subr.mxu0 0.0
      %2581 = vmatpush1.msra.mxu0 0.0
      %2582 = vmatprep.subr.mxu0 0.0
      %2583 = vmatpush1.msra.mxu0 0.0
      %2584 = vmatprep.subr.mxu0 0.0
      %2585 = vmatpush1.msra.mxu0 0.0
      %2586 = vmatprep.subr.mxu0 0.0
      %2587 = vmatpush1.msra.mxu0 0.0
      %2588 = vmatprep.subr.mxu0 0.0
      %2589 = vmatpush1.msra.mxu0 0.0
      %2590 = vmatprep.subr.mxu0 0.0
      %2591 = vmatpush1.msra.mxu0 0.0
      %2592 = vmatprep.subr.mxu0 0.0
      %2593 = vmatpush1.msra.mxu0 0.0
      %2594 = vmatprep.subr.mxu0 0.0
      %2595 = vmatpush1.msra.mxu0 0.0
      %2596 = vmatprep.subr.mxu0 0.0
      %2597 = vmatpush1.msra.mxu0 0.0
      %2598 = vmatprep.subr.mxu0 0.0
      %2599 = vmatpush1.msra.mxu0 0.0
      %2600 = vmatprep.subr.mxu0 0.0
      %2601 = vmatpush1.msra.mxu0 0.0
      %2602 = vmatprep.subr.mxu0 0.0
      %2603 = vmatpush1.msra.mxu0 0.0
      %2604 = vmatprep.subr.mxu0 0.0
      %2605 = vmatpush1.msra.mxu0 0.0
      %2606 = vmatprep.subr.mxu0 0.0
      %2607 = vmatpush1.msra.mxu0 0.0
      %2608 = vmatprep.subr.mxu0 0.0
      %2609 = vmatpush1.msra.mxu0 0.0
      %2610 = vmatprep.subr.mxu0 0.0
      %2611 = vmatpush1.msra.mxu0 0.0
      %2612 = vmatprep.subr.mxu0 0.0
      %2613 = vmatpush1.msra.mxu0 0.0
      %2614 = vmatprep.subr.mxu0 0.0
      %2615 = vmatpush1.msra.mxu0 0.0
      %2616 = vmatprep.subr.mxu0 0.0
      %2617 = vmatpush1.msra.mxu0 0.0
      %2618 = vmatprep.subr.mxu0 0.0
      %2619 = vmatpush1.msra.mxu0 0.0
      %2620 = vmatprep.subr.mxu0 0.0
      %2621 = vmatpush1.msra.mxu0 0.0
      %2622 = vmatprep.subr.mxu0 0.0
      %2623 = vmatpush1.msra.mxu0 0.0
      %2624 = vmatprep.subr.mxu0 0.0
      %2625 = vmatpush1.msra.mxu0 0.0
      %2626 = vmatprep.mubr.f32.mxu0 0.0
      %2627 = vmatmul.mubr.f32.gmra.mrb[0].mxu0 %v2560
      %v2628 = vpop.f32.mrb[0].mxu0
      %v2629 = vadd.f32 %v2555, %v2628
      %v2630 = vpop.f32.mrb[0].mxu0
      %2631 = vdwg.mxu0
      %2632 = vst.msk [vmem:[%s231 + $0x6] sm:$0x3] %vm743, %v2629
      %2633 = vrot.lane.b32.xlu0 %v574, 32
      %v2634 = vpop.permute.xlu0 %2633
      %v2635 = vsel %vm596, %v2634, 0
      %2637 = vmatprep.subr.mxu0 0.0
      %2638 = vmatpush1.msra.mxu0 %v594
      %2639 = vmatprep.subr.mxu0 0.0
      %2640 = vmatpush1.msra.mxu0 %v595
      %2641 = vmatprep.subr.mxu0 0.0
      %2642 = vmatpush1.msra.mxu0 0.0
      %2643 = vmatprep.subr.mxu0 0.0
      %2644 = vmatpush1.msra.mxu0 0.0
      %2645 = vmatprep.subr.mxu0 0.0
      %2646 = vmatpush1.msra.mxu0 0.0
      %2647 = vmatprep.subr.mxu0 0.0
      %2648 = vmatpush1.msra.mxu0 0.0
      %2649 = vmatprep.subr.mxu0 0.0
      %2650 = vmatpush1.msra.mxu0 0.0
      %2651 = vmatprep.subr.mxu0 0.0
      %2652 = vmatpush1.msra.mxu0 0.0
      %2653 = vmatprep.subr.mxu0 0.0
      %2654 = vmatpush1.msra.mxu0 0.0
      %2655 = vmatprep.subr.mxu0 0.0
      %2656 = vmatpush1.msra.mxu0 0.0
      %2657 = vmatprep.subr.mxu0 0.0
      %2658 = vmatpush1.msra.mxu0 0.0
      %2659 = vmatprep.subr.mxu0 0.0
      %2660 = vmatpush1.msra.mxu0 0.0
      %2661 = vmatprep.subr.mxu0 0.0
      %2662 = vmatpush1.msra.mxu0 0.0
      %2663 = vmatprep.subr.mxu0 0.0
      %2664 = vmatpush1.msra.mxu0 0.0
      %2665 = vmatprep.subr.mxu0 0.0
      %2666 = vmatpush1.msra.mxu0 0.0
      %2667 = vmatprep.subr.mxu0 0.0
      %2668 = vmatpush1.msra.mxu0 0.0
      %2669 = vmatprep.subr.mxu0 0.0
      %2670 = vmatpush1.msra.mxu0 0.0
      %2671 = vmatprep.subr.mxu0 0.0
      %2672 = vmatpush1.msra.mxu0 0.0
      %2673 = vmatprep.subr.mxu0 0.0
      %2674 = vmatpush1.msra.mxu0 0.0
      %2675 = vmatprep.subr.mxu0 0.0
      %2676 = vmatpush1.msra.mxu0 0.0
      %2677 = vmatprep.subr.mxu0 0.0
      %2678 = vmatpush1.msra.mxu0 0.0
      %2679 = vmatprep.subr.mxu0 0.0
      %2680 = vmatpush1.msra.mxu0 0.0
      %2681 = vmatprep.subr.mxu0 0.0
      %2682 = vmatpush1.msra.mxu0 0.0
      %2683 = vmatprep.subr.mxu0 0.0
      %2684 = vmatpush1.msra.mxu0 0.0
      %2685 = vmatprep.subr.mxu0 0.0
      %2686 = vmatpush1.msra.mxu0 0.0
      %2687 = vmatprep.subr.mxu0 0.0
      %2688 = vmatpush1.msra.mxu0 0.0
      %2689 = vmatprep.subr.mxu0 0.0
      %2690 = vmatpush1.msra.mxu0 0.0
      %2691 = vmatprep.subr.mxu0 0.0
      %2692 = vmatpush1.msra.mxu0 0.0
      %2693 = vmatprep.subr.mxu0 0.0
      %2694 = vmatpush1.msra.mxu0 0.0
      %2695 = vmatprep.subr.mxu0 0.0
      %2696 = vmatpush1.msra.mxu0 0.0
      %2697 = vmatprep.subr.mxu0 0.0
      %2698 = vmatpush1.msra.mxu0 0.0
      %2699 = vmatprep.subr.mxu0 0.0
      %2700 = vmatpush1.msra.mxu0 0.0
      %2701 = vmatprep.mubr.f32.mxu0 0.0
      %2702 = vmatmul.mubr.f32.gmra.mrb[0].mxu0 %v2635
      %v2703 = vpop.f32.mrb[0].mxu0
      %v2704 = vadd.f32 0.0, %v2703
      %v2705 = vpop.f32.mrb[0].mxu0
      %2706 = vdwg.mxu0
      %2707 = vrot.lane.b32.xlu0 %v489, 32
      %v2708 = vpop.permute.xlu0 %2707
      %v2709 = vsel %vm596, %v2708, 0
      %2711 = vmatprep.subr.mxu0 0.0
      %2712 = vmatpush1.msra.mxu0 %v586
      %2713 = vmatprep.subr.mxu0 0.0
      %2714 = vmatpush1.msra.mxu0 %v587
      %2715 = vmatprep.subr.mxu0 0.0
      %2716 = vmatpush1.msra.mxu0 0.0
      %2717 = vmatprep.subr.mxu0 0.0
      %2718 = vmatpush1.msra.mxu0 0.0
      %2719 = vmatprep.subr.mxu0 0.0
      %2720 = vmatpush1.msra.mxu0 0.0
      %2721 = vmatprep.subr.mxu0 0.0
      %2722 = vmatpush1.msra.mxu0 0.0
      %2723 = vmatprep.subr.mxu0 0.0
      %2724 = vmatpush1.msra.mxu0 0.0
      %2725 = vmatprep.subr.mxu0 0.0
      %2726 = vmatpush1.msra.mxu0 0.0
      %2727 = vmatprep.subr.mxu0 0.0
      %2728 = vmatpush1.msra.mxu0 0.0
      %2729 = vmatprep.subr.mxu0 0.0
      %2730 = vmatpush1.msra.mxu0 0.0
      %2731 = vmatprep.subr.mxu0 0.0
      %2732 = vmatpush1.msra.mxu0 0.0
      %2733 = vmatprep.subr.mxu0 0.0
      %2734 = vmatpush1.msra.mxu0 0.0
      %2735 = vmatprep.subr.mxu0 0.0
      %2736 = vmatpush1.msra.mxu0 0.0
      %2737 = vmatprep.subr.mxu0 0.0
      %2738 = vmatpush1.msra.mxu0 0.0
      %2739 = vmatprep.subr.mxu0 0.0
      %2740 = vmatpush1.msra.mxu0 0.0
      %2741 = vmatprep.subr.mxu0 0.0
      %2742 = vmatpush1.msra.mxu0 0.0
      %2743 = vmatprep.subr.mxu0 0.0
      %2744 = vmatpush1.msra.mxu0 0.0
      %2745 = vmatprep.subr.mxu0 0.0
      %2746 = vmatpush1.msra.mxu0 0.0
      %2747 = vmatprep.subr.mxu0 0.0
      %2748 = vmatpush1.msra.mxu0 0.0
      %2749 = vmatprep.subr.mxu0 0.0
      %2750 = vmatpush1.msra.mxu0 0.0
      %2751 = vmatprep.subr.mxu0 0.0
      %2752 = vmatpush1.msra.mxu0 0.0
      %2753 = vmatprep.subr.mxu0 0.0
      %2754 = vmatpush1.msra.mxu0 0.0
      %2755 = vmatprep.subr.mxu0 0.0
      %2756 = vmatpush1.msra.mxu0 0.0
      %2757 = vmatprep.subr.mxu0 0.0
      %2758 = vmatpush1.msra.mxu0 0.0
      %2759 = vmatprep.subr.mxu0 0.0
      %2760 = vmatpush1.msra.mxu0 0.0
      %2761 = vmatprep.subr.mxu0 0.0
      %2762 = vmatpush1.msra.mxu0 0.0
      %2763 = vmatprep.subr.mxu0 0.0
      %2764 = vmatpush1.msra.mxu0 0.0
      %2765 = vmatprep.subr.mxu0 0.0
      %2766 = vmatpush1.msra.mxu0 0.0
      %2767 = vmatprep.subr.mxu0 0.0
      %2768 = vmatpush1.msra.mxu0 0.0
      %2769 = vmatprep.subr.mxu0 0.0
      %2770 = vmatpush1.msra.mxu0 0.0
      %2771 = vmatprep.subr.mxu0 0.0
      %2772 = vmatpush1.msra.mxu0 0.0
      %2773 = vmatprep.subr.mxu0 0.0
      %2774 = vmatpush1.msra.mxu0 0.0
      %2775 = vmatprep.mubr.f32.mxu0 0.0
      %2776 = vmatmul.mubr.f32.gmra.mrb[0].mxu0 %v2709
      %v2777 = vpop.f32.mrb[0].mxu0
      %v2778 = vadd.f32 %v2704, %v2777
      %v2779 = vpop.f32.mrb[0].mxu0
      %2780 = vdwg.mxu0
      %v2783 = vunpack.c.l.s4 1983009808
      %v2784 = vunpack.c.0.s8 %v2783
      %v2785 = vlaneseq
      %v2786 = vshrl.u32 %v2785, 7
      %v2787 = vsub.s32 %v2784, %v2786
      %v2788 = vrot.slane %v2778, %v2787
      %2789 = vrot.lane.b32.xlu0 %v2788, 32
      %v2790 = vpop.permute.xlu0 %2789
      %2792 = vst.msk [vmem:[%s231 + $0x6] sm:$0x3] %vm902, %v2790
      %2793 = vrot.lane.b32.xlu0 %v404, 16
      %v2794 = vpop.permute.xlu0 %2793
      %v2795 = vsel %vm596, %v2794, 0
      %2797 = vmatprep.subr.mxu0 0.0
      %2798 = vmatpush1.msra.mxu0 %v594
      %2799 = vmatprep.subr.mxu0 0.0
      %2800 = vmatpush1.msra.mxu0 %v595
      %2801 = vmatprep.subr.mxu0 0.0
      %2802 = vmatpush1.msra.mxu0 0.0
      %2803 = vmatprep.subr.mxu0 0.0
      %2804 = vmatpush1.msra.mxu0 0.0
      %2805 = vmatprep.subr.mxu0 0.0
      %2806 = vmatpush1.msra.mxu0 0.0
      %2807 = vmatprep.subr.mxu0 0.0
      %2808 = vmatpush1.msra.mxu0 0.0
      %2809 = vmatprep.subr.mxu0 0.0
      %2810 = vmatpush1.msra.mxu0 0.0
      %2811 = vmatprep.subr.mxu0 0.0
      %2812 = vmatpush1.msra.mxu0 0.0
      %2813 = vmatprep.subr.mxu0 0.0
      %2814 = vmatpush1.msra.mxu0 0.0
      %2815 = vmatprep.subr.mxu0 0.0
      %2816 = vmatpush1.msra.mxu0 0.0
      %2817 = vmatprep.subr.mxu0 0.0
      %2818 = vmatpush1.msra.mxu0 0.0
      %2819 = vmatprep.subr.mxu0 0.0
      %2820 = vmatpush1.msra.mxu0 0.0
      %2821 = vmatprep.subr.mxu0 0.0
      %2822 = vmatpush1.msra.mxu0 0.0
      %2823 = vmatprep.subr.mxu0 0.0
      %2824 = vmatpush1.msra.mxu0 0.0
      %2825 = vmatprep.subr.mxu0 0.0
      %2826 = vmatpush1.msra.mxu0 0.0
      %2827 = vmatprep.subr.mxu0 0.0
      %2828 = vmatpush1.msra.mxu0 0.0
      %2829 = vmatprep.subr.mxu0 0.0
      %2830 = vmatpush1.msra.mxu0 0.0
      %2831 = vmatprep.subr.mxu0 0.0
      %2832 = vmatpush1.msra.mxu0 0.0
      %2833 = vmatprep.subr.mxu0 0.0
      %2834 = vmatpush1.msra.mxu0 0.0
      %2835 = vmatprep.subr.mxu0 0.0
      %2836 = vmatpush1.msra.mxu0 0.0
      %2837 = vmatprep.subr.mxu0 0.0
      %2838 = vmatpush1.msra.mxu0 0.0
      %2839 = vmatprep.subr.mxu0 0.0
      %2840 = vmatpush1.msra.mxu0 0.0
      %2841 = vmatprep.subr.mxu0 0.0
      %2842 = vmatpush1.msra.mxu0 0.0
      %2843 = vmatprep.subr.mxu0 0.0
      %2844 = vmatpush1.msra.mxu0 0.0
      %2845 = vmatprep.subr.mxu0 0.0
      %2846 = vmatpush1.msra.mxu0 0.0
      %2847 = vmatprep.subr.mxu0 0.0
      %2848 = vmatpush1.msra.mxu0 0.0
      %2849 = vmatprep.subr.mxu0 0.0
      %2850 = vmatpush1.msra.mxu0 0.0
      %2851 = vmatprep.subr.mxu0 0.0
      %2852 = vmatpush1.msra.mxu0 0.0
      %2853 = vmatprep.subr.mxu0 0.0
      %2854 = vmatpush1.msra.mxu0 0.0
      %2855 = vmatprep.subr.mxu0 0.0
      %2856 = vmatpush1.msra.mxu0 0.0
      %2857 = vmatprep.subr.mxu0 0.0
      %2858 = vmatpush1.msra.mxu0 0.0
      %2859 = vmatprep.subr.mxu0 0.0
      %2860 = vmatpush1.msra.mxu0 0.0
      %2861 = vmatprep.mubr.f32.mxu0 0.0
      %2862 = vmatmul.mubr.f32.gmra.mrb[0].mxu0 %v2795
      %v2863 = vpop.f32.mrb[0].mxu0
      %v2864 = vadd.f32 0.0, %v2863
      %v2865 = vpop.f32.mrb[0].mxu0
      %2866 = vdwg.mxu0
      %2867 = vrot.lane.b32.xlu0 %v319, 16
      %v2868 = vpop.permute.xlu0 %2867
      %v2869 = vsel %vm596, %v2868, 0
      %2871 = vmatprep.subr.mxu0 0.0
      %2872 = vmatpush1.msra.mxu0 %v586
      %2873 = vmatprep.subr.mxu0 0.0
      %2874 = vmatpush1.msra.mxu0 %v587
      %2875 = vmatprep.subr.mxu0 0.0
      %2876 = vmatpush1.msra.mxu0 0.0
      %2877 = vmatprep.subr.mxu0 0.0
      %2878 = vmatpush1.msra.mxu0 0.0
      %2879 = vmatprep.subr.mxu0 0.0
      %2880 = vmatpush1.msra.mxu0 0.0
      %2881 = vmatprep.subr.mxu0 0.0
      %2882 = vmatpush1.msra.mxu0 0.0
      %2883 = vmatprep.subr.mxu0 0.0
      %2884 = vmatpush1.msra.mxu0 0.0
      %2885 = vmatprep.subr.mxu0 0.0
      %2886 = vmatpush1.msra.mxu0 0.0
      %2887 = vmatprep.subr.mxu0 0.0
      %2888 = vmatpush1.msra.mxu0 0.0
      %2889 = vmatprep.subr.mxu0 0.0
      %2890 = vmatpush1.msra.mxu0 0.0
      %2891 = vmatprep.subr.mxu0 0.0
      %2892 = vmatpush1.msra.mxu0 0.0
      %2893 = vmatprep.subr.mxu0 0.0
      %2894 = vmatpush1.msra.mxu0 0.0
      %2895 = vmatprep.subr.mxu0 0.0
      %2896 = vmatpush1.msra.mxu0 0.0
      %2897 = vmatprep.subr.mxu0 0.0
      %2898 = vmatpush1.msra.mxu0 0.0
      %2899 = vmatprep.subr.mxu0 0.0
      %2900 = vmatpush1.msra.mxu0 0.0
      %2901 = vmatprep.subr.mxu0 0.0
      %2902 = vmatpush1.msra.mxu0 0.0
      %2903 = vmatprep.subr.mxu0 0.0
      %2904 = vmatpush1.msra.mxu0 0.0
      %2905 = vmatprep.subr.mxu0 0.0
      %2906 = vmatpush1.msra.mxu0 0.0
      %2907 = vmatprep.subr.mxu0 0.0
      %2908 = vmatpush1.msra.mxu0 0.0
      %2909 = vmatprep.subr.mxu0 0.0
      %2910 = vmatpush1.msra.mxu0 0.0
      %2911 = vmatprep.subr.mxu0 0.0
      %2912 = vmatpush1.msra.mxu0 0.0
      %2913 = vmatprep.subr.mxu0 0.0
      %2914 = vmatpush1.msra.mxu0 0.0
      %2915 = vmatprep.subr.mxu0 0.0
      %2916 = vmatpush1.msra.mxu0 0.0
      %2917 = vmatprep.subr.mxu0 0.0
      %2918 = vmatpush1.msra.mxu0 0.0
      %2919 = vmatprep.subr.mxu0 0.0
      %2920 = vmatpush1.msra.mxu0 0.0
      %2921 = vmatprep.subr.mxu0 0.0
      %2922 = vmatpush1.msra.mxu0 0.0
      %2923 = vmatprep.subr.mxu0 0.0
      %2924 = vmatpush1.msra.mxu0 0.0
      %2925 = vmatprep.subr.mxu0 0.0
      %2926 = vmatpush1.msra.mxu0 0.0
      %2927 = vmatprep.subr.mxu0 0.0
      %2928 = vmatpush1.msra.mxu0 0.0
      %2929 = vmatprep.subr.mxu0 0.0
      %2930 = vmatpush1.msra.mxu0 0.0
      %2931 = vmatprep.subr.mxu0 0.0
      %2932 = vmatpush1.msra.mxu0 0.0
      %2933 = vmatprep.subr.mxu0 0.0
      %2934 = vmatpush1.msra.mxu0 0.0
      %2935 = vmatprep.mubr.f32.mxu0 0.0
      %2936 = vmatmul.mubr.f32.gmra.mrb[0].mxu0 %v2869
      %v2937 = vpop.f32.mrb[0].mxu0
      %v2938 = vadd.f32 %v2864, %v2937
      %v2939 = vpop.f32.mrb[0].mxu0
      %2940 = vdwg.mxu0
      %v2943 = vunpack.c.l.s4 1983009808
      %v2944 = vunpack.c.0.s8 %v2943
      %v2945 = vlaneseq
      %v2946 = vshrl.u32 %v2945, 7
      %v2947 = vsub.s32 %v2944, %v2946
      %v2948 = vrot.slane %v2938, %v2947
      %2949 = vrot.lane.b32.xlu0 %v2948, 64
      %v2950 = vpop.permute.xlu0 %2949
      %2952 = vst.msk [vmem:[%s231 + $0x6] sm:$0x3] %vm1063, %v2950
      %2953 = vrot.lane.b32.xlu0 %v574, 16
      %v2954 = vpop.permute.xlu0 %2953
      %v2955 = vsel %vm596, %v2954, 0
      %2957 = vmatprep.subr.mxu0 0.0
      %2958 = vmatpush1.msra.mxu0 %v594
      %2959 = vmatprep.subr.mxu0 0.0
      %2960 = vmatpush1.msra.mxu0 %v595
      %2961 = vmatprep.subr.mxu0 0.0
      %2962 = vmatpush1.msra.mxu0 0.0
      %2963 = vmatprep.subr.mxu0 0.0
      %2964 = vmatpush1.msra.mxu0 0.0
      %2965 = vmatprep.subr.mxu0 0.0
      %2966 = vmatpush1.msra.mxu0 0.0
      %2967 = vmatprep.subr.mxu0 0.0
      %2968 = vmatpush1.msra.mxu0 0.0
      %2969 = vmatprep.subr.mxu0 0.0
      %2970 = vmatpush1.msra.mxu0 0.0
      %2971 = vmatprep.subr.mxu0 0.0
      %2972 = vmatpush1.msra.mxu0 0.0
      %2973 = vmatprep.subr.mxu0 0.0
      %2974 = vmatpush1.msra.mxu0 0.0
      %2975 = vmatprep.subr.mxu0 0.0
      %2976 = vmatpush1.msra.mxu0 0.0
      %2977 = vmatprep.subr.mxu0 0.0
      %2978 = vmatpush1.msra.mxu0 0.0
      %2979 = vmatprep.subr.mxu0 0.0
      %2980 = vmatpush1.msra.mxu0 0.0
      %2981 = vmatprep.subr.mxu0 0.0
      %2982 = vmatpush1.msra.mxu0 0.0
      %2983 = vmatprep.subr.mxu0 0.0
      %2984 = vmatpush1.msra.mxu0 0.0
      %2985 = vmatprep.subr.mxu0 0.0
      %2986 = vmatpush1.msra.mxu0 0.0
      %2987 = vmatprep.subr.mxu0 0.0
      %2988 = vmatpush1.msra.mxu0 0.0
      %2989 = vmatprep.subr.mxu0 0.0
      %2990 = vmatpush1.msra.mxu0 0.0
      %2991 = vmatprep.subr.mxu0 0.0
      %2992 = vmatpush1.msra.mxu0 0.0
      %2993 = vmatprep.subr.mxu0 0.0
      %2994 = vmatpush1.msra.mxu0 0.0
      %2995 = vmatprep.subr.mxu0 0.0
      %2996 = vmatpush1.msra.mxu0 0.0
      %2997 = vmatprep.subr.mxu0 0.0
      %2998 = vmatpush1.msra.mxu0 0.0
      %2999 = vmatprep.subr.mxu0 0.0
      %3000 = vmatpush1.msra.mxu0 0.0
      %3001 = vmatprep.subr.mxu0 0.0
      %3002 = vmatpush1.msra.mxu0 0.0
      %3003 = vmatprep.subr.mxu0 0.0
      %3004 = vmatpush1.msra.mxu0 0.0
      %3005 = vmatprep.subr.mxu0 0.0
      %3006 = vmatpush1.msra.mxu0 0.0
      %3007 = vmatprep.subr.mxu0 0.0
      %3008 = vmatpush1.msra.mxu0 0.0
      %3009 = vmatprep.subr.mxu0 0.0
      %3010 = vmatpush1.msra.mxu0 0.0
      %3011 = vmatprep.subr.mxu0 0.0
      %3012 = vmatpush1.msra.mxu0 0.0
      %3013 = vmatprep.subr.mxu0 0.0
      %3014 = vmatpush1.msra.mxu0 0.0
      %3015 = vmatprep.subr.mxu0 0.0
      %3016 = vmatpush1.msra.mxu0 0.0
      %3017 = vmatprep.subr.mxu0 0.0
      %3018 = vmatpush1.msra.mxu0 0.0
      %3019 = vmatprep.subr.mxu0 0.0
      %3020 = vmatpush1.msra.mxu0 0.0
      %3021 = vmatprep.mubr.f32.mxu0 0.0
      %3022 = vmatmul.mubr.f32.gmra.mrb[0].mxu0 %v2955
      %v3023 = vpop.f32.mrb[0].mxu0
      %v3024 = vadd.f32 0.0, %v3023
      %v3025 = vpop.f32.mrb[0].mxu0
      %3026 = vdwg.mxu0
      %3027 = vrot.lane.b32.xlu0 %v489, 16
      %v3028 = vpop.permute.xlu0 %3027
      %v3029 = vsel %vm596, %v3028, 0
      %3031 = vmatprep.subr.mxu0 0.0
      %3032 = vmatpush1.msra.mxu0 %v586
      %3033 = vmatprep.subr.mxu0 0.0
      %3034 = vmatpush1.msra.mxu0 %v587
      %3035 = vmatprep.subr.mxu0 0.0
      %3036 = vmatpush1.msra.mxu0 0.0
      %3037 = vmatprep.subr.mxu0 0.0
      %3038 = vmatpush1.msra.mxu0 0.0
      %3039 = vmatprep.subr.mxu0 0.0
      %3040 = vmatpush1.msra.mxu0 0.0
      %3041 = vmatprep.subr.mxu0 0.0
      %3042 = vmatpush1.msra.mxu0 0.0
      %3043 = vmatprep.subr.mxu0 0.0
      %3044 = vmatpush1.msra.mxu0 0.0
      %3045 = vmatprep.subr.mxu0 0.0
      %3046 = vmatpush1.msra.mxu0 0.0
      %3047 = vmatprep.subr.mxu0 0.0
      %3048 = vmatpush1.msra.mxu0 0.0
      %3049 = vmatprep.subr.mxu0 0.0
      %3050 = vmatpush1.msra.mxu0 0.0
      %3051 = vmatprep.subr.mxu0 0.0
      %3052 = vmatpush1.msra.mxu0 0.0
      %3053 = vmatprep.subr.mxu0 0.0
      %3054 = vmatpush1.msra.mxu0 0.0
      %3055 = vmatprep.subr.mxu0 0.0
      %3056 = vmatpush1.msra.mxu0 0.0
      %3057 = vmatprep.subr.mxu0 0.0
      %3058 = vmatpush1.msra.mxu0 0.0
      %3059 = vmatprep.subr.mxu0 0.0
      %3060 = vmatpush1.msra.mxu0 0.0
      %3061 = vmatprep.subr.mxu0 0.0
      %3062 = vmatpush1.msra.mxu0 0.0
      %3063 = vmatprep.subr.mxu0 0.0
      %3064 = vmatpush1.msra.mxu0 0.0
      %3065 = vmatprep.subr.mxu0 0.0
      %3066 = vmatpush1.msra.mxu0 0.0
      %3067 = vmatprep.subr.mxu0 0.0
      %3068 = vmatpush1.msra.mxu0 0.0
      %3069 = vmatprep.subr.mxu0 0.0
      %3070 = vmatpush1.msra.mxu0 0.0
      %3071 = vmatprep.subr.mxu0 0.0
      %3072 = vmatpush1.msra.mxu0 0.0
      %3073 = vmatprep.subr.mxu0 0.0
      %3074 = vmatpush1.msra.mxu0 0.0
      %3075 = vmatprep.subr.mxu0 0.0
      %3076 = vmatpush1.msra.mxu0 0.0
      %3077 = vmatprep.subr.mxu0 0.0
      %3078 = vmatpush1.msra.mxu0 0.0
      %3079 = vmatprep.subr.mxu0 0.0
      %3080 = vmatpush1.msra.mxu0 0.0
      %3081 = vmatprep.subr.mxu0 0.0
      %3082 = vmatpush1.msra.mxu0 0.0
      %3083 = vmatprep.subr.mxu0 0.0
      %3084 = vmatpush1.msra.mxu0 0.0
      %3085 = vmatprep.subr.mxu0 0.0
      %3086 = vmatpush1.msra.mxu0 0.0
      %3087 = vmatprep.subr.mxu0 0.0
      %3088 = vmatpush1.msra.mxu0 0.0
      %3089 = vmatprep.subr.mxu0 0.0
      %3090 = vmatpush1.msra.mxu0 0.0
      %3091 = vmatprep.subr.mxu0 0.0
      %3092 = vmatpush1.msra.mxu0 0.0
      %3093 = vmatprep.subr.mxu0 0.0
      %3094 = vmatpush1.msra.mxu0 0.0
      %3095 = vmatprep.mubr.f32.mxu0 0.0
      %3096 = vmatmul.mubr.f32.gmra.mrb[0].mxu0 %v3029
      %v3097 = vpop.f32.mrb[0].mxu0
      %v3098 = vadd.f32 %v3024, %v3097
      %v3099 = vpop.f32.mrb[0].mxu0
      %3100 = vdwg.mxu0
      %v3103 = vunpack.c.l.s4 1983009808
      %v3104 = vunpack.c.0.s8 %v3103
      %v3105 = vlaneseq
      %v3106 = vshrl.u32 %v3105, 7
      %v3107 = vsub.s32 %v3104, %v3106
      %v3108 = vrot.slane %v3098, %v3107
      %3109 = vrot.lane.b32.xlu0 %v3108, 96
      %v3110 = vpop.permute.xlu0 %3109
      %3112 = vst.msk [vmem:[%s231 + $0x6] sm:$0x3] %vm1224, %v3110
      %s3113 = smul.u32 4, %s21
      %p3114 = scmp.lt.s32.totalorder %s20, 1
      %s3115 = scalar_select %p3114, %s20, 1
      %p3116 = scmp.lt.s32.totalorder %s3113, 7
      %s3117 = scalar_select %p3116, %s3113, 7
      %s3118 = smul.addr %s3115, 8
      %s3119 = sadd.s32 %s3117, %s3118
      %s3120 = smul.addr %s3119, 2
      %s3121 = scalar_lea.vmem %s4, %s3120
      // Predicated region
      $region37: #{up_forward.1} parent=35 // pred_check
        %p3122 = pneg %p139
      $region38: #{up_forward.1} parent=35 // pred_check_branch
        %3124 = sbr.rel (%p3122) target = $region40
      $region39: #{up_forward.1} parent=35 // pred_region
        %s3125 = smul.u32 4, %s21
      $region40: #{up_forward.1} parent=35 // pred_fallthru
        _
    $region36: #{up_forward.1} parent=5 // pred_fallthru
      _
    %p3126 = scmp.le.s32.totalorder 2, %s11
    // Predicated region
    $region41: #{up_forward.1} parent=5 // pred_check
      %p3127 = pneg %p3126
    $region42: #{up_forward.1} parent=5 // pred_check_branch
      %3129 = sbr.rel (%p3127) target = $region44
    $region43: #{up_forward.1} parent=5 // pred_region
      %s3130 = ssub.s32 %s11, 2
      // Predicated region
      $region45: #{up_forward.1} parent=43 // pred_check
        %p3131 = pneg %p145
      $region46: #{up_forward.1} parent=43 // pred_check_branch
        %3133 = sbr.rel (%p3131) target = $region48
      $region47: #{up_forward.1} parent=43 // pred_region
        %s3134 = smul.u32 4, %s23
        %p3135 = scmp.lt.s32.totalorder %s22, 1
        %s3136 = scalar_select %p3135, %s22, 1
        %p3137 = scmp.lt.s32.totalorder %s3134, 7
        %s3138 = scalar_select %p3137, %s3134, 7
        %s3139 = smul.addr %s3136, 8
        %s3140 = sadd.s32 %s3138, %s3139
        %s3141 = smul.addr %s3140, 2
        %s3142 = scalar_lea.vmem %s4, %s3141
      $region48: #{up_forward.1} parent=43 // pred_fallthru
        _
    $region44: #{up_forward.1} parent=5 // pred_fallthru
      _
  $region6: #{up_forward.1} parent=0 // loop_footer
    %s15 = sadd.s32 1, %s11
  $region7: #{up_forward.1} parent=0 // loop_footer_branch
    %10 = sbr.rel target = $region3
  $region8: #{up_forward.1} parent=0 // loop_exit
    _

</llo_original>
